<compile_context>
chip_gen: v5e
topology: v5e:2x2
jax: 0.10.0
libtpu: 0.0.40
codegen_flags: <defaults>
</compile_context>

<pallas_src>
import math

import jax
import jax.numpy as jnp
from jax.experimental import pallas as pl
from jax.experimental.pallas import tpu as pltpu


def prepare_rea_sec_params(params, compute_dtype=jnp.bfloat16):
    """One-time parameter layout for the kernel (do NOT re-run per forward call).

    nn.Linear stores W as (out, in); we pre-transpose to (in, out), fuse f1|f2 into a
    single (D, 2D) weight, fold the 1/28 score scale into the f1 half (weight AND bias),
    and cast weights to bf16 (f32 biases).
    """
    W1, b1, W2, b2, W3, b3 = params
    D = W1.shape[0]
    inv28 = 1.0 / 28.0
    w12t = jnp.concatenate([W1.T * inv28, W2.T], axis=1).astype(compute_dtype)   # (D, 2D)
    b12 = jnp.concatenate([b1 * inv28, b2]).reshape(1, 2 * D).astype(jnp.float32)
    w3t = W3.T.astype(compute_dtype)                                              # (D, D)
    b3r = b3.reshape(1, D).astype(jnp.float32)
    return w12t, b12, w3t, b3r


def rea_sec_forward(x, prepared, *, compute_dtype=jnp.bfloat16, max_rows=512):
    """x: (B, S, D) -> (B, S, D); prepared = prepare_rea_sec_params(params)."""
    B, S, D = x.shape
    w12t, b12, w3t, b3r = prepared

    # Batch tile: one grid step for the whole batch when it fits; otherwise the largest
    # divisor of B keeping Bt*S rows modest (and sublane-aligned).
    if B * S <= max_rows:
        Bt = B
    else:
        Bt = 1
        for cand in range(1, B + 1):
            if B % cand == 0 and cand * S <= max_rows and (cand * S) % 8 == 0:
                Bt = cand
    num_steps = B // Bt
    R = Bt * S  # rows per grid step for the flattened projections

    xc = x.astype(compute_dtype)
    xf = xc.reshape(B * S, D)   # flattened view for the f1/f2/f3 matmuls (free in XLA)

    def kernel(xf_ref, x3_ref, w12_ref, b12_ref, w3_hbm, b3_ref, out_ref,
               w3_buf, w3_sem):
        step = pl.program_id(0)

        # Kick off the f3 weight fetch; it lands in persistent scratch and is reused by
        # every later grid step (sequential grid => step 0 always runs first).
        @pl.when(step == 0)
        def _start_w3():
            pltpu.make_async_copy(w3_hbm, w3_buf, w3_sem).start()

        # Fused f1|f2 projection over all Bt*S rows (1/28 already folded into the f1 half).
        qk = jnp.dot(xf_ref[...], w12_ref[...],
                     preferred_element_type=jnp.float32) + b12_ref[...]     # (R, 2D) f32
        q = qk[:, :D].reshape(Bt, S, D).astype(compute_dtype)
        k = qk[:, D:].reshape(Bt, S, D).astype(compute_dtype)

        # scores = (f1(x)/28) @ f2(x)^T, contracting last dims (no materialized transpose)
        s = jnp.einsum('bqd,bkd->bqk', q, k,
                       preferred_element_type=jnp.float32)                  # (Bt, S, S)

        # Row softmax in f32; divide moved onto the EUP via approximate reciprocal.
        s = s - jnp.max(s, axis=-1, keepdims=True)
        e = jnp.exp(s)
        p = e * pl.reciprocal(jnp.sum(e, axis=-1, keepdims=True), approx=True)
        # TODO(synk): nn.Dropout(0.1) on the attention matrix is the identity in eval
        # mode; training-mode RNG masking is not implemented here.

        # ctx = att @ x  (batched), then f3(ctx) on the flattened view.
        ctx = jnp.einsum('bqk,bkd->bqd', p.astype(compute_dtype), x3_ref[...],
                         preferred_element_type=jnp.float32)                # (Bt, S, D)

        @pl.when(step == 0)
        def _wait_w3():
            pltpu.make_async_copy(w3_hbm, w3_buf, w3_sem).wait()

        g = jnp.dot(ctx.reshape(R, D).astype(compute_dtype), w3_buf[...],
                    preferred_element_type=jnp.float32) + b3_ref[...]       # (R, D) f32
        out_ref[...] = g.astype(out_ref.dtype)

    # Advisory cost model so XLA can overlap surrounding ops with this small call.
    flops = 2 * B * S * D * (3 * D + 2 * S)
    bytes_accessed = int((2 * D * D + D * D) * 2          # bf16 weights
                         + (2 * D + D) * 4                # f32 biases
                         + B * S * D * 2 * 2              # bf16 activations (2 views)
                         + B * S * D * x.dtype.itemsize)  # output
    ce = pl.CostEstimate(flops=flops, transcendentals=B * S * S,
                         bytes_accessed=bytes_accessed)

    out_flat = pl.pallas_call(
        kernel,
        out_shape=jax.ShapeDtypeStruct((B * S, D), x.dtype),
        grid=(num_steps,),
        in_specs=[
            pl.BlockSpec((R, D), lambda i: (i, 0)),          # flattened activations
            pl.BlockSpec((Bt, S, D), lambda i: (i, 0, 0)),   # batched view for attention
            pl.BlockSpec((D, 2 * D), lambda i: (0, 0)),      # fused W1|W2 (resident)
            pl.BlockSpec((1, 2 * D), lambda i: (0, 0)),      # fused b1|b2
            pl.BlockSpec(memory_space=pl.ANY),               # W3: manual DMA overlap
            pl.BlockSpec((1, D), lambda i: (0, 0)),          # b3
        ],
        out_specs=pl.BlockSpec((R, D), lambda i: (i, 0)),
        scratch_shapes=[
            pltpu.VMEM((D, D), compute_dtype),               # persistent W3 buffer
            pltpu.SemaphoreType.DMA(()),
        ],
        compiler_params=pltpu.CompilerParams(
            # Weight-DMA-bound at these shapes: keep the grid sequential so weights
            # (and the step-0 W3 prefetch) stay resident on one core.
            dimension_semantics=("arbitrary",)),
        cost_estimate=ce,
    )(xf, xc, w12t, b12, w3t, b3r)

    return out_flat.reshape(B, S, D)
    # TODO(synk): for realistic S (>= 256) the f32 scores/softmax intermediates should be
    # flash-style tiled over a K grid axis instead of materialized per step.


def rea_sec_reference(x, params):
    """Pure-JAX f32 reference mirroring the PyTorch forward (eval mode)."""
    W1, b1, W2, b2, W3, b3 = params
    q = x @ W1.T + b1
    k = x @ W2.T + b2
    att = jnp.matmul(q, jnp.swapaxes(k, 1, 2)) / 28.0
    att = jax.nn.softmax(att, axis=2)
    gx = jnp.matmul(att, x)
    return gx @ W3.T + b3


def init_params(key, d_model=768):
    """Deterministic nn.Linear-style init: U(-1/sqrt(in), 1/sqrt(in))."""
    bound = 1.0 / math.sqrt(d_model)
    keys = jax.random.split(key, 6)
    params = []
    for i in range(3):
        W = jax.random.uniform(keys[2 * i], (d_model, d_model),
                               jnp.float32, -bound, bound)
        b = jax.random.uniform(keys[2 * i + 1], (d_model,),
                               jnp.float32, -bound, bound)
        params += [W, b]
    return tuple(params)


if __name__ == "__main__":
    # d_model = 768 is hard-coded by the module (Linear(768, 768), divide by 28);
    # keep batch/seq small.
    B, S, D = 2, 8, 768

    root = jax.random.PRNGKey(0)
    kx, kp = jax.random.split(root)
    x = jax.random.normal(kx, (B, S, D), jnp.float32)
    params = init_params(kp, D)

    # Parameter prep happens once (model-load time), not on every forward.
    prepared = jax.block_until_ready(prepare_rea_sec_params(params))

    out = rea_sec_forward(x, prepared)
    out = jax.block_until_ready(out)

    ref = rea_sec_reference(x, params)

    assert out.shape == (B, S, D)
    # bf16 matmul inputs + approx reciprocal => slightly looser tolerance than pure f32
    assert jnp.allclose(out, ref, rtol=2e-2, atol=2e-2), \
        float(jnp.max(jnp.abs(out - ref)))

    print("KERNEL_OK")
</pallas_src>

<mosaic_0001>
module attributes {stable_mosaic.version = 11 : i64} {
  func.func @kernel(%arg0: i32, %arg1: memref<16x768xbf16, #tpu.memory_space<vmem>>, %arg2: memref<2x8x768xbf16, #tpu.memory_space<vmem>>, %arg3: memref<768x1536xbf16, #tpu.memory_space<vmem>>, %arg4: memref<1x1536xf32, #tpu.memory_space<vmem>>, %arg5: memref<768x768xbf16, #tpu.memory_space<any>>, %arg6: memref<1x768xf32, #tpu.memory_space<vmem>>, %arg7: memref<16x768xf32, #tpu.memory_space<vmem>>, %arg8: memref<768x768xbf16, #tpu.memory_space<vmem>>, %arg9: memref<!tpu.dma_semaphore, #tpu.memory_space<semaphore_mem>>) attributes {dimension_semantics = [#tpu.dimension_semantics<arbitrary>], iteration_bounds = array<i64: 1>, scalar_prefetch = 0 : i64, scratch_operands = 2 : i64, tpu.core_type = #tpu.core_type<tc>, window_params = [{transform_indices = @transform_0, window_bounds = array<i64: 16, 768>}, {transform_indices = @transform_1, window_bounds = array<i64: 2, 8, 768>}, {pipeline_mode = #tpu.pipeline_mode<synchronous>, transform_indices = @transform_2, window_bounds = array<i64: 768, 1536>}, {pipeline_mode = #tpu.pipeline_mode<synchronous>, transform_indices = @transform_3, window_bounds = array<i64: 1, 1536>}, {}, {pipeline_mode = #tpu.pipeline_mode<synchronous>, transform_indices = @transform_5, window_bounds = array<i64: 1, 768>}, {transform_indices = @transform_6, window_bounds = array<i64: 16, 768>}]} {
    %c0_i32 = arith.constant 0 : i32
    %0 = arith.cmpi eq, %arg0, %c0_i32 : i32
    %1 = arith.extui %0 : i1 to i32
    %c0_i32_0 = arith.constant 0 : i32
    %2 = arith.cmpi ne, %1, %c0_i32_0 : i32
    scf.if %2 {
      tpu.enqueue_dma source(%arg5 : memref<768x768xbf16, #tpu.memory_space<any>>) target(%arg8 : memref<768x768xbf16, #tpu.memory_space<vmem>>) target_semaphore(%arg9 : memref<!tpu.dma_semaphore, #tpu.memory_space<semaphore_mem>>)
    } else {
    }
    %c0 = arith.constant 0 : index
    %c0_1 = arith.constant 0 : index
    %3 = vector.load %arg1[%c0, %c0_1] : memref<16x768xbf16, #tpu.memory_space<vmem>>, vector<16x768xbf16>
    %c0_2 = arith.constant 0 : index
    %c0_3 = arith.constant 0 : index
    %4 = vector.load %arg3[%c0_2, %c0_3] : memref<768x1536xbf16, #tpu.memory_space<vmem>>, vector<768x1536xbf16>
    %cst = arith.constant dense<0.000000e+00> : vector<16x1536xf32>
    %5 = tpu.matmul %3, %4, %cst {dimension_numbers = #tpu.dot_dimension_numbers<[1], [0], [0], [1], [0, 0, 1, 1], [], []>} : vector<16x768xbf16>, vector<768x1536xbf16>, vector<16x1536xf32> -> vector<16x1536xf32>
    %c0_4 = arith.constant 0 : index
    %c0_5 = arith.constant 0 : index
    %6 = vector.load %arg4[%c0_4, %c0_5] : memref<1x1536xf32, #tpu.memory_space<vmem>>, vector<1x1536xf32>
    %7 = vector.broadcast %6 : vector<1x1536xf32> to vector<16x1536xf32>
    %8 = arith.addf %5, %7 : vector<16x1536xf32>
    %9 = vector.extract_strided_slice %8 {offsets = [0, 0], sizes = [16, 768], strides = [1, 1]} : vector<16x1536xf32> to vector<16x768xf32>
    %10 = vector.shape_cast %9 : vector<16x768xf32> to vector<2x8x768xf32>
    %11 = arith.truncf %10 : vector<2x8x768xf32> to vector<2x8x768xbf16>
    %12 = vector.extract_strided_slice %8 {offsets = [0, 768], sizes = [16, 768], strides = [1, 1]} : vector<16x1536xf32> to vector<16x768xf32>
    %13 = vector.shape_cast %12 : vector<16x768xf32> to vector<2x8x768xf32>
    %14 = arith.truncf %13 : vector<2x8x768xf32> to vector<2x8x768xbf16>
    "tpu.trace_start"() <{level = 10 : i32, message = "bqd,bkd->bqk"}> : () -> ()
    %cst_6 = arith.constant dense<0.000000e+00> : vector<2x8x8xf32>
    %15 = tpu.matmul %11, %14, %cst_6 {dimension_numbers = #tpu.dot_dimension_numbers<[2], [2], [1], [1], [0, 0, 0, 1, 1, 1], [0], [0]>} : vector<2x8x768xbf16>, vector<2x8x768xbf16>, vector<2x8x8xf32> -> vector<2x8x8xf32>
    "tpu.trace_stop"() : () -> ()
    %cst_7 = arith.constant dense<0xFF800000> : vector<2x8xf32>
    %16 = vector.multi_reduction <maximumf>, %15, %cst_7 [2] : vector<2x8x8xf32> to vector<2x8xf32>
    %17 = vector.shape_cast %16 : vector<2x8xf32> to vector<2x8x1xf32>
    %18 = vector.broadcast %17 : vector<2x8x1xf32> to vector<2x8x8xf32>
    %19 = arith.subf %15, %18 : vector<2x8x8xf32>
    %20 = math.exp %19 : vector<2x8x8xf32>
    %cst_8 = arith.constant dense<0.000000e+00> : vector<2x8xf32>
    %21 = vector.multi_reduction <add>, %20, %cst_8 [2] : vector<2x8x8xf32> to vector<2x8xf32>
    %22 = vector.shape_cast %21 : vector<2x8xf32> to vector<2x8x1xf32>
    %23 = tpu.reciprocal %22 {approx = true} : vector<2x8x1xf32> -> vector<2x8x1xf32>
    %24 = vector.broadcast %23 : vector<2x8x1xf32> to vector<2x8x8xf32>
    %25 = arith.mulf %20, %24 : vector<2x8x8xf32>
    %26 = arith.truncf %25 : vector<2x8x8xf32> to vector<2x8x8xbf16>
    %c0_9 = arith.constant 0 : index
    %c0_10 = arith.constant 0 : index
    %c0_11 = arith.constant 0 : index
    %27 = vector.load %arg2[%c0_9, %c0_10, %c0_11] : memref<2x8x768xbf16, #tpu.memory_space<vmem>>, vector<2x8x768xbf16>
    "tpu.trace_start"() <{level = 10 : i32, message = "bqk,bkd->bqd"}> : () -> ()
    %cst_12 = arith.constant dense<0.000000e+00> : vector<2x8x768xf32>
    %28 = tpu.matmul %26, %27, %cst_12 {dimension_numbers = #tpu.dot_dimension_numbers<[2], [1], [1], [2], [0, 0, 0, 1, 1, 2], [0], [0]>} : vector<2x8x8xbf16>, vector<2x8x768xbf16>, vector<2x8x768xf32> -> vector<2x8x768xf32>
    %c0_i32_13 = arith.constant 0 : i32
    "tpu.trace_stop"() : () -> ()
    %29 = arith.cmpi eq, %arg0, %c0_i32_13 : i32
    %30 = arith.extui %29 : i1 to i32
    %c0_i32_14 = arith.constant 0 : i32
    %31 = arith.cmpi ne, %30, %c0_i32_14 : i32
    scf.if %31 {
      tpu.wait_dma2 semaphore(%arg9 : memref<!tpu.dma_semaphore, #tpu.memory_space<semaphore_mem>>) src(%arg5 : memref<768x768xbf16, #tpu.memory_space<any>>) dst(%arg8 : memref<768x768xbf16, #tpu.memory_space<vmem>>)
    } else {
    }
    %32 = vector.shape_cast %28 : vector<2x8x768xf32> to vector<16x768xf32>
    %33 = arith.truncf %32 : vector<16x768xf32> to vector<16x768xbf16>
    %c0_15 = arith.constant 0 : index
    %c0_16 = arith.constant 0 : index
    %34 = vector.load %arg8[%c0_15, %c0_16] : memref<768x768xbf16, #tpu.memory_space<vmem>>, vector<768x768xbf16>
    %cst_17 = arith.constant dense<0.000000e+00> : vector<16x768xf32>
    %35 = tpu.matmul %33, %34, %cst_17 {dimension_numbers = #tpu.dot_dimension_numbers<[1], [0], [0], [1], [0, 0, 1, 1], [], []>} : vector<16x768xbf16>, vector<768x768xbf16>, vector<16x768xf32> -> vector<16x768xf32>
    %c0_18 = arith.constant 0 : index
    %c0_19 = arith.constant 0 : index
    %36 = vector.load %arg6[%c0_18, %c0_19] : memref<1x768xf32, #tpu.memory_space<vmem>>, vector<1x768xf32>
    %37 = vector.broadcast %36 : vector<1x768xf32> to vector<16x768xf32>
    %38 = arith.addf %35, %37 : vector<16x768xf32>
    %c0_20 = arith.constant 0 : index
    %c0_21 = arith.constant 0 : index
    %39 = vector.load %arg7[%c0_20, %c0_21] : memref<16x768xf32, #tpu.memory_space<vmem>>, vector<16x768xf32>
    tpu.vector_store %arg7[%c0_20, %c0_21], %38 {strides = array<i32>} : memref<16x768xf32, #tpu.memory_space<vmem>>, vector<16x768xf32>,
    return
  }
  func.func @transform_0(%arg0: i32) -> (i32, i32) {
    %c0_i32 = arith.constant 0 : i32
    %c0_i32_0 = arith.constant 0 : i32
    return %arg0, %c0_i32 : i32, i32
  }
  func.func @transform_1(%arg0: i32) -> (i32, i32, i32) {
    %c0_i32 = arith.constant 0 : i32
    %c0_i32_0 = arith.constant 0 : i32
    %c0_i32_1 = arith.constant 0 : i32
    return %arg0, %c0_i32, %c0_i32_0 : i32, i32, i32
  }
  func.func @transform_2(%arg0: i32) -> (i32, i32) {
    %c0_i32 = arith.constant 0 : i32
    %c0_i32_0 = arith.constant 0 : i32
    %c0_i32_1 = arith.constant 0 : i32
    return %c0_i32, %c0_i32_0 : i32, i32
  }
  func.func @transform_3(%arg0: i32) -> (i32, i32) {
    %c0_i32 = arith.constant 0 : i32
    %c0_i32_0 = arith.constant 0 : i32
    %c0_i32_1 = arith.constant 0 : i32
    return %c0_i32, %c0_i32_0 : i32, i32
  }
  func.func @transform_5(%arg0: i32) -> (i32, i32) {
    %c0_i32 = arith.constant 0 : i32
    %c0_i32_0 = arith.constant 0 : i32
    %c0_i32_1 = arith.constant 0 : i32
    return %c0_i32, %c0_i32_0 : i32, i32
  }
  func.func @transform_6(%arg0: i32) -> (i32, i32) {
    %c0_i32 = arith.constant 0 : i32
    %c0_i32_0 = arith.constant 0 : i32
    return %arg0, %c0_i32 : i32, i32
  }
}

</mosaic_0001>

<llo_original>
// kernel: tpu_custom_call.1
$region0: #{tpu_custom_call.1}
  #allocation0 [shape = 'u32[]', space=smem, size = 0x4, offset = 0x4, fixed_abs, tag = 'smem constant byte address 0x4 - core index']
  #allocation1 [shape = 'u32[72,128]{1,0:T(1,128)}', space=vmem, size = 0x9000, scoped, tag = 'internal scratch']
  #allocation2 [shape = 'bf16[768,768]{1,0:T(8,128)(2,1)}', space=vmem, size = 0x120000, scoped, tag = 'scratch operand']
  #allocation3 [shape = 's32[1]{0}', space=sflag, size = 0x4, scoped, tag = 'scratch operand']
  #allocation14 [shape = 's32[]', space=sflag, size = 0x4, offset = 0, fixed_abs, tag = 'sflag constant byte address 0x0 - dummy sync flag']
  #allocation15 [shape = 's32[]', space=sflag, size = 0x4, offset = 0, fixed_abs, tag = 'sflag constant byte address 0x0 - dummy sync flag']
  #allocation16 [shape = 'u32[]', space=smem, size = 0x4, offset = 0x44, fixed_abs, tag = 'smem constant byte address 0x44 - assertion arg 0']
  #allocation17 [shape = 'u32[]', space=smem, size = 0x4, offset = 0x48, fixed_abs, tag = 'smem constant byte address 0x48 - assertion arg 1']
  %s0 = inlined_call_operand.hbm [shape: bf16[16,768], index: 0, kind: input, shape index: {}]
  %s1 = inlined_call_operand.hbm [shape: bf16[2,8,768], index: 1, kind: input, shape index: {}]
  %s2 = inlined_call_operand.hbm [shape: bf16[768,1536], index: 2, kind: input, shape index: {}]
  %s3 = inlined_call_operand.hbm [shape: f32[1,1536], index: 3, kind: input, shape index: {}]
  %s4 = inlined_call_operand.hbm [shape: bf16[768,768], index: 4, kind: input, shape index: {}]
  %s5 = inlined_call_operand.hbm [shape: f32[1,768], index: 5, kind: input, shape index: {}]
  %s6 = inlined_call_operand.hbm [shape: f32[16,768], index: 6, kind: output, shape index: {}]
  %s7 = sld [smem:[#allocation0]]
  $region62: #{tpu_custom_call.1} parent=0
    _
  %s9 = ssub.s32 1, %s7
  %s10 = scalar_select 0, %s9, %s7
  $region1: #{tpu_custom_call.1} parent=0
    #allocation4 [shape = 'u8[24576]{0}', space=vmem, size = 0x6000, scoped, tag = 'input window, operand 0, single buffered']
    #allocation5 [shape = 's32[1]{0}', space=sflag, size = 0x4, scoped, tag = 'scoped memory for tpu_custom_call.1']
    #allocation6 [shape = 's32[1]{0}', space=sflag, size = 0x4, scoped, tag = 'scoped memory for tpu_custom_call.1']
    #allocation7 [shape = 'u8[24576]{0}', space=vmem, size = 0x6000, scoped, tag = 'input window, operand 1, single buffered']
    #allocation8 [shape = 's32[1]{0}', space=sflag, size = 0x4, scoped, tag = 'scoped memory for tpu_custom_call.1']
    #allocation9 [shape = 'u8[2359296]{0}', space=vmem, size = 0x240000, scoped, tag = 'input window, operand 2, single buffered']
    #allocation10 [shape = 'u8[6144]{0}', space=vmem, size = 0x1800, scoped, tag = 'input window, operand 3, single buffered']
    #allocation11 [shape = 's32[1]{0}', space=sflag, size = 0x4, scoped, tag = 'scoped memory for tpu_custom_call.1']
    #allocation12 [shape = 'u8[3072]{0}', space=vmem, size = 0xc00, scoped, tag = 'input window, operand 5, single buffered']
    #allocation13 [shape = 'u8[49152]{0}', space=vmem, size = 0xc000, scoped, tag = 'output window, operand 0, single buffered']
    %11 = vsyncpa [#allocation5], 0
    %12 = vsyncpa [#allocation8], 0
    %13 = vsyncpa [#allocation11], 0
    %14 = vsyncpa [#allocation6], 0
    // Predicated region
    $region2: #{tpu_custom_call.1} parent=1 // pred_check
      _
    $region3: #{tpu_custom_call.1} parent=1 // pred_check_branch
      %16 = sbr.rel (0) target = $region5
    $region4: #{tpu_custom_call.1} parent=1 // pred_region
      %18 = vsyncadd [#allocation5], 0
      %s19 = sshll.u32 %s0, 4
      %s20 = int_to_ptr.hbm [resolvable:$true] %s19
      %s21 = sshll.u32 [#allocation4], 4
      %s22 = int_to_ptr.vmem [resolvable:$true] %s21
      %27 = dma.hbm_to_vmem [thread:$0]  %s20, 768, %s22, [#allocation5], 384, 384, 24
    $region5: #{tpu_custom_call.1} parent=1 // pred_fallthru
      _
    // Predicated region
    $region6: #{tpu_custom_call.1} parent=1 // pred_check
      _
    $region7: #{tpu_custom_call.1} parent=1 // pred_check_branch
      %29 = sbr.rel (0) target = $region9
    $region8: #{tpu_custom_call.1} parent=1 // pred_region
      %31 = vsyncadd [#allocation8], 0
      %s32 = sshll.u32 %s1, 4
      %s33 = int_to_ptr.hbm [resolvable:$true] %s32
      %s34 = sshll.u32 [#allocation7], 4
      %s35 = int_to_ptr.vmem [resolvable:$true] %s34
      %40 = dma.hbm_to_vmem [thread:$0]  %s33, 768, %s35, [#allocation8], 384, 384, 24
    $region9: #{tpu_custom_call.1} parent=1 // pred_fallthru
      _
    // Predicated region
    $region10: #{tpu_custom_call.1} parent=1 // pred_check
      _
    $region11: #{tpu_custom_call.1} parent=1 // pred_check_branch
      %42 = sbr.rel (0) target = $region13
    $region12: #{tpu_custom_call.1} parent=1 // pred_region
      %44 = vsyncadd [#allocation8], 0
      %s45 = sshll.u32 %s2, 4
      %s46 = int_to_ptr.hbm [resolvable:$true] %s45
      %s47 = sshll.u32 [#allocation9], 4
      %s48 = int_to_ptr.vmem [resolvable:$true] %s47
      %53 = dma.hbm_to_vmem [thread:$0]  %s46, 73728, %s48, [#allocation8], 768, 768, 48
    $region13: #{tpu_custom_call.1} parent=1 // pred_fallthru
      _
    // Predicated region
    $region14: #{tpu_custom_call.1} parent=1 // pred_check
      _
    $region15: #{tpu_custom_call.1} parent=1 // pred_check_branch
      %55 = sbr.rel (0) target = $region17
    $region16: #{tpu_custom_call.1} parent=1 // pred_region
      %57 = vsyncadd [#allocation11], 0
      %s59 = sshll.u32 %s3, 4
      %s60 = int_to_ptr.hbm [resolvable:$true] %s59
      %s61 = sshll.u32 [#allocation10], 4
      %s62 = int_to_ptr.vmem [resolvable:$true] %s61
      %64 = dma.hbm_to_vmem [thread:$0]  %s60, 192, %s62, [#allocation11]
    $region17: #{tpu_custom_call.1} parent=1 // pred_fallthru
      _
    // Predicated region
    $region18: #{tpu_custom_call.1} parent=1 // pred_check
      _
    $region19: #{tpu_custom_call.1} parent=1 // pred_check_branch
      %66 = sbr.rel (0) target = $region21
    $region20: #{tpu_custom_call.1} parent=1 // pred_region
      %68 = vsyncadd [#allocation11], 0
      %s70 = sshll.u32 %s5, 4
      %s71 = int_to_ptr.hbm [resolvable:$true] %s70
      %s72 = sshll.u32 [#allocation12], 4
      %s73 = int_to_ptr.vmem [resolvable:$true] %s72
      %75 = dma.hbm_to_vmem [thread:$0]  %s71, 96, %s73, [#allocation11]
    $region21: #{tpu_custom_call.1} parent=1 // pred_fallthru
      _
    // Predicated region
    $region22: #{tpu_custom_call.1} parent=1 // pred_check
      _
    $region23: #{tpu_custom_call.1} parent=1 // pred_check_branch
      %77 = sbr.rel (0) target = $region25
    $region24: #{tpu_custom_call.1} parent=1 // pred_region
      %79 = dma.done [#allocation5], 768
    $region25: #{tpu_custom_call.1} parent=1 // pred_fallthru
      _
    // Predicated region
    $region26: #{tpu_custom_call.1} parent=1 // pred_check
      _
    $region27: #{tpu_custom_call.1} parent=1 // pred_check_branch
      %81 = sbr.rel (0) target = $region29
    $region28: #{tpu_custom_call.1} parent=1 // pred_region
      %83 = dma.done [#allocation8], 768
    $region29: #{tpu_custom_call.1} parent=1 // pred_fallthru
      _
    // Predicated region
    $region30: #{tpu_custom_call.1} parent=1 // pred_check
      _
    $region31: #{tpu_custom_call.1} parent=1 // pred_check_branch
      %85 = sbr.rel (0) target = $region33
    $region32: #{tpu_custom_call.1} parent=1 // pred_region
      %87 = dma.done [#allocation8], 73728
    $region33: #{tpu_custom_call.1} parent=1 // pred_fallthru
      _
    // Predicated region
    $region34: #{tpu_custom_call.1} parent=1 // pred_check
      _
    $region35: #{tpu_custom_call.1} parent=1 // pred_check_branch
      %89 = sbr.rel (0) target = $region37
    $region36: #{tpu_custom_call.1} parent=1 // pred_region
      %91 = dma.done [#allocation11], 192
    $region37: #{tpu_custom_call.1} parent=1 // pred_fallthru
      _
    // Predicated region
    $region38: #{tpu_custom_call.1} parent=1 // pred_check
      _
    $region39: #{tpu_custom_call.1} parent=1 // pred_check_branch
      %93 = sbr.rel (0) target = $region41
    $region40: #{tpu_custom_call.1} parent=1 // pred_region
      %95 = dma.done [#allocation11], 96
    $region41: #{tpu_custom_call.1} parent=1 // pred_fallthru
      _
    %p97 = scmp.eq.s32.totalorder 0, 0
    // Predicated region
    $region42: #{tpu_custom_call.1} parent=1 // pred_check
      %p98 = pneg %p97
    $region43: #{tpu_custom_call.1} parent=1 // pred_check_branch
      %100 = sbr.rel (%p98) target = $region45
    $region44: #{tpu_custom_call.1} parent=1 // pred_region
      // Predicated region
      $region46: #{tpu_custom_call.1} parent=44 // pred_check
        _
      $region47: #{tpu_custom_call.1} parent=44 // pred_check_branch
        %102 = sbr.rel target = $region49
      $region48: #{tpu_custom_call.1} parent=44 // pred_region
        %103 = sst [smem:[#allocation16]] [#allocation15]
        %104 = sst [smem:[#allocation17]] [#allocation14]
      $region49: #{tpu_custom_call.1} parent=44 // pred_fallthru
        _
      %106 = shalt.err (0)
      %s108 = sshll.u32 %s4, 4
      %s109 = int_to_ptr.hbm [resolvable:$true] %s108
      %s110 = sshll.u32 [#allocation2], 4
      %s111 = int_to_ptr.vmem [resolvable:$true] %s110
      %113 = dma.hbm_to_vmem [thread:$0]  %s109, 36864, %s111, [#allocation3]
    $region45: #{tpu_custom_call.1} parent=1 // pred_fallthru
      _
    %v114 = vld [vmem:[#allocation4] sm:$0xff]
    %v115 = vld [vmem:[#allocation4 + $0x8] sm:$0xff]
    %v116 = vld [vmem:[#allocation4 + $0x10] sm:$0xff]
    %v117 = vld [vmem:[#allocation4 + $0x18] sm:$0xff]
    %v118 = vld [vmem:[#allocation4 + $0x20] sm:$0xff]
    %v119 = vld [vmem:[#allocation4 + $0x28] sm:$0xff]
    %v120 = vld [vmem:[#allocation9] sm:$0xff]
    %v121 = vld [vmem:[#allocation9 + $0x8] sm:$0xff]
    %v122 = vld [vmem:[#allocation9 + $0x10] sm:$0xff]
    %v123 = vld [vmem:[#allocation9 + $0x18] sm:$0xff]
    %v124 = vld [vmem:[#allocation9 + $0x20] sm:$0xff]
    %v125 = vld [vmem:[#allocation9 + $0x28] sm:$0xff]
    %v126 = vld [vmem:[#allocation9 + $0x30] sm:$0xff]
    %v127 = vld [vmem:[#allocation9 + $0x38] sm:$0xff]
    %v128 = vld [vmem:[#allocation9 + $0x40] sm:$0xff]
    %v129 = vld [vmem:[#allocation9 + $0x48] sm:$0xff]
    %v130 = vld [vmem:[#allocation9 + $0x50] sm:$0xff]
    %v131 = vld [vmem:[#allocation9 + $0x58] sm:$0xff]
    %v132 = vld [vmem:[#allocation9 + $0x60] sm:$0xff]
    %v133 = vld [vmem:[#allocation9 + $0x68] sm:$0xff]
    %v134 = vld [vmem:[#allocation9 + $0x70] sm:$0xff]
    %v135 = vld [vmem:[#allocation9 + $0x78] sm:$0xff]
    %v136 = vld [vmem:[#allocation9 + $0x80] sm:$0xff]
    %v137 = vld [vmem:[#allocation9 + $0x88] sm:$0xff]
    %v138 = vld [vmem:[#allocation9 + $0x90] sm:$0xff]
    %v139 = vld [vmem:[#allocation9 + $0x98] sm:$0xff]
    %v140 = vld [vmem:[#allocation9 + $0xa0] sm:$0xff]
    %v141 = vld [vmem:[#allocation9 + $0xa8] sm:$0xff]
    %v142 = vld [vmem:[#allocation9 + $0xb0] sm:$0xff]
    %v143 = vld [vmem:[#allocation9 + $0xb8] sm:$0xff]
    %v144 = vld [vmem:[#allocation9 + $0xc0] sm:$0xff]
    %v145 = vld [vmem:[#allocation9 + $0xc8] sm:$0xff]
    %v146 = vld [vmem:[#allocation9 + $0xd0] sm:$0xff]
    %v147 = vld [vmem:[#allocation9 + $0xd8] sm:$0xff]
    %v148 = vld [vmem:[#allocation9 + $0xe0] sm:$0xff]
    %v149 = vld [vmem:[#allocation9 + $0xe8] sm:$0xff]
    %v150 = vld [vmem:[#allocation9 + $0xf0] sm:$0xff]
    %v151 = vld [vmem:[#allocation9 + $0xf8] sm:$0xff]
    %v152 = vld [vmem:[#allocation9 + $0x100] sm:$0xff]
    %v153 = vld [vmem:[#allocation9 + $0x108] sm:$0xff]
    %v154 = vld [vmem:[#allocation9 + $0x110] sm:$0xff]
    %v155 = vld [vmem:[#allocation9 + $0x118] sm:$0xff]
    %v156 = vld [vmem:[#allocation9 + $0x120] sm:$0xff]
    %v157 = vld [vmem:[#allocation9 + $0x128] sm:$0xff]
    %v158 = vld [vmem:[#allocation9 + $0x130] sm:$0xff]
    %v159 = vld [vmem:[#allocation9 + $0x138] sm:$0xff]
    %v160 = vld [vmem:[#allocation9 + $0x140] sm:$0xff]
    %v161 = vld [vmem:[#allocation9 + $0x148] sm:$0xff]
    %v162 = vld [vmem:[#allocation9 + $0x150] sm:$0xff]
    %v163 = vld [vmem:[#allocation9 + $0x158] sm:$0xff]
    %v164 = vld [vmem:[#allocation9 + $0x160] sm:$0xff]
    %v165 = vld [vmem:[#allocation9 + $0x168] sm:$0xff]
    %v166 = vld [vmem:[#allocation9 + $0x170] sm:$0xff]
    %v167 = vld [vmem:[#allocation9 + $0x178] sm:$0xff]
    %v168 = vld [vmem:[#allocation9 + $0x180] sm:$0xff]
    %v169 = vld [vmem:[#allocation9 + $0x188] sm:$0xff]
    %v170 = vld [vmem:[#allocation9 + $0x190] sm:$0xff]
    %v171 = vld [vmem:[#allocation9 + $0x198] sm:$0xff]
    %v172 = vld [vmem:[#allocation9 + $0x1a0] sm:$0xff]
    %v173 = vld [vmem:[#allocation9 + $0x1a8] sm:$0xff]
    %v174 = vld [vmem:[#allocation9 + $0x1b0] sm:$0xff]
    %v175 = vld [vmem:[#allocation9 + $0x1b8] sm:$0xff]
    %v176 = vld [vmem:[#allocation9 + $0x1c0] sm:$0xff]
    %v177 = vld [vmem:[#allocation9 + $0x1c8] sm:$0xff]
    %v178 = vld [vmem:[#allocation9 + $0x1d0] sm:$0xff]
    %v179 = vld [vmem:[#allocation9 + $0x1d8] sm:$0xff]
    %v180 = vld [vmem:[#allocation9 + $0x1e0] sm:$0xff]
    %v181 = vld [vmem:[#allocation9 + $0x1e8] sm:$0xff]
    %v182 = vld [vmem:[#allocation9 + $0x1f0] sm:$0xff]
    %v183 = vld [vmem:[#allocation9 + $0x1f8] sm:$0xff]
    %v184 = vld [vmem:[#allocation9 + $0x200] sm:$0xff]
    %v185 = vld [vmem:[#allocation9 + $0x208] sm:$0xff]
    %v186 = vld [vmem:[#allocation9 + $0x210] sm:$0xff]
    %v187 = vld [vmem:[#allocation9 + $0x218] sm:$0xff]
    %v188 = vld [vmem:[#allocation9 + $0x220] sm:$0xff]
    %v189 = vld [vmem:[#allocation9 + $0x228] sm:$0xff]
    %v190 = vld [vmem:[#allocation9 + $0x230] sm:$0xff]
    %v191 = vld [vmem:[#allocation9 + $0x238] sm:$0xff]
    %v192 = vld [vmem:[#allocation9 + $0x240] sm:$0xff]
    %v193 = vld [vmem:[#allocation9 + $0x248] sm:$0xff]
    %v194 = vld [vmem:[#allocation9 + $0x250] sm:$0xff]
    %v195 = vld [vmem:[#allocation9 + $0x258] sm:$0xff]
    %v196 = vld [vmem:[#allocation9 + $0x260] sm:$0xff]
    %v197 = vld [vmem:[#allocation9 + $0x268] sm:$0xff]
    %v198 = vld [vmem:[#allocation9 + $0x270] sm:$0xff]
    %v199 = vld [vmem:[#allocation9 + $0x278] sm:$0xff]
    %v200 = vld [vmem:[#allocation9 + $0x280] sm:$0xff]
    %v201 = vld [vmem:[#allocation9 + $0x288] sm:$0xff]
    %v202 = vld [vmem:[#allocation9 + $0x290] sm:$0xff]
    %v203 = vld [vmem:[#allocation9 + $0x298] sm:$0xff]
    %v204 = vld [vmem:[#allocation9 + $0x2a0] sm:$0xff]
    %v205 = vld [vmem:[#allocation9 + $0x2a8] sm:$0xff]
    %v206 = vld [vmem:[#allocation9 + $0x2b0] sm:$0xff]
    %v207 = vld [vmem:[#allocation9 + $0x2b8] sm:$0xff]
    %v208 = vld [vmem:[#allocation9 + $0x2c0] sm:$0xff]
    %v209 = vld [vmem:[#allocation9 + $0x2c8] sm:$0xff]
    %v210 = vld [vmem:[#allocation9 + $0x2d0] sm:$0xff]
    %v211 = vld [vmem:[#allocation9 + $0x2d8] sm:$0xff]
    %v212 = vld [vmem:[#allocation9 + $0x2e0] sm:$0xff]
    %v213 = vld [vmem:[#allocation9 + $0x2e8] sm:$0xff]
    %v214 = vld [vmem:[#allocation9 + $0x2f0] sm:$0xff]
    %v215 = vld [vmem:[#allocation9 + $0x2f8] sm:$0xff]
    %v216 = vld [vmem:[#allocation9 + $0x300] sm:$0xff]
    %v217 = vld [vmem:[#allocation9 + $0x308] sm:$0xff]
    %v218 = vld [vmem:[#allocation9 + $0x310] sm:$0xff]
    %v219 = vld [vmem:[#allocation9 + $0x318] sm:$0xff]
    %v220 = vld [vmem:[#allocation9 + $0x320] sm:$0xff]
    %v221 = vld [vmem:[#allocation9 + $0x328] sm:$0xff]
    %v222 = vld [vmem:[#allocation9 + $0x330] sm:$0xff]
    %v223 = vld [vmem:[#allocation9 + $0x338] sm:$0xff]
    %v224 = vld [vmem:[#allocation9 + $0x340] sm:$0xff]
    %v225 = vld [vmem:[#allocation9 + $0x348] sm:$0xff]
    %v226 = vld [vmem:[#allocation9 + $0x350] sm:$0xff]
    %v227 = vld [vmem:[#allocation9 + $0x358] sm:$0xff]
    %v228 = vld [vmem:[#allocation9 + $0x360] sm:$0xff]
    %v229 = vld [vmem:[#allocation9 + $0x368] sm:$0xff]
    %v230 = vld [vmem:[#allocation9 + $0x370] sm:$0xff]
    %v231 = vld [vmem:[#allocation9 + $0x378] sm:$0xff]
    %v232 = vld [vmem:[#allocation9 + $0x380] sm:$0xff]
    %v233 = vld [vmem:[#allocation9 + $0x388] sm:$0xff]
    %v234 = vld [vmem:[#allocation9 + $0x390] sm:$0xff]
    %v235 = vld [vmem:[#allocation9 + $0x398] sm:$0xff]
    %v236 = vld [vmem:[#allocation9 + $0x3a0] sm:$0xff]
    %v237 = vld [vmem:[#allocation9 + $0x3a8] sm:$0xff]
    %v238 = vld [vmem:[#allocation9 + $0x3b0] sm:$0xff]
    %v239 = vld [vmem:[#allocation9 + $0x3b8] sm:$0xff]
    %v240 = vld [vmem:[#allocation9 + $0x3c0] sm:$0xff]
    %v241 = vld [vmem:[#allocation9 + $0x3c8] sm:$0xff]
    %v242 = vld [vmem:[#allocation9 + $0x3d0] sm:$0xff]
    %v243 = vld [vmem:[#allocation9 + $0x3d8] sm:$0xff]
    %v244 = vld [vmem:[#allocation9 + $0x3e0] sm:$0xff]
    %v245 = vld [vmem:[#allocation9 + $0x3e8] sm:$0xff]
    %v246 = vld [vmem:[#allocation9 + $0x3f0] sm:$0xff]
    %v247 = vld [vmem:[#allocation9 + $0x3f8] sm:$0xff]
    %v248 = vld [vmem:[#allocation9 + $0x400] sm:$0xff]
    %v249 = vld [vmem:[#allocation9 + $0x408] sm:$0xff]
    %v250 = vld [vmem:[#allocation9 + $0x410] sm:$0xff]
    %v251 = vld [vmem:[#allocation9 + $0x418] sm:$0xff]
    %v252 = vld [vmem:[#allocation9 + $0x420] sm:$0xff]
    %v253 = vld [vmem:[#allocation9 + $0x428] sm:$0xff]
    %v254 = vld [vmem:[#allocation9 + $0x430] sm:$0xff]
    %v255 = vld [vmem:[#allocation9 + $0x438] sm:$0xff]
    %v256 = vld [vmem:[#allocation9 + $0x440] sm:$0xff]
    %v257 = vld [vmem:[#allocation9 + $0x448] sm:$0xff]
    %v258 = vld [vmem:[#allocation9 + $0x450] sm:$0xff]
    %v259 = vld [vmem:[#allocation9 + $0x458] sm:$0xff]
    %v260 = vld [vmem:[#allocation9 + $0x460] sm:$0xff]
    %v261 = vld [vmem:[#allocation9 + $0x468] sm:$0xff]
    %v262 = vld [vmem:[#allocation9 + $0x470] sm:$0xff]
    %v263 = vld [vmem:[#allocation9 + $0x478] sm:$0xff]
    %v264 = vld [vmem:[#allocation9 + $0x480] sm:$0xff]
    %v265 = vld [vmem:[#allocation9 + $0x488] sm:$0xff]
    %v266 = vld [vmem:[#allocation9 + $0x490] sm:$0xff]
    %v267 = vld [vmem:[#allocation9 + $0x498] sm:$0xff]
    %v268 = vld [vmem:[#allocation9 + $0x4a0] sm:$0xff]
    %v269 = vld [vmem:[#allocation9 + $0x4a8] sm:$0xff]
    %v270 = vld [vmem:[#allocation9 + $0x4b0] sm:$0xff]
    %v271 = vld [vmem:[#allocation9 + $0x4b8] sm:$0xff]
    %v272 = vld [vmem:[#allocation9 + $0x4c0] sm:$0xff]
    %v273 = vld [vmem:[#allocation9 + $0x4c8] sm:$0xff]
    %v274 = vld [vmem:[#allocation9 + $0x4d0] sm:$0xff]
    %v275 = vld [vmem:[#allocation9 + $0x4d8] sm:$0xff]
    %v276 = vld [vmem:[#allocation9 + $0x4e0] sm:$0xff]
    %v277 = vld [vmem:[#allocation9 + $0x4e8] sm:$0xff]
    %v278 = vld [vmem:[#allocation9 + $0x4f0] sm:$0xff]
    %v279 = vld [vmem:[#allocation9 + $0x4f8] sm:$0xff]
    %v280 = vld [vmem:[#allocation9 + $0x500] sm:$0xff]
    %v281 = vld [vmem:[#allocation9 + $0x508] sm:$0xff]
    %v282 = vld [vmem:[#allocation9 + $0x510] sm:$0xff]
    %v283 = vld [vmem:[#allocation9 + $0x518] sm:$0xff]
    %v284 = vld [vmem:[#allocation9 + $0x520] sm:$0xff]
    %v285 = vld [vmem:[#allocation9 + $0x528] sm:$0xff]
    %v286 = vld [vmem:[#allocation9 + $0x530] sm:$0xff]
    %v287 = vld [vmem:[#allocation9 + $0x538] sm:$0xff]
    %v288 = vld [vmem:[#allocation9 + $0x540] sm:$0xff]
    %v289 = vld [vmem:[#allocation9 + $0x548] sm:$0xff]
    %v290 = vld [vmem:[#allocation9 + $0x550] sm:$0xff]
    %v291 = vld [vmem:[#allocation9 + $0x558] sm:$0xff]
    %v292 = vld [vmem:[#allocation9 + $0x560] sm:$0xff]
    %v293 = vld [vmem:[#allocation9 + $0x568] sm:$0xff]
    %v294 = vld [vmem:[#allocation9 + $0x570] sm:$0xff]
    %v295 = vld [vmem:[#allocation9 + $0x578] sm:$0xff]
    %v296 = vld [vmem:[#allocation9 + $0x580] sm:$0xff]
    %v297 = vld [vmem:[#allocation9 + $0x588] sm:$0xff]
    %v298 = vld [vmem:[#allocation9 + $0x590] sm:$0xff]
    %v299 = vld [vmem:[#allocation9 + $0x598] sm:$0xff]
    %v300 = vld [vmem:[#allocation9 + $0x5a0] sm:$0xff]
    %v301 = vld [vmem:[#allocation9 + $0x5a8] sm:$0xff]
    %v302 = vld [vmem:[#allocation9 + $0x5b0] sm:$0xff]
    %v303 = vld [vmem:[#allocation9 + $0x5b8] sm:$0xff]
    %v304 = vld [vmem:[#allocation9 + $0x5c0] sm:$0xff]
    %v305 = vld [vmem:[#allocation9 + $0x5c8] sm:$0xff]
    %v306 = vld [vmem:[#allocation9 + $0x5d0] sm:$0xff]
    %v307 = vld [vmem:[#allocation9 + $0x5d8] sm:$0xff]
    %v308 = vld [vmem:[#allocation9 + $0x5e0] sm:$0xff]
    %v309 = vld [vmem:[#allocation9 + $0x5e8] sm:$0xff]
    %v310 = vld [vmem:[#allocation9 + $0x5f0] sm:$0xff]
    %v311 = vld [vmem:[#allocation9 + $0x5f8] sm:$0xff]
    %v312 = vld [vmem:[#allocation9 + $0x600] sm:$0xff]
    %v313 = vld [vmem:[#allocation9 + $0x608] sm:$0xff]
    %v314 = vld [vmem:[#allocation9 + $0x610] sm:$0xff]
    %v315 = vld [vmem:[#allocation9 + $0x618] sm:$0xff]
    %v316 = vld [vmem:[#allocation9 + $0x620] sm:$0xff]
    %v317 = vld [vmem:[#allocation9 + $0x628] sm:$0xff]
    %v318 = vld [vmem:[#allocation9 + $0x630] sm:$0xff]
    %v319 = vld [vmem:[#allocation9 + $0x638] sm:$0xff]
    %v320 = vld [vmem:[#allocation9 + $0x640] sm:$0xff]
    %v321 = vld [vmem:[#allocation9 + $0x648] sm:$0xff]
    %v322 = vld [vmem:[#allocation9 + $0x650] sm:$0xff]
    %v323 = vld [vmem:[#allocation9 + $0x658] sm:$0xff]
    %v324 = vld [vmem:[#allocation9 + $0x660] sm:$0xff]
    %v325 = vld [vmem:[#allocation9 + $0x668] sm:$0xff]
    %v326 = vld [vmem:[#allocation9 + $0x670] sm:$0xff]
    %v327 = vld [vmem:[#allocation9 + $0x678] sm:$0xff]
    %v328 = vld [vmem:[#allocation9 + $0x680] sm:$0xff]
    %v329 = vld [vmem:[#allocation9 + $0x688] sm:$0xff]
    %v330 = vld [vmem:[#allocation9 + $0x690] sm:$0xff]
    %v331 = vld [vmem:[#allocation9 + $0x698] sm:$0xff]
    %v332 = vld [vmem:[#allocation9 + $0x6a0] sm:$0xff]
    %v333 = vld [vmem:[#allocation9 + $0x6a8] sm:$0xff]
    %v334 = vld [vmem:[#allocation9 + $0x6b0] sm:$0xff]
    %v335 = vld [vmem:[#allocation9 + $0x6b8] sm:$0xff]
    %v336 = vld [vmem:[#allocation9 + $0x6c0] sm:$0xff]
    %v337 = vld [vmem:[#allocation9 + $0x6c8] sm:$0xff]
    %v338 = vld [vmem:[#allocation9 + $0x6d0] sm:$0xff]
    %v339 = vld [vmem:[#allocation9 + $0x6d8] sm:$0xff]
    %v340 = vld [vmem:[#allocation9 + $0x6e0] sm:$0xff]
    %v341 = vld [vmem:[#allocation9 + $0x6e8] sm:$0xff]
    %v342 = vld [vmem:[#allocation9 + $0x6f0] sm:$0xff]
    %v343 = vld [vmem:[#allocation9 + $0x6f8] sm:$0xff]
    %v344 = vld [vmem:[#allocation9 + $0x700] sm:$0xff]
    %v345 = vld [vmem:[#allocation9 + $0x708] sm:$0xff]
    %v346 = vld [vmem:[#allocation9 + $0x710] sm:$0xff]
    %v347 = vld [vmem:[#allocation9 + $0x718] sm:$0xff]
    %v348 = vld [vmem:[#allocation9 + $0x720] sm:$0xff]
    %v349 = vld [vmem:[#allocation9 + $0x728] sm:$0xff]
    %v350 = vld [vmem:[#allocation9 + $0x730] sm:$0xff]
    %v351 = vld [vmem:[#allocation9 + $0x738] sm:$0xff]
    %v352 = vld [vmem:[#allocation9 + $0x740] sm:$0xff]
    %v353 = vld [vmem:[#allocation9 + $0x748] sm:$0xff]
    %v354 = vld [vmem:[#allocation9 + $0x750] sm:$0xff]
    %v355 = vld [vmem:[#allocation9 + $0x758] sm:$0xff]
    %v356 = vld [vmem:[#allocation9 + $0x760] sm:$0xff]
    %v357 = vld [vmem:[#allocation9 + $0x768] sm:$0xff]
    %v358 = vld [vmem:[#allocation9 + $0x770] sm:$0xff]
    %v359 = vld [vmem:[#allocation9 + $0x778] sm:$0xff]
    %v360 = vld [vmem:[#allocation9 + $0x780] sm:$0xff]
    %v361 = vld [vmem:[#allocation9 + $0x788] sm:$0xff]
    %v362 = vld [vmem:[#allocation9 + $0x790] sm:$0xff]
    %v363 = vld [vmem:[#allocation9 + $0x798] sm:$0xff]
    %v364 = vld [vmem:[#allocation9 + $0x7a0] sm:$0xff]
    %v365 = vld [vmem:[#allocation9 + $0x7a8] sm:$0xff]
    %v366 = vld [vmem:[#allocation9 + $0x7b0] sm:$0xff]
    %v367 = vld [vmem:[#allocation9 + $0x7b8] sm:$0xff]
    %v368 = vld [vmem:[#allocation9 + $0x7c0] sm:$0xff]
    %v369 = vld [vmem:[#allocation9 + $0x7c8] sm:$0xff]
    %v370 = vld [vmem:[#allocation9 + $0x7d0] sm:$0xff]
    %v371 = vld [vmem:[#allocation9 + $0x7d8] sm:$0xff]
    %v372 = vld [vmem:[#allocation9 + $0x7e0] sm:$0xff]
    %v373 = vld [vmem:[#allocation9 + $0x7e8] sm:$0xff]
    %v374 = vld [vmem:[#allocation9 + $0x7f0] sm:$0xff]
    %v375 = vld [vmem:[#allocation9 + $0x7f8] sm:$0xff]
    %v376 = vld [vmem:[#allocation9 + $0x800] sm:$0xff]
    %v377 = vld [vmem:[#allocation9 + $0x808] sm:$0xff]
    %v378 = vld [vmem:[#allocation9 + $0x810] sm:$0xff]
    %v379 = vld [vmem:[#allocation9 + $0x818] sm:$0xff]
    %v380 = vld [vmem:[#allocation9 + $0x820] sm:$0xff]
    %v381 = vld [vmem:[#allocation9 + $0x828] sm:$0xff]
    %v382 = vld [vmem:[#allocation9 + $0x830] sm:$0xff]
    %v383 = vld [vmem:[#allocation9 + $0x838] sm:$0xff]
    %v384 = vld [vmem:[#allocation9 + $0x840] sm:$0xff]
    %v385 = vld [vmem:[#allocation9 + $0x848] sm:$0xff]
    %v386 = vld [vmem:[#allocation9 + $0x850] sm:$0xff]
    %v387 = vld [vmem:[#allocation9 + $0x858] sm:$0xff]
    %v388 = vld [vmem:[#allocation9 + $0x860] sm:$0xff]
    %v389 = vld [vmem:[#allocation9 + $0x868] sm:$0xff]
    %v390 = vld [vmem:[#allocation9 + $0x870] sm:$0xff]
    %v391 = vld [vmem:[#allocation9 + $0x878] sm:$0xff]
    %v392 = vld [vmem:[#allocation9 + $0x880] sm:$0xff]
    %v393 = vld [vmem:[#allocation9 + $0x888] sm:$0xff]
    %v394 = vld [vmem:[#allocation9 + $0x890] sm:$0xff]
    %v395 = vld [vmem:[#allocation9 + $0x898] sm:$0xff]
    %v396 = vld [vmem:[#allocation9 + $0x8a0] sm:$0xff]
    %v397 = vld [vmem:[#allocation9 + $0x8a8] sm:$0xff]
    %v398 = vld [vmem:[#allocation9 + $0x8b0] sm:$0xff]
    %v399 = vld [vmem:[#allocation9 + $0x8b8] sm:$0xff]
    %v400 = vld [vmem:[#allocation9 + $0x8c0] sm:$0xff]
    %v401 = vld [vmem:[#allocation9 + $0x8c8] sm:$0xff]
    %v402 = vld [vmem:[#allocation9 + $0x8d0] sm:$0xff]
    %v403 = vld [vmem:[#allocation9 + $0x8d8] sm:$0xff]
    %v404 = vld [vmem:[#allocation9 + $0x8e0] sm:$0xff]
    %v405 = vld [vmem:[#allocation9 + $0x8e8] sm:$0xff]
    %v406 = vld [vmem:[#allocation9 + $0x8f0] sm:$0xff]
    %v407 = vld [vmem:[#allocation9 + $0x8f8] sm:$0xff]
    %v408 = vld [vmem:[#allocation9 + $0x900] sm:$0xff]
    %v409 = vld [vmem:[#allocation9 + $0x908] sm:$0xff]
    %v410 = vld [vmem:[#allocation9 + $0x910] sm:$0xff]
    %v411 = vld [vmem:[#allocation9 + $0x918] sm:$0xff]
    %v412 = vld [vmem:[#allocation9 + $0x920] sm:$0xff]
    %v413 = vld [vmem:[#allocation9 + $0x928] sm:$0xff]
    %v414 = vld [vmem:[#allocation9 + $0x930] sm:$0xff]
    %v415 = vld [vmem:[#allocation9 + $0x938] sm:$0xff]
    %v416 = vld [vmem:[#allocation9 + $0x940] sm:$0xff]
    %v417 = vld [vmem:[#allocation9 + $0x948] sm:$0xff]
    %v418 = vld [vmem:[#allocation9 + $0x950] sm:$0xff]
    %v419 = vld [vmem:[#allocation9 + $0x958] sm:$0xff]
    %v420 = vld [vmem:[#allocation9 + $0x960] sm:$0xff]
    %v421 = vld [vmem:[#allocation9 + $0x968] sm:$0xff]
    %v422 = vld [vmem:[#allocation9 + $0x970] sm:$0xff]
    %v423 = vld [vmem:[#allocation9 + $0x978] sm:$0xff]
    %v424 = vld [vmem:[#allocation9 + $0x980] sm:$0xff]
    %v425 = vld [vmem:[#allocation9 + $0x988] sm:$0xff]
    %v426 = vld [vmem:[#allocation9 + $0x990] sm:$0xff]
    %v427 = vld [vmem:[#allocation9 + $0x998] sm:$0xff]
    %v428 = vld [vmem:[#allocation9 + $0x9a0] sm:$0xff]
    %v429 = vld [vmem:[#allocation9 + $0x9a8] sm:$0xff]
    %v430 = vld [vmem:[#allocation9 + $0x9b0] sm:$0xff]
    %v431 = vld [vmem:[#allocation9 + $0x9b8] sm:$0xff]
    %v432 = vld [vmem:[#allocation9 + $0x9c0] sm:$0xff]
    %v433 = vld [vmem:[#allocation9 + $0x9c8] sm:$0xff]
    %v434 = vld [vmem:[#allocation9 + $0x9d0] sm:$0xff]
    %v435 = vld [vmem:[#allocation9 + $0x9d8] sm:$0xff]
    %v436 = vld [vmem:[#allocation9 + $0x9e0] sm:$0xff]
    %v437 = vld [vmem:[#allocation9 + $0x9e8] sm:$0xff]
    %v438 = vld [vmem:[#allocation9 + $0x9f0] sm:$0xff]
    %v439 = vld [vmem:[#allocation9 + $0x9f8] sm:$0xff]
    %v440 = vld [vmem:[#allocation9 + $0xa00] sm:$0xff]
    %v441 = vld [vmem:[#allocation9 + $0xa08] sm:$0xff]
    %v442 = vld [vmem:[#allocation9 + $0xa10] sm:$0xff]
    %v443 = vld [vmem:[#allocation9 + $0xa18] sm:$0xff]
    %v444 = vld [vmem:[#allocation9 + $0xa20] sm:$0xff]
    %v445 = vld [vmem:[#allocation9 + $0xa28] sm:$0xff]
    %v446 = vld [vmem:[#allocation9 + $0xa30] sm:$0xff]
    %v447 = vld [vmem:[#allocation9 + $0xa38] sm:$0xff]
    %v448 = vld [vmem:[#allocation9 + $0xa40] sm:$0xff]
    %v449 = vld [vmem:[#allocation9 + $0xa48] sm:$0xff]
    %v450 = vld [vmem:[#allocation9 + $0xa50] sm:$0xff]
    %v451 = vld [vmem:[#allocation9 + $0xa58] sm:$0xff]
    %v452 = vld [vmem:[#allocation9 + $0xa60] sm:$0xff]
    %v453 = vld [vmem:[#allocation9 + $0xa68] sm:$0xff]
    %v454 = vld [vmem:[#allocation9 + $0xa70] sm:$0xff]
    %v455 = vld [vmem:[#allocation9 + $0xa78] sm:$0xff]
    %v456 = vld [vmem:[#allocation9 + $0xa80] sm:$0xff]
    %v457 = vld [vmem:[#allocation9 + $0xa88] sm:$0xff]
    %v458 = vld [vmem:[#allocation9 + $0xa90] sm:$0xff]
    %v459 = vld [vmem:[#allocation9 + $0xa98] sm:$0xff]
    %v460 = vld [vmem:[#allocation9 + $0xaa0] sm:$0xff]
    %v461 = vld [vmem:[#allocation9 + $0xaa8] sm:$0xff]
    %v462 = vld [vmem:[#allocation9 + $0xab0] sm:$0xff]
    %v463 = vld [vmem:[#allocation9 + $0xab8] sm:$0xff]
    %v464 = vld [vmem:[#allocation9 + $0xac0] sm:$0xff]
    %v465 = vld [vmem:[#allocation9 + $0xac8] sm:$0xff]
    %v466 = vld [vmem:[#allocation9 + $0xad0] sm:$0xff]
    %v467 = vld [vmem:[#allocation9 + $0xad8] sm:$0xff]
    %v468 = vld [vmem:[#allocation9 + $0xae0] sm:$0xff]
    %v469 = vld [vmem:[#allocation9 + $0xae8] sm:$0xff]
    %v470 = vld [vmem:[#allocation9 + $0xaf0] sm:$0xff]
    %v471 = vld [vmem:[#allocation9 + $0xaf8] sm:$0xff]
    %v472 = vld [vmem:[#allocation9 + $0xb00] sm:$0xff]
    %v473 = vld [vmem:[#allocation9 + $0xb08] sm:$0xff]
    %v474 = vld [vmem:[#allocation9 + $0xb10] sm:$0xff]
    %v475 = vld [vmem:[#allocation9 + $0xb18] sm:$0xff]
    %v476 = vld [vmem:[#allocation9 + $0xb20] sm:$0xff]
    %v477 = vld [vmem:[#allocation9 + $0xb28] sm:$0xff]
    %v478 = vld [vmem:[#allocation9 + $0xb30] sm:$0xff]
    %v479 = vld [vmem:[#allocation9 + $0xb38] sm:$0xff]
    %v480 = vld [vmem:[#allocation9 + $0xb40] sm:$0xff]
    %v481 = vld [vmem:[#allocation9 + $0xb48] sm:$0xff]
    %v482 = vld [vmem:[#allocation9 + $0xb50] sm:$0xff]
    %v483 = vld [vmem:[#allocation9 + $0xb58] sm:$0xff]
    %v484 = vld [vmem:[#allocation9 + $0xb60] sm:$0xff]
    %v485 = vld [vmem:[#allocation9 + $0xb68] sm:$0xff]
    %v486 = vld [vmem:[#allocation9 + $0xb70] sm:$0xff]
    %v487 = vld [vmem:[#allocation9 + $0xb78] sm:$0xff]
    %v488 = vld [vmem:[#allocation9 + $0xb80] sm:$0xff]
    %v489 = vld [vmem:[#allocation9 + $0xb88] sm:$0xff]
    %v490 = vld [vmem:[#allocation9 + $0xb90] sm:$0xff]
    %v491 = vld [vmem:[#allocation9 + $0xb98] sm:$0xff]
    %v492 = vld [vmem:[#allocation9 + $0xba0] sm:$0xff]
    %v493 = vld [vmem:[#allocation9 + $0xba8] sm:$0xff]
    %v494 = vld [vmem:[#allocation9 + $0xbb0] sm:$0xff]
    %v495 = vld [vmem:[#allocation9 + $0xbb8] sm:$0xff]
    %v496 = vld [vmem:[#allocation9 + $0xbc0] sm:$0xff]
    %v497 = vld [vmem:[#allocation9 + $0xbc8] sm:$0xff]
    %v498 = vld [vmem:[#allocation9 + $0xbd0] sm:$0xff]
    %v499 = vld [vmem:[#allocation9 + $0xbd8] sm:$0xff]
    %v500 = vld [vmem:[#allocation9 + $0xbe0] sm:$0xff]
    %v501 = vld [vmem:[#allocation9 + $0xbe8] sm:$0xff]
    %v502 = vld [vmem:[#allocation9 + $0xbf0] sm:$0xff]
    %v503 = vld [vmem:[#allocation9 + $0xbf8] sm:$0xff]
    %v504 = vld [vmem:[#allocation9 + $0xc00] sm:$0xff]
    %v505 = vld [vmem:[#allocation9 + $0xc08] sm:$0xff]
    %v506 = vld [vmem:[#allocation9 + $0xc10] sm:$0xff]
    %v507 = vld [vmem:[#allocation9 + $0xc18] sm:$0xff]
    %v508 = vld [vmem:[#allocation9 + $0xc20] sm:$0xff]
    %v509 = vld [vmem:[#allocation9 + $0xc28] sm:$0xff]
    %v510 = vld [vmem:[#allocation9 + $0xc30] sm:$0xff]
    %v511 = vld [vmem:[#allocation9 + $0xc38] sm:$0xff]
    %v512 = vld [vmem:[#allocation9 + $0xc40] sm:$0xff]
    %v513 = vld [vmem:[#allocation9 + $0xc48] sm:$0xff]
    %v514 = vld [vmem:[#allocation9 + $0xc50] sm:$0xff]
    %v515 = vld [vmem:[#allocation9 + $0xc58] sm:$0xff]
    %v516 = vld [vmem:[#allocation9 + $0xc60] sm:$0xff]
    %v517 = vld [vmem:[#allocation9 + $0xc68] sm:$0xff]
    %v518 = vld [vmem:[#allocation9 + $0xc70] sm:$0xff]
    %v519 = vld [vmem:[#allocation9 + $0xc78] sm:$0xff]
    %v520 = vld [vmem:[#allocation9 + $0xc80] sm:$0xff]
    %v521 = vld [vmem:[#allocation9 + $0xc88] sm:$0xff]
    %v522 = vld [vmem:[#allocation9 + $0xc90] sm:$0xff]
    %v523 = vld [vmem:[#allocation9 + $0xc98] sm:$0xff]
    %v524 = vld [vmem:[#allocation9 + $0xca0] sm:$0xff]
    %v525 = vld [vmem:[#allocation9 + $0xca8] sm:$0xff]
    %v526 = vld [vmem:[#allocation9 + $0xcb0] sm:$0xff]
    %v527 = vld [vmem:[#allocation9 + $0xcb8] sm:$0xff]
    %v528 = vld [vmem:[#allocation9 + $0xcc0] sm:$0xff]
    %v529 = vld [vmem:[#allocation9 + $0xcc8] sm:$0xff]
    %v530 = vld [vmem:[#allocation9 + $0xcd0] sm:$0xff]
    %v531 = vld [vmem:[#allocation9 + $0xcd8] sm:$0xff]
    %v532 = vld [vmem:[#allocation9 + $0xce0] sm:$0xff]
    %v533 = vld [vmem:[#allocation9 + $0xce8] sm:$0xff]
    %v534 = vld [vmem:[#allocation9 + $0xcf0] sm:$0xff]
    %v535 = vld [vmem:[#allocation9 + $0xcf8] sm:$0xff]
    %v536 = vld [vmem:[#allocation9 + $0xd00] sm:$0xff]
    %v537 = vld [vmem:[#allocation9 + $0xd08] sm:$0xff]
    %v538 = vld [vmem:[#allocation9 + $0xd10] sm:$0xff]
    %v539 = vld [vmem:[#allocation9 + $0xd18] sm:$0xff]
    %v540 = vld [vmem:[#allocation9 + $0xd20] sm:$0xff]
    %v541 = vld [vmem:[#allocation9 + $0xd28] sm:$0xff]
    %v542 = vld [vmem:[#allocation9 + $0xd30] sm:$0xff]
    %v543 = vld [vmem:[#allocation9 + $0xd38] sm:$0xff]
    %v544 = vld [vmem:[#allocation9 + $0xd40] sm:$0xff]
    %v545 = vld [vmem:[#allocation9 + $0xd48] sm:$0xff]
    %v546 = vld [vmem:[#allocation9 + $0xd50] sm:$0xff]
    %v547 = vld [vmem:[#allocation9 + $0xd58] sm:$0xff]
    %v548 = vld [vmem:[#allocation9 + $0xd60] sm:$0xff]
    %v549 = vld [vmem:[#allocation9 + $0xd68] sm:$0xff]
    %v550 = vld [vmem:[#allocation9 + $0xd70] sm:$0xff]
    %v551 = vld [vmem:[#allocation9 + $0xd78] sm:$0xff]
    %v552 = vld [vmem:[#allocation9 + $0xd80] sm:$0xff]
    %v553 = vld [vmem:[#allocation9 + $0xd88] sm:$0xff]
    %v554 = vld [vmem:[#allocation9 + $0xd90] sm:$0xff]
    %v555 = vld [vmem:[#allocation9 + $0xd98] sm:$0xff]
    %v556 = vld [vmem:[#allocation9 + $0xda0] sm:$0xff]
    %v557 = vld [vmem:[#allocation9 + $0xda8] sm:$0xff]
    %v558 = vld [vmem:[#allocation9 + $0xdb0] sm:$0xff]
    %v559 = vld [vmem:[#allocation9 + $0xdb8] sm:$0xff]
    %v560 = vld [vmem:[#allocation9 + $0xdc0] sm:$0xff]
    %v561 = vld [vmem:[#allocation9 + $0xdc8] sm:$0xff]
    %v562 = vld [vmem:[#allocation9 + $0xdd0] sm:$0xff]
    %v563 = vld [vmem:[#allocation9 + $0xdd8] sm:$0xff]
    %v564 = vld [vmem:[#allocation9 + $0xde0] sm:$0xff]
    %v565 = vld [vmem:[#allocation9 + $0xde8] sm:$0xff]
    %v566 = vld [vmem:[#allocation9 + $0xdf0] sm:$0xff]
    %v567 = vld [vmem:[#allocation9 + $0xdf8] sm:$0xff]
    %v568 = vld [vmem:[#allocation9 + $0xe00] sm:$0xff]
    %v569 = vld [vmem:[#allocation9 + $0xe08] sm:$0xff]
    %v570 = vld [vmem:[#allocation9 + $0xe10] sm:$0xff]
    %v571 = vld [vmem:[#allocation9 + $0xe18] sm:$0xff]
    %v572 = vld [vmem:[#allocation9 + $0xe20] sm:$0xff]
    %v573 = vld [vmem:[#allocation9 + $0xe28] sm:$0xff]
    %v574 = vld [vmem:[#allocation9 + $0xe30] sm:$0xff]
    %v575 = vld [vmem:[#allocation9 + $0xe38] sm:$0xff]
    %v576 = vld [vmem:[#allocation9 + $0xe40] sm:$0xff]
    %v577 = vld [vmem:[#allocation9 + $0xe48] sm:$0xff]
    %v578 = vld [vmem:[#allocation9 + $0xe50] sm:$0xff]
    %v579 = vld [vmem:[#allocation9 + $0xe58] sm:$0xff]
    %v580 = vld [vmem:[#allocation9 + $0xe60] sm:$0xff]
    %v581 = vld [vmem:[#allocation9 + $0xe68] sm:$0xff]
    %v582 = vld [vmem:[#allocation9 + $0xe70] sm:$0xff]
    %v583 = vld [vmem:[#allocation9 + $0xe78] sm:$0xff]
    %v584 = vld [vmem:[#allocation9 + $0xe80] sm:$0xff]
    %v585 = vld [vmem:[#allocation9 + $0xe88] sm:$0xff]
    %v586 = vld [vmem:[#allocation9 + $0xe90] sm:$0xff]
    %v587 = vld [vmem:[#allocation9 + $0xe98] sm:$0xff]
    %v588 = vld [vmem:[#allocation9 + $0xea0] sm:$0xff]
    %v589 = vld [vmem:[#allocation9 + $0xea8] sm:$0xff]
    %v590 = vld [vmem:[#allocation9 + $0xeb0] sm:$0xff]
    %v591 = vld [vmem:[#allocation9 + $0xeb8] sm:$0xff]
    %v592 = vld [vmem:[#allocation9 + $0xec0] sm:$0xff]
    %v593 = vld [vmem:[#allocation9 + $0xec8] sm:$0xff]
    %v594 = vld [vmem:[#allocation9 + $0xed0] sm:$0xff]
    %v595 = vld [vmem:[#allocation9 + $0xed8] sm:$0xff]
    %v596 = vld [vmem:[#allocation9 + $0xee0] sm:$0xff]
    %v597 = vld [vmem:[#allocation9 + $0xee8] sm:$0xff]
    %v598 = vld [vmem:[#allocation9 + $0xef0] sm:$0xff]
    %v599 = vld [vmem:[#allocation9 + $0xef8] sm:$0xff]
    %v600 = vld [vmem:[#allocation9 + $0xf00] sm:$0xff]
    %v601 = vld [vmem:[#allocation9 + $0xf08] sm:$0xff]
    %v602 = vld [vmem:[#allocation9 + $0xf10] sm:$0xff]
    %v603 = vld [vmem:[#allocation9 + $0xf18] sm:$0xff]
    %v604 = vld [vmem:[#allocation9 + $0xf20] sm:$0xff]
    %v605 = vld [vmem:[#allocation9 + $0xf28] sm:$0xff]
    %v606 = vld [vmem:[#allocation9 + $0xf30] sm:$0xff]
    %v607 = vld [vmem:[#allocation9 + $0xf38] sm:$0xff]
    %v608 = vld [vmem:[#allocation9 + $0xf40] sm:$0xff]
    %v609 = vld [vmem:[#allocation9 + $0xf48] sm:$0xff]
    %v610 = vld [vmem:[#allocation9 + $0xf50] sm:$0xff]
    %v611 = vld [vmem:[#allocation9 + $0xf58] sm:$0xff]
    %v612 = vld [vmem:[#allocation9 + $0xf60] sm:$0xff]
    %v613 = vld [vmem:[#allocation9 + $0xf68] sm:$0xff]
    %v614 = vld [vmem:[#allocation9 + $0xf70] sm:$0xff]
    %v615 = vld [vmem:[#allocation9 + $0xf78] sm:$0xff]
    %v616 = vld [vmem:[#allocation9 + $0xf80] sm:$0xff]
    %v617 = vld [vmem:[#allocation9 + $0xf88] sm:$0xff]
    %v618 = vld [vmem:[#allocation9 + $0xf90] sm:$0xff]
    %v619 = vld [vmem:[#allocation9 + $0xf98] sm:$0xff]
    %v620 = vld [vmem:[#allocation9 + $0xfa0] sm:$0xff]
    %v621 = vld [vmem:[#allocation9 + $0xfa8] sm:$0xff]
    %v622 = vld [vmem:[#allocation9 + $0xfb0] sm:$0xff]
    %v623 = vld [vmem:[#allocation9 + $0xfb8] sm:$0xff]
    %v624 = vld [vmem:[#allocation9 + $0xfc0] sm:$0xff]
    %v625 = vld [vmem:[#allocation9 + $0xfc8] sm:$0xff]
    %v626 = vld [vmem:[#allocation9 + $0xfd0] sm:$0xff]
    %v627 = vld [vmem:[#allocation9 + $0xfd8] sm:$0xff]
    %v628 = vld [vmem:[#allocation9 + $0xfe0] sm:$0xff]
    %v629 = vld [vmem:[#allocation9 + $0xfe8] sm:$0xff]
    %v630 = vld [vmem:[#allocation9 + $0xff0] sm:$0xff]
    %v631 = vld [vmem:[#allocation9 + $0xff8] sm:$0xff]
    %v632 = vld [vmem:[#allocation9 + $0x1000] sm:$0xff]
    %v633 = vld [vmem:[#allocation9 + $0x1008] sm:$0xff]
    %v634 = vld [vmem:[#allocation9 + $0x1010] sm:$0xff]
    %v635 = vld [vmem:[#allocation9 + $0x1018] sm:$0xff]
    %v636 = vld [vmem:[#allocation9 + $0x1020] sm:$0xff]
    %v637 = vld [vmem:[#allocation9 + $0x1028] sm:$0xff]
    %v638 = vld [vmem:[#allocation9 + $0x1030] sm:$0xff]
    %v639 = vld [vmem:[#allocation9 + $0x1038] sm:$0xff]
    %v640 = vld [vmem:[#allocation9 + $0x1040] sm:$0xff]
    %v641 = vld [vmem:[#allocation9 + $0x1048] sm:$0xff]
    %v642 = vld [vmem:[#allocation9 + $0x1050] sm:$0xff]
    %v643 = vld [vmem:[#allocation9 + $0x1058] sm:$0xff]
    %v644 = vld [vmem:[#allocation9 + $0x1060] sm:$0xff]
    %v645 = vld [vmem:[#allocation9 + $0x1068] sm:$0xff]
    %v646 = vld [vmem:[#allocation9 + $0x1070] sm:$0xff]
    %v647 = vld [vmem:[#allocation9 + $0x1078] sm:$0xff]
    %v648 = vld [vmem:[#allocation9 + $0x1080] sm:$0xff]
    %v649 = vld [vmem:[#allocation9 + $0x1088] sm:$0xff]
    %v650 = vld [vmem:[#allocation9 + $0x1090] sm:$0xff]
    %v651 = vld [vmem:[#allocation9 + $0x1098] sm:$0xff]
    %v652 = vld [vmem:[#allocation9 + $0x10a0] sm:$0xff]
    %v653 = vld [vmem:[#allocation9 + $0x10a8] sm:$0xff]
    %v654 = vld [vmem:[#allocation9 + $0x10b0] sm:$0xff]
    %v655 = vld [vmem:[#allocation9 + $0x10b8] sm:$0xff]
    %v656 = vld [vmem:[#allocation9 + $0x10c0] sm:$0xff]
    %v657 = vld [vmem:[#allocation9 + $0x10c8] sm:$0xff]
    %v658 = vld [vmem:[#allocation9 + $0x10d0] sm:$0xff]
    %v659 = vld [vmem:[#allocation9 + $0x10d8] sm:$0xff]
    %v660 = vld [vmem:[#allocation9 + $0x10e0] sm:$0xff]
    %v661 = vld [vmem:[#allocation9 + $0x10e8] sm:$0xff]
    %v662 = vld [vmem:[#allocation9 + $0x10f0] sm:$0xff]
    %v663 = vld [vmem:[#allocation9 + $0x10f8] sm:$0xff]
    %v664 = vld [vmem:[#allocation9 + $0x1100] sm:$0xff]
    %v665 = vld [vmem:[#allocation9 + $0x1108] sm:$0xff]
    %v666 = vld [vmem:[#allocation9 + $0x1110] sm:$0xff]
    %v667 = vld [vmem:[#allocation9 + $0x1118] sm:$0xff]
    %v668 = vld [vmem:[#allocation9 + $0x1120] sm:$0xff]
    %v669 = vld [vmem:[#allocation9 + $0x1128] sm:$0xff]
    %v670 = vld [vmem:[#allocation9 + $0x1130] sm:$0xff]
    %v671 = vld [vmem:[#allocation9 + $0x1138] sm:$0xff]
    %v672 = vld [vmem:[#allocation9 + $0x1140] sm:$0xff]
    %v673 = vld [vmem:[#allocation9 + $0x1148] sm:$0xff]
    %v674 = vld [vmem:[#allocation9 + $0x1150] sm:$0xff]
    %v675 = vld [vmem:[#allocation9 + $0x1158] sm:$0xff]
    %v676 = vld [vmem:[#allocation9 + $0x1160] sm:$0xff]
    %v677 = vld [vmem:[#allocation9 + $0x1168] sm:$0xff]
    %v678 = vld [vmem:[#allocation9 + $0x1170] sm:$0xff]
    %v679 = vld [vmem:[#allocation9 + $0x1178] sm:$0xff]
    %v680 = vld [vmem:[#allocation9 + $0x1180] sm:$0xff]
    %v681 = vld [vmem:[#allocation9 + $0x1188] sm:$0xff]
    %v682 = vld [vmem:[#allocation9 + $0x1190] sm:$0xff]
    %v683 = vld [vmem:[#allocation9 + $0x1198] sm:$0xff]
    %v684 = vld [vmem:[#allocation9 + $0x11a0] sm:$0xff]
    %v685 = vld [vmem:[#allocation9 + $0x11a8] sm:$0xff]
    %v686 = vld [vmem:[#allocation9 + $0x11b0] sm:$0xff]
    %v687 = vld [vmem:[#allocation9 + $0x11b8] sm:$0xff]
    %v688 = vld [vmem:[#allocation9 + $0x11c0] sm:$0xff]
    %v689 = vld [vmem:[#allocation9 + $0x11c8] sm:$0xff]
    %v690 = vld [vmem:[#allocation9 + $0x11d0] sm:$0xff]
    %v691 = vld [vmem:[#allocation9 + $0x11d8] sm:$0xff]
    %v692 = vld [vmem:[#allocation9 + $0x11e0] sm:$0xff]
    %v693 = vld [vmem:[#allocation9 + $0x11e8] sm:$0xff]
    %v694 = vld [vmem:[#allocation9 + $0x11f0] sm:$0xff]
    %v695 = vld [vmem:[#allocation9 + $0x11f8] sm:$0xff]
    %v696 = vld [vmem:[#allocation10] sm:$0xff]
    %v697 = vld [vmem:[#allocation10 + $0x8] sm:$0xf]
    %v700 = vperm.slane %v696, 0
    %v701 = vperm.slane %v696, 1
    %v702 = vperm.slane %v696, 2
    %v703 = vperm.slane %v696, 3
    %v704 = vperm.slane %v696, 4
    %v705 = vperm.slane %v696, 5
    %v706 = vperm.slane %v696, 6
    %v707 = vperm.slane %v696, 7
    %v708 = vperm.slane %v697, 0
    %v709 = vperm.slane %v697, 1
    %v710 = vperm.slane %v697, 2
    %v711 = vperm.slane %v697, 3
    %v730 = vunpack.c.l.b16 %v114
    %v731 = vunpack.c.h.b16 %v114
    %v732 = vunpack.c.l.b16 %v115
    %v733 = vunpack.c.h.b16 %v115
    %v734 = vunpack.c.l.b16 %v116
    %v735 = vunpack.c.h.b16 %v116
    %v736 = vunpack.c.l.b16 %v117
    %v737 = vunpack.c.h.b16 %v117
    %v738 = vunpack.c.l.b16 %v118
    %v739 = vunpack.c.h.b16 %v118
    %v740 = vunpack.c.l.b16 %v119
    %v741 = vunpack.c.h.b16 %v119
    %v742 = vpack.c.b16 %v736, %v730
    %v743 = vpack.c.b16 %v737, %v731
    %v744 = vpack.c.b16 %v738, %v732
    %v745 = vpack.c.b16 %v739, %v733
    %v746 = vpack.c.b16 %v740, %v734
    %v747 = vpack.c.b16 %v741, %v735
    %v1330 = vunpack.c.l.b16 %v120
    %v1331 = vunpack.c.h.b16 %v120
    %v1332 = vunpack.c.l.b16 %v121
    %v1333 = vunpack.c.h.b16 %v121
    %v1334 = vunpack.c.l.b16 %v122
    %v1335 = vunpack.c.h.b16 %v122
    %v1336 = vunpack.c.l.b16 %v123
    %v1337 = vunpack.c.h.b16 %v123
    %v1338 = vunpack.c.l.b16 %v124
    %v1339 = vunpack.c.h.b16 %v124
    %v1340 = vunpack.c.l.b16 %v125
    %v1341 = vunpack.c.h.b16 %v125
    %v1342 = vunpack.c.l.b16 %v126
    %v1343 = vunpack.c.h.b16 %v126
    %v1344 = vunpack.c.l.b16 %v127
    %v1345 = vunpack.c.h.b16 %v127
    %v1346 = vunpack.c.l.b16 %v128
    %v1347 = vunpack.c.h.b16 %v128
    %v1348 = vunpack.c.l.b16 %v129
    %v1349 = vunpack.c.h.b16 %v129
    %v1350 = vunpack.c.l.b16 %v130
    %v1351 = vunpack.c.h.b16 %v130
    %v1352 = vunpack.c.l.b16 %v131
    %v1353 = vunpack.c.h.b16 %v131
    %v1354 = vunpack.c.l.b16 %v132
    %v1355 = vunpack.c.h.b16 %v132
    %v1356 = vunpack.c.l.b16 %v133
    %v1357 = vunpack.c.h.b16 %v133
    %v1358 = vunpack.c.l.b16 %v134
    %v1359 = vunpack.c.h.b16 %v134
    %v1360 = vunpack.c.l.b16 %v135
    %v1361 = vunpack.c.h.b16 %v135
    %v1362 = vunpack.c.l.b16 %v136
    %v1363 = vunpack.c.h.b16 %v136
    %v1364 = vunpack.c.l.b16 %v137
    %v1365 = vunpack.c.h.b16 %v137
    %v1366 = vunpack.c.l.b16 %v138
    %v1367 = vunpack.c.h.b16 %v138
    %v1368 = vunpack.c.l.b16 %v139
    %v1369 = vunpack.c.h.b16 %v139
    %v1370 = vunpack.c.l.b16 %v140
    %v1371 = vunpack.c.h.b16 %v140
    %v1372 = vunpack.c.l.b16 %v141
    %v1373 = vunpack.c.h.b16 %v141
    %v1374 = vunpack.c.l.b16 %v142
    %v1375 = vunpack.c.h.b16 %v142
    %v1376 = vunpack.c.l.b16 %v143
    %v1377 = vunpack.c.h.b16 %v143
    %v1378 = vunpack.c.l.b16 %v144
    %v1379 = vunpack.c.h.b16 %v144
    %v1380 = vunpack.c.l.b16 %v145
    %v1381 = vunpack.c.h.b16 %v145
    %v1382 = vunpack.c.l.b16 %v146
    %v1383 = vunpack.c.h.b16 %v146
    %v1384 = vunpack.c.l.b16 %v147
    %v1385 = vunpack.c.h.b16 %v147
    %v1386 = vunpack.c.l.b16 %v148
    %v1387 = vunpack.c.h.b16 %v148
    %v1388 = vunpack.c.l.b16 %v149
    %v1389 = vunpack.c.h.b16 %v149
    %v1390 = vunpack.c.l.b16 %v150
    %v1391 = vunpack.c.h.b16 %v150
    %v1392 = vunpack.c.l.b16 %v151
    %v1393 = vunpack.c.h.b16 %v151
    %v1394 = vunpack.c.l.b16 %v152
    %v1395 = vunpack.c.h.b16 %v152
    %v1396 = vunpack.c.l.b16 %v153
    %v1397 = vunpack.c.h.b16 %v153
    %v1398 = vunpack.c.l.b16 %v154
    %v1399 = vunpack.c.h.b16 %v154
    %v1400 = vunpack.c.l.b16 %v155
    %v1401 = vunpack.c.h.b16 %v155
    %v1402 = vunpack.c.l.b16 %v156
    %v1403 = vunpack.c.h.b16 %v156
    %v1404 = vunpack.c.l.b16 %v157
    %v1405 = vunpack.c.h.b16 %v157
    %v1406 = vunpack.c.l.b16 %v158
    %v1407 = vunpack.c.h.b16 %v158
    %v1408 = vunpack.c.l.b16 %v159
    %v1409 = vunpack.c.h.b16 %v159
    %v1410 = vunpack.c.l.b16 %v160
    %v1411 = vunpack.c.h.b16 %v160
    %v1412 = vunpack.c.l.b16 %v161
    %v1413 = vunpack.c.h.b16 %v161
    %v1414 = vunpack.c.l.b16 %v162
    %v1415 = vunpack.c.h.b16 %v162
    %v1416 = vunpack.c.l.b16 %v163
    %v1417 = vunpack.c.h.b16 %v163
    %v1418 = vunpack.c.l.b16 %v164
    %v1419 = vunpack.c.h.b16 %v164
    %v1420 = vunpack.c.l.b16 %v165
    %v1421 = vunpack.c.h.b16 %v165
    %v1422 = vunpack.c.l.b16 %v166
    %v1423 = vunpack.c.h.b16 %v166
    %v1424 = vunpack.c.l.b16 %v167
    %v1425 = vunpack.c.h.b16 %v167
    %v1426 = vunpack.c.l.b16 %v168
    %v1427 = vunpack.c.h.b16 %v168
    %v1428 = vunpack.c.l.b16 %v169
    %v1429 = vunpack.c.h.b16 %v169
    %v1430 = vunpack.c.l.b16 %v170
    %v1431 = vunpack.c.h.b16 %v170
    %v1432 = vunpack.c.l.b16 %v171
    %v1433 = vunpack.c.h.b16 %v171
    %v1434 = vunpack.c.l.b16 %v172
    %v1435 = vunpack.c.h.b16 %v172
    %v1436 = vunpack.c.l.b16 %v173
    %v1437 = vunpack.c.h.b16 %v173
    %v1438 = vunpack.c.l.b16 %v174
    %v1439 = vunpack.c.h.b16 %v174
    %v1440 = vunpack.c.l.b16 %v175
    %v1441 = vunpack.c.h.b16 %v175
    %v1442 = vunpack.c.l.b16 %v176
    %v1443 = vunpack.c.h.b16 %v176
    %v1444 = vunpack.c.l.b16 %v177
    %v1445 = vunpack.c.h.b16 %v177
    %v1446 = vunpack.c.l.b16 %v178
    %v1447 = vunpack.c.h.b16 %v178
    %v1448 = vunpack.c.l.b16 %v179
    %v1449 = vunpack.c.h.b16 %v179
    %v1450 = vunpack.c.l.b16 %v180
    %v1451 = vunpack.c.h.b16 %v180
    %v1452 = vunpack.c.l.b16 %v181
    %v1453 = vunpack.c.h.b16 %v181
    %v1454 = vunpack.c.l.b16 %v182
    %v1455 = vunpack.c.h.b16 %v182
    %v1456 = vunpack.c.l.b16 %v183
    %v1457 = vunpack.c.h.b16 %v183
    %v1458 = vunpack.c.l.b16 %v184
    %v1459 = vunpack.c.h.b16 %v184
    %v1460 = vunpack.c.l.b16 %v185
    %v1461 = vunpack.c.h.b16 %v185
    %v1462 = vunpack.c.l.b16 %v186
    %v1463 = vunpack.c.h.b16 %v186
    %v1464 = vunpack.c.l.b16 %v187
    %v1465 = vunpack.c.h.b16 %v187
    %v1466 = vunpack.c.l.b16 %v188
    %v1467 = vunpack.c.h.b16 %v188
    %v1468 = vunpack.c.l.b16 %v189
    %v1469 = vunpack.c.h.b16 %v189
    %v1470 = vunpack.c.l.b16 %v190
    %v1471 = vunpack.c.h.b16 %v190
    %v1472 = vunpack.c.l.b16 %v191
    %v1473 = vunpack.c.h.b16 %v191
    %v1474 = vunpack.c.l.b16 %v192
    %v1475 = vunpack.c.h.b16 %v192
    %v1476 = vunpack.c.l.b16 %v193
    %v1477 = vunpack.c.h.b16 %v193
    %v1478 = vunpack.c.l.b16 %v194
    %v1479 = vunpack.c.h.b16 %v194
    %v1480 = vunpack.c.l.b16 %v195
    %v1481 = vunpack.c.h.b16 %v195
    %v1482 = vunpack.c.l.b16 %v196
    %v1483 = vunpack.c.h.b16 %v196
    %v1484 = vunpack.c.l.b16 %v197
    %v1485 = vunpack.c.h.b16 %v197
    %v1486 = vunpack.c.l.b16 %v198
    %v1487 = vunpack.c.h.b16 %v198
    %v1488 = vunpack.c.l.b16 %v199
    %v1489 = vunpack.c.h.b16 %v199
    %v1490 = vunpack.c.l.b16 %v200
    %v1491 = vunpack.c.h.b16 %v200
    %v1492 = vunpack.c.l.b16 %v201
    %v1493 = vunpack.c.h.b16 %v201
    %v1494 = vunpack.c.l.b16 %v202
    %v1495 = vunpack.c.h.b16 %v202
    %v1496 = vunpack.c.l.b16 %v203
    %v1497 = vunpack.c.h.b16 %v203
    %v1498 = vunpack.c.l.b16 %v204
    %v1499 = vunpack.c.h.b16 %v204
    %v1500 = vunpack.c.l.b16 %v205
    %v1501 = vunpack.c.h.b16 %v205
    %v1502 = vunpack.c.l.b16 %v206
    %v1503 = vunpack.c.h.b16 %v206
    %v1504 = vunpack.c.l.b16 %v207
    %v1505 = vunpack.c.h.b16 %v207
    %v1506 = vunpack.c.l.b16 %v208
    %v1507 = vunpack.c.h.b16 %v208
    %v1508 = vunpack.c.l.b16 %v209
    %v1509 = vunpack.c.h.b16 %v209
    %v1510 = vunpack.c.l.b16 %v210
    %v1511 = vunpack.c.h.b16 %v210
    %v1512 = vunpack.c.l.b16 %v211
    %v1513 = vunpack.c.h.b16 %v211
    %v1514 = vunpack.c.l.b16 %v212
    %v1515 = vunpack.c.h.b16 %v212
    %v1516 = vunpack.c.l.b16 %v213
    %v1517 = vunpack.c.h.b16 %v213
    %v1518 = vunpack.c.l.b16 %v214
    %v1519 = vunpack.c.h.b16 %v214
    %v1520 = vunpack.c.l.b16 %v215
    %v1521 = vunpack.c.h.b16 %v215
    %v1522 = vunpack.c.l.b16 %v216
    %v1523 = vunpack.c.h.b16 %v216
    %v1524 = vunpack.c.l.b16 %v217
    %v1525 = vunpack.c.h.b16 %v217
    %v1526 = vunpack.c.l.b16 %v218
    %v1527 = vunpack.c.h.b16 %v218
    %v1528 = vunpack.c.l.b16 %v219
    %v1529 = vunpack.c.h.b16 %v219
    %v1530 = vunpack.c.l.b16 %v220
    %v1531 = vunpack.c.h.b16 %v220
    %v1532 = vunpack.c.l.b16 %v221
    %v1533 = vunpack.c.h.b16 %v221
    %v1534 = vunpack.c.l.b16 %v222
    %v1535 = vunpack.c.h.b16 %v222
    %v1536 = vunpack.c.l.b16 %v223
    %v1537 = vunpack.c.h.b16 %v223
    %v1538 = vunpack.c.l.b16 %v224
    %v1539 = vunpack.c.h.b16 %v224
    %v1540 = vunpack.c.l.b16 %v225
    %v1541 = vunpack.c.h.b16 %v225
    %v1542 = vunpack.c.l.b16 %v226
    %v1543 = vunpack.c.h.b16 %v226
    %v1544 = vunpack.c.l.b16 %v227
    %v1545 = vunpack.c.h.b16 %v227
    %v1546 = vunpack.c.l.b16 %v228
    %v1547 = vunpack.c.h.b16 %v228
    %v1548 = vunpack.c.l.b16 %v229
    %v1549 = vunpack.c.h.b16 %v229
    %v1550 = vunpack.c.l.b16 %v230
    %v1551 = vunpack.c.h.b16 %v230
    %v1552 = vunpack.c.l.b16 %v231
    %v1553 = vunpack.c.h.b16 %v231
    %v1554 = vunpack.c.l.b16 %v232
    %v1555 = vunpack.c.h.b16 %v232
    %v1556 = vunpack.c.l.b16 %v233
    %v1557 = vunpack.c.h.b16 %v233
    %v1558 = vunpack.c.l.b16 %v234
    %v1559 = vunpack.c.h.b16 %v234
    %v1560 = vunpack.c.l.b16 %v235
    %v1561 = vunpack.c.h.b16 %v235
    %v1562 = vunpack.c.l.b16 %v236
    %v1563 = vunpack.c.h.b16 %v236
    %v1564 = vunpack.c.l.b16 %v237
    %v1565 = vunpack.c.h.b16 %v237
    %v1566 = vunpack.c.l.b16 %v238
    %v1567 = vunpack.c.h.b16 %v238
    %v1568 = vunpack.c.l.b16 %v239
    %v1569 = vunpack.c.h.b16 %v239
    %v1570 = vunpack.c.l.b16 %v240
    %v1571 = vunpack.c.h.b16 %v240
    %v1572 = vunpack.c.l.b16 %v241
    %v1573 = vunpack.c.h.b16 %v241
    %v1574 = vunpack.c.l.b16 %v242
    %v1575 = vunpack.c.h.b16 %v242
    %v1576 = vunpack.c.l.b16 %v243
    %v1577 = vunpack.c.h.b16 %v243
    %v1578 = vunpack.c.l.b16 %v244
    %v1579 = vunpack.c.h.b16 %v244
    %v1580 = vunpack.c.l.b16 %v245
    %v1581 = vunpack.c.h.b16 %v245
    %v1582 = vunpack.c.l.b16 %v246
    %v1583 = vunpack.c.h.b16 %v246
    %v1584 = vunpack.c.l.b16 %v247
    %v1585 = vunpack.c.h.b16 %v247
    %v1586 = vunpack.c.l.b16 %v248
    %v1587 = vunpack.c.h.b16 %v248
    %v1588 = vunpack.c.l.b16 %v249
    %v1589 = vunpack.c.h.b16 %v249
    %v1590 = vunpack.c.l.b16 %v250
    %v1591 = vunpack.c.h.b16 %v250
    %v1592 = vunpack.c.l.b16 %v251
    %v1593 = vunpack.c.h.b16 %v251
    %v1594 = vunpack.c.l.b16 %v252
    %v1595 = vunpack.c.h.b16 %v252
    %v1596 = vunpack.c.l.b16 %v253
    %v1597 = vunpack.c.h.b16 %v253
    %v1598 = vunpack.c.l.b16 %v254
    %v1599 = vunpack.c.h.b16 %v254
    %v1600 = vunpack.c.l.b16 %v255
    %v1601 = vunpack.c.h.b16 %v255
    %v1602 = vunpack.c.l.b16 %v256
    %v1603 = vunpack.c.h.b16 %v256
    %v1604 = vunpack.c.l.b16 %v257
    %v1605 = vunpack.c.h.b16 %v257
    %v1606 = vunpack.c.l.b16 %v258
    %v1607 = vunpack.c.h.b16 %v258
    %v1608 = vunpack.c.l.b16 %v259
    %v1609 = vunpack.c.h.b16 %v259
    %v1610 = vunpack.c.l.b16 %v260
    %v1611 = vunpack.c.h.b16 %v260
    %v1612 = vunpack.c.l.b16 %v261
    %v1613 = vunpack.c.h.b16 %v261
    %v1614 = vunpack.c.l.b16 %v262
    %v1615 = vunpack.c.h.b16 %v262
    %v1616 = vunpack.c.l.b16 %v263
    %v1617 = vunpack.c.h.b16 %v263
    %v1618 = vunpack.c.l.b16 %v264
    %v1619 = vunpack.c.h.b16 %v264
    %v1620 = vunpack.c.l.b16 %v265
    %v1621 = vunpack.c.h.b16 %v265
    %v1622 = vunpack.c.l.b16 %v266
    %v1623 = vunpack.c.h.b16 %v266
    %v1624 = vunpack.c.l.b16 %v267
    %v1625 = vunpack.c.h.b16 %v267
    %v1626 = vunpack.c.l.b16 %v268
    %v1627 = vunpack.c.h.b16 %v268
    %v1628 = vunpack.c.l.b16 %v269
    %v1629 = vunpack.c.h.b16 %v269
    %v1630 = vunpack.c.l.b16 %v270
    %v1631 = vunpack.c.h.b16 %v270
    %v1632 = vunpack.c.l.b16 %v271
    %v1633 = vunpack.c.h.b16 %v271
    %v1634 = vunpack.c.l.b16 %v272
    %v1635 = vunpack.c.h.b16 %v272
    %v1636 = vunpack.c.l.b16 %v273
    %v1637 = vunpack.c.h.b16 %v273
    %v1638 = vunpack.c.l.b16 %v274
    %v1639 = vunpack.c.h.b16 %v274
    %v1640 = vunpack.c.l.b16 %v275
    %v1641 = vunpack.c.h.b16 %v275
    %v1642 = vunpack.c.l.b16 %v276
    %v1643 = vunpack.c.h.b16 %v276
    %v1644 = vunpack.c.l.b16 %v277
    %v1645 = vunpack.c.h.b16 %v277
    %v1646 = vunpack.c.l.b16 %v278
    %v1647 = vunpack.c.h.b16 %v278
    %v1648 = vunpack.c.l.b16 %v279
    %v1649 = vunpack.c.h.b16 %v279
    %v1650 = vunpack.c.l.b16 %v280
    %v1651 = vunpack.c.h.b16 %v280
    %v1652 = vunpack.c.l.b16 %v281
    %v1653 = vunpack.c.h.b16 %v281
    %v1654 = vunpack.c.l.b16 %v282
    %v1655 = vunpack.c.h.b16 %v282
    %v1656 = vunpack.c.l.b16 %v283
    %v1657 = vunpack.c.h.b16 %v283
    %v1658 = vunpack.c.l.b16 %v284
    %v1659 = vunpack.c.h.b16 %v284
    %v1660 = vunpack.c.l.b16 %v285
    %v1661 = vunpack.c.h.b16 %v285
    %v1662 = vunpack.c.l.b16 %v286
    %v1663 = vunpack.c.h.b16 %v286
    %v1664 = vunpack.c.l.b16 %v287
    %v1665 = vunpack.c.h.b16 %v287
    %v1666 = vunpack.c.l.b16 %v288
    %v1667 = vunpack.c.h.b16 %v288
    %v1668 = vunpack.c.l.b16 %v289
    %v1669 = vunpack.c.h.b16 %v289
    %v1670 = vunpack.c.l.b16 %v290
    %v1671 = vunpack.c.h.b16 %v290
    %v1672 = vunpack.c.l.b16 %v291
    %v1673 = vunpack.c.h.b16 %v291
    %v1674 = vunpack.c.l.b16 %v292
    %v1675 = vunpack.c.h.b16 %v292
    %v1676 = vunpack.c.l.b16 %v293
    %v1677 = vunpack.c.h.b16 %v293
    %v1678 = vunpack.c.l.b16 %v294
    %v1679 = vunpack.c.h.b16 %v294
    %v1680 = vunpack.c.l.b16 %v295
    %v1681 = vunpack.c.h.b16 %v295
    %v1682 = vunpack.c.l.b16 %v296
    %v1683 = vunpack.c.h.b16 %v296
    %v1684 = vunpack.c.l.b16 %v297
    %v1685 = vunpack.c.h.b16 %v297
    %v1686 = vunpack.c.l.b16 %v298
    %v1687 = vunpack.c.h.b16 %v298
    %v1688 = vunpack.c.l.b16 %v299
    %v1689 = vunpack.c.h.b16 %v299
    %v1690 = vunpack.c.l.b16 %v300
    %v1691 = vunpack.c.h.b16 %v300
    %v1692 = vunpack.c.l.b16 %v301
    %v1693 = vunpack.c.h.b16 %v301
    %v1694 = vunpack.c.l.b16 %v302
    %v1695 = vunpack.c.h.b16 %v302
    %v1696 = vunpack.c.l.b16 %v303
    %v1697 = vunpack.c.h.b16 %v303
    %v1698 = vunpack.c.l.b16 %v304
    %v1699 = vunpack.c.h.b16 %v304
    %v1700 = vunpack.c.l.b16 %v305
    %v1701 = vunpack.c.h.b16 %v305
    %v1702 = vunpack.c.l.b16 %v306
    %v1703 = vunpack.c.h.b16 %v306
    %v1704 = vunpack.c.l.b16 %v307
    %v1705 = vunpack.c.h.b16 %v307
    %v1706 = vunpack.c.l.b16 %v308
    %v1707 = vunpack.c.h.b16 %v308
    %v1708 = vunpack.c.l.b16 %v309
    %v1709 = vunpack.c.h.b16 %v309
    %v1710 = vunpack.c.l.b16 %v310
    %v1711 = vunpack.c.h.b16 %v310
    %v1712 = vunpack.c.l.b16 %v311
    %v1713 = vunpack.c.h.b16 %v311
    %v1714 = vunpack.c.l.b16 %v312
    %v1715 = vunpack.c.h.b16 %v312
    %v1716 = vunpack.c.l.b16 %v313
    %v1717 = vunpack.c.h.b16 %v313
    %v1718 = vunpack.c.l.b16 %v314
    %v1719 = vunpack.c.h.b16 %v314
    %v1720 = vunpack.c.l.b16 %v315
    %v1721 = vunpack.c.h.b16 %v315
    %v1722 = vunpack.c.l.b16 %v316
    %v1723 = vunpack.c.h.b16 %v316
    %v1724 = vunpack.c.l.b16 %v317
    %v1725 = vunpack.c.h.b16 %v317
    %v1726 = vunpack.c.l.b16 %v318
    %v1727 = vunpack.c.h.b16 %v318
    %v1728 = vunpack.c.l.b16 %v319
    %v1729 = vunpack.c.h.b16 %v319
    %v1730 = vunpack.c.l.b16 %v320
    %v1731 = vunpack.c.h.b16 %v320
    %v1732 = vunpack.c.l.b16 %v321
    %v1733 = vunpack.c.h.b16 %v321
    %v1734 = vunpack.c.l.b16 %v322
    %v1735 = vunpack.c.h.b16 %v322
    %v1736 = vunpack.c.l.b16 %v323
    %v1737 = vunpack.c.h.b16 %v323
    %v1738 = vunpack.c.l.b16 %v324
    %v1739 = vunpack.c.h.b16 %v324
    %v1740 = vunpack.c.l.b16 %v325
    %v1741 = vunpack.c.h.b16 %v325
    %v1742 = vunpack.c.l.b16 %v326
    %v1743 = vunpack.c.h.b16 %v326
    %v1744 = vunpack.c.l.b16 %v327
    %v1745 = vunpack.c.h.b16 %v327
    %v1746 = vunpack.c.l.b16 %v328
    %v1747 = vunpack.c.h.b16 %v328
    %v1748 = vunpack.c.l.b16 %v329
    %v1749 = vunpack.c.h.b16 %v329
    %v1750 = vunpack.c.l.b16 %v330
    %v1751 = vunpack.c.h.b16 %v330
    %v1752 = vunpack.c.l.b16 %v331
    %v1753 = vunpack.c.h.b16 %v331
    %v1754 = vunpack.c.l.b16 %v332
    %v1755 = vunpack.c.h.b16 %v332
    %v1756 = vunpack.c.l.b16 %v333
    %v1757 = vunpack.c.h.b16 %v333
    %v1758 = vunpack.c.l.b16 %v334
    %v1759 = vunpack.c.h.b16 %v334
    %v1760 = vunpack.c.l.b16 %v335
    %v1761 = vunpack.c.h.b16 %v335
    %v1762 = vunpack.c.l.b16 %v336
    %v1763 = vunpack.c.h.b16 %v336
    %v1764 = vunpack.c.l.b16 %v337
    %v1765 = vunpack.c.h.b16 %v337
    %v1766 = vunpack.c.l.b16 %v338
    %v1767 = vunpack.c.h.b16 %v338
    %v1768 = vunpack.c.l.b16 %v339
    %v1769 = vunpack.c.h.b16 %v339
    %v1770 = vunpack.c.l.b16 %v340
    %v1771 = vunpack.c.h.b16 %v340
    %v1772 = vunpack.c.l.b16 %v341
    %v1773 = vunpack.c.h.b16 %v341
    %v1774 = vunpack.c.l.b16 %v342
    %v1775 = vunpack.c.h.b16 %v342
    %v1776 = vunpack.c.l.b16 %v343
    %v1777 = vunpack.c.h.b16 %v343
    %v1778 = vunpack.c.l.b16 %v344
    %v1779 = vunpack.c.h.b16 %v344
    %v1780 = vunpack.c.l.b16 %v345
    %v1781 = vunpack.c.h.b16 %v345
    %v1782 = vunpack.c.l.b16 %v346
    %v1783 = vunpack.c.h.b16 %v346
    %v1784 = vunpack.c.l.b16 %v347
    %v1785 = vunpack.c.h.b16 %v347
    %v1786 = vunpack.c.l.b16 %v348
    %v1787 = vunpack.c.h.b16 %v348
    %v1788 = vunpack.c.l.b16 %v349
    %v1789 = vunpack.c.h.b16 %v349
    %v1790 = vunpack.c.l.b16 %v350
    %v1791 = vunpack.c.h.b16 %v350
    %v1792 = vunpack.c.l.b16 %v351
    %v1793 = vunpack.c.h.b16 %v351
    %v1794 = vunpack.c.l.b16 %v352
    %v1795 = vunpack.c.h.b16 %v352
    %v1796 = vunpack.c.l.b16 %v353
    %v1797 = vunpack.c.h.b16 %v353
    %v1798 = vunpack.c.l.b16 %v354
    %v1799 = vunpack.c.h.b16 %v354
    %v1800 = vunpack.c.l.b16 %v355
    %v1801 = vunpack.c.h.b16 %v355
    %v1802 = vunpack.c.l.b16 %v356
    %v1803 = vunpack.c.h.b16 %v356
    %v1804 = vunpack.c.l.b16 %v357
    %v1805 = vunpack.c.h.b16 %v357
    %v1806 = vunpack.c.l.b16 %v358
    %v1807 = vunpack.c.h.b16 %v358
    %v1808 = vunpack.c.l.b16 %v359
    %v1809 = vunpack.c.h.b16 %v359
    %v1810 = vunpack.c.l.b16 %v360
    %v1811 = vunpack.c.h.b16 %v360
    %v1812 = vunpack.c.l.b16 %v361
    %v1813 = vunpack.c.h.b16 %v361
    %v1814 = vunpack.c.l.b16 %v362
    %v1815 = vunpack.c.h.b16 %v362
    %v1816 = vunpack.c.l.b16 %v363
    %v1817 = vunpack.c.h.b16 %v363
    %v1818 = vunpack.c.l.b16 %v364
    %v1819 = vunpack.c.h.b16 %v364
    %v1820 = vunpack.c.l.b16 %v365
    %v1821 = vunpack.c.h.b16 %v365
    %v1822 = vunpack.c.l.b16 %v366
    %v1823 = vunpack.c.h.b16 %v366
    %v1824 = vunpack.c.l.b16 %v367
    %v1825 = vunpack.c.h.b16 %v367
    %v1826 = vunpack.c.l.b16 %v368
    %v1827 = vunpack.c.h.b16 %v368
    %v1828 = vunpack.c.l.b16 %v369
    %v1829 = vunpack.c.h.b16 %v369
    %v1830 = vunpack.c.l.b16 %v370
    %v1831 = vunpack.c.h.b16 %v370
    %v1832 = vunpack.c.l.b16 %v371
    %v1833 = vunpack.c.h.b16 %v371
    %v1834 = vunpack.c.l.b16 %v372
    %v1835 = vunpack.c.h.b16 %v372
    %v1836 = vunpack.c.l.b16 %v373
    %v1837 = vunpack.c.h.b16 %v373
    %v1838 = vunpack.c.l.b16 %v374
    %v1839 = vunpack.c.h.b16 %v374
    %v1840 = vunpack.c.l.b16 %v375
    %v1841 = vunpack.c.h.b16 %v375
    %v1842 = vunpack.c.l.b16 %v376
    %v1843 = vunpack.c.h.b16 %v376
    %v1844 = vunpack.c.l.b16 %v377
    %v1845 = vunpack.c.h.b16 %v377
    %v1846 = vunpack.c.l.b16 %v378
    %v1847 = vunpack.c.h.b16 %v378
    %v1848 = vunpack.c.l.b16 %v379
    %v1849 = vunpack.c.h.b16 %v379
    %v1850 = vunpack.c.l.b16 %v380
    %v1851 = vunpack.c.h.b16 %v380
    %v1852 = vunpack.c.l.b16 %v381
    %v1853 = vunpack.c.h.b16 %v381
    %v1854 = vunpack.c.l.b16 %v382
    %v1855 = vunpack.c.h.b16 %v382
    %v1856 = vunpack.c.l.b16 %v383
    %v1857 = vunpack.c.h.b16 %v383
    %v1858 = vunpack.c.l.b16 %v384
    %v1859 = vunpack.c.h.b16 %v384
    %v1860 = vunpack.c.l.b16 %v385
    %v1861 = vunpack.c.h.b16 %v385
    %v1862 = vunpack.c.l.b16 %v386
    %v1863 = vunpack.c.h.b16 %v386
    %v1864 = vunpack.c.l.b16 %v387
    %v1865 = vunpack.c.h.b16 %v387
    %v1866 = vunpack.c.l.b16 %v388
    %v1867 = vunpack.c.h.b16 %v388
    %v1868 = vunpack.c.l.b16 %v389
    %v1869 = vunpack.c.h.b16 %v389
    %v1870 = vunpack.c.l.b16 %v390
    %v1871 = vunpack.c.h.b16 %v390
    %v1872 = vunpack.c.l.b16 %v391
    %v1873 = vunpack.c.h.b16 %v391
    %v1874 = vunpack.c.l.b16 %v392
    %v1875 = vunpack.c.h.b16 %v392
    %v1876 = vunpack.c.l.b16 %v393
    %v1877 = vunpack.c.h.b16 %v393
    %v1878 = vunpack.c.l.b16 %v394
    %v1879 = vunpack.c.h.b16 %v394
    %v1880 = vunpack.c.l.b16 %v395
    %v1881 = vunpack.c.h.b16 %v395
    %v1882 = vunpack.c.l.b16 %v396
    %v1883 = vunpack.c.h.b16 %v396
    %v1884 = vunpack.c.l.b16 %v397
    %v1885 = vunpack.c.h.b16 %v397
    %v1886 = vunpack.c.l.b16 %v398
    %v1887 = vunpack.c.h.b16 %v398
    %v1888 = vunpack.c.l.b16 %v399
    %v1889 = vunpack.c.h.b16 %v399
    %v1890 = vunpack.c.l.b16 %v400
    %v1891 = vunpack.c.h.b16 %v400
    %v1892 = vunpack.c.l.b16 %v401
    %v1893 = vunpack.c.h.b16 %v401
    %v1894 = vunpack.c.l.b16 %v402
    %v1895 = vunpack.c.h.b16 %v402
    %v1896 = vunpack.c.l.b16 %v403
    %v1897 = vunpack.c.h.b16 %v403
    %v1898 = vunpack.c.l.b16 %v404
    %v1899 = vunpack.c.h.b16 %v404
    %v1900 = vunpack.c.l.b16 %v405
    %v1901 = vunpack.c.h.b16 %v405
    %v1902 = vunpack.c.l.b16 %v406
    %v1903 = vunpack.c.h.b16 %v406
    %v1904 = vunpack.c.l.b16 %v407
    %v1905 = vunpack.c.h.b16 %v407
    %v1906 = vunpack.c.l.b16 %v408
    %v1907 = vunpack.c.h.b16 %v408
    %v1908 = vunpack.c.l.b16 %v409
    %v1909 = vunpack.c.h.b16 %v409
    %v1910 = vunpack.c.l.b16 %v410
    %v1911 = vunpack.c.h.b16 %v410
    %v1912 = vunpack.c.l.b16 %v411
    %v1913 = vunpack.c.h.b16 %v411
    %v1914 = vunpack.c.l.b16 %v412
    %v1915 = vunpack.c.h.b16 %v412
    %v1916 = vunpack.c.l.b16 %v413
    %v1917 = vunpack.c.h.b16 %v413
    %v1918 = vunpack.c.l.b16 %v414
    %v1919 = vunpack.c.h.b16 %v414
    %v1920 = vunpack.c.l.b16 %v415
    %v1921 = vunpack.c.h.b16 %v415
    %v1922 = vunpack.c.l.b16 %v416
    %v1923 = vunpack.c.h.b16 %v416
    %v1924 = vunpack.c.l.b16 %v417
    %v1925 = vunpack.c.h.b16 %v417
    %v1926 = vunpack.c.l.b16 %v418
    %v1927 = vunpack.c.h.b16 %v418
    %v1928 = vunpack.c.l.b16 %v419
    %v1929 = vunpack.c.h.b16 %v419
    %v1930 = vunpack.c.l.b16 %v420
    %v1931 = vunpack.c.h.b16 %v420
    %v1932 = vunpack.c.l.b16 %v421
    %v1933 = vunpack.c.h.b16 %v421
    %v1934 = vunpack.c.l.b16 %v422
    %v1935 = vunpack.c.h.b16 %v422
    %v1936 = vunpack.c.l.b16 %v423
    %v1937 = vunpack.c.h.b16 %v423
    %v1938 = vunpack.c.l.b16 %v424
    %v1939 = vunpack.c.h.b16 %v424
    %v1940 = vunpack.c.l.b16 %v425
    %v1941 = vunpack.c.h.b16 %v425
    %v1942 = vunpack.c.l.b16 %v426
    %v1943 = vunpack.c.h.b16 %v426
    %v1944 = vunpack.c.l.b16 %v427
    %v1945 = vunpack.c.h.b16 %v427
    %v1946 = vunpack.c.l.b16 %v428
    %v1947 = vunpack.c.h.b16 %v428
    %v1948 = vunpack.c.l.b16 %v429
    %v1949 = vunpack.c.h.b16 %v429
    %v1950 = vunpack.c.l.b16 %v430
    %v1951 = vunpack.c.h.b16 %v430
    %v1952 = vunpack.c.l.b16 %v431
    %v1953 = vunpack.c.h.b16 %v431
    %v1954 = vunpack.c.l.b16 %v432
    %v1955 = vunpack.c.h.b16 %v432
    %v1956 = vunpack.c.l.b16 %v433
    %v1957 = vunpack.c.h.b16 %v433
    %v1958 = vunpack.c.l.b16 %v434
    %v1959 = vunpack.c.h.b16 %v434
    %v1960 = vunpack.c.l.b16 %v435
    %v1961 = vunpack.c.h.b16 %v435
    %v1962 = vunpack.c.l.b16 %v436
    %v1963 = vunpack.c.h.b16 %v436
    %v1964 = vunpack.c.l.b16 %v437
    %v1965 = vunpack.c.h.b16 %v437
    %v1966 = vunpack.c.l.b16 %v438
    %v1967 = vunpack.c.h.b16 %v438
    %v1968 = vunpack.c.l.b16 %v439
    %v1969 = vunpack.c.h.b16 %v439
    %v1970 = vunpack.c.l.b16 %v440
    %v1971 = vunpack.c.h.b16 %v440
    %v1972 = vunpack.c.l.b16 %v441
    %v1973 = vunpack.c.h.b16 %v441
    %v1974 = vunpack.c.l.b16 %v442
    %v1975 = vunpack.c.h.b16 %v442
    %v1976 = vunpack.c.l.b16 %v443
    %v1977 = vunpack.c.h.b16 %v443
    %v1978 = vunpack.c.l.b16 %v444
    %v1979 = vunpack.c.h.b16 %v444
    %v1980 = vunpack.c.l.b16 %v445
    %v1981 = vunpack.c.h.b16 %v445
    %v1982 = vunpack.c.l.b16 %v446
    %v1983 = vunpack.c.h.b16 %v446
    %v1984 = vunpack.c.l.b16 %v447
    %v1985 = vunpack.c.h.b16 %v447
    %v1986 = vunpack.c.l.b16 %v448
    %v1987 = vunpack.c.h.b16 %v448
    %v1988 = vunpack.c.l.b16 %v449
    %v1989 = vunpack.c.h.b16 %v449
    %v1990 = vunpack.c.l.b16 %v450
    %v1991 = vunpack.c.h.b16 %v450
    %v1992 = vunpack.c.l.b16 %v451
    %v1993 = vunpack.c.h.b16 %v451
    %v1994 = vunpack.c.l.b16 %v452
    %v1995 = vunpack.c.h.b16 %v452
    %v1996 = vunpack.c.l.b16 %v453
    %v1997 = vunpack.c.h.b16 %v453
    %v1998 = vunpack.c.l.b16 %v454
    %v1999 = vunpack.c.h.b16 %v454
    %v2000 = vunpack.c.l.b16 %v455
    %v2001 = vunpack.c.h.b16 %v455
    %v2002 = vunpack.c.l.b16 %v456
    %v2003 = vunpack.c.h.b16 %v456
    %v2004 = vunpack.c.l.b16 %v457
    %v2005 = vunpack.c.h.b16 %v457
    %v2006 = vunpack.c.l.b16 %v458
    %v2007 = vunpack.c.h.b16 %v458
    %v2008 = vunpack.c.l.b16 %v459
    %v2009 = vunpack.c.h.b16 %v459
    %v2010 = vunpack.c.l.b16 %v460
    %v2011 = vunpack.c.h.b16 %v460
    %v2012 = vunpack.c.l.b16 %v461
    %v2013 = vunpack.c.h.b16 %v461
    %v2014 = vunpack.c.l.b16 %v462
    %v2015 = vunpack.c.h.b16 %v462
    %v2016 = vunpack.c.l.b16 %v463
    %v2017 = vunpack.c.h.b16 %v463
    %v2018 = vunpack.c.l.b16 %v464
    %v2019 = vunpack.c.h.b16 %v464
    %v2020 = vunpack.c.l.b16 %v465
    %v2021 = vunpack.c.h.b16 %v465
    %v2022 = vunpack.c.l.b16 %v466
    %v2023 = vunpack.c.h.b16 %v466
    %v2024 = vunpack.c.l.b16 %v467
    %v2025 = vunpack.c.h.b16 %v467
    %v2026 = vunpack.c.l.b16 %v468
    %v2027 = vunpack.c.h.b16 %v468
    %v2028 = vunpack.c.l.b16 %v469
    %v2029 = vunpack.c.h.b16 %v469
    %v2030 = vunpack.c.l.b16 %v470
    %v2031 = vunpack.c.h.b16 %v470
    %v2032 = vunpack.c.l.b16 %v471
    %v2033 = vunpack.c.h.b16 %v471
    %v2034 = vunpack.c.l.b16 %v472
    %v2035 = vunpack.c.h.b16 %v472
    %v2036 = vunpack.c.l.b16 %v473
    %v2037 = vunpack.c.h.b16 %v473
    %v2038 = vunpack.c.l.b16 %v474
    %v2039 = vunpack.c.h.b16 %v474
    %v2040 = vunpack.c.l.b16 %v475
    %v2041 = vunpack.c.h.b16 %v475
    %v2042 = vunpack.c.l.b16 %v476
    %v2043 = vunpack.c.h.b16 %v476
    %v2044 = vunpack.c.l.b16 %v477
    %v2045 = vunpack.c.h.b16 %v477
    %v2046 = vunpack.c.l.b16 %v478
    %v2047 = vunpack.c.h.b16 %v478
    %v2048 = vunpack.c.l.b16 %v479
    %v2049 = vunpack.c.h.b16 %v479
    %v2050 = vunpack.c.l.b16 %v480
    %v2051 = vunpack.c.h.b16 %v480
    %v2052 = vunpack.c.l.b16 %v481
    %v2053 = vunpack.c.h.b16 %v481
    %v2054 = vunpack.c.l.b16 %v482
    %v2055 = vunpack.c.h.b16 %v482
    %v2056 = vunpack.c.l.b16 %v483
    %v2057 = vunpack.c.h.b16 %v483
    %v2058 = vunpack.c.l.b16 %v484
    %v2059 = vunpack.c.h.b16 %v484
    %v2060 = vunpack.c.l.b16 %v485
    %v2061 = vunpack.c.h.b16 %v485
    %v2062 = vunpack.c.l.b16 %v486
    %v2063 = vunpack.c.h.b16 %v486
    %v2064 = vunpack.c.l.b16 %v487
    %v2065 = vunpack.c.h.b16 %v487
    %v2066 = vunpack.c.l.b16 %v488
    %v2067 = vunpack.c.h.b16 %v488
    %v2068 = vunpack.c.l.b16 %v489
    %v2069 = vunpack.c.h.b16 %v489
    %v2070 = vunpack.c.l.b16 %v490
    %v2071 = vunpack.c.h.b16 %v490
    %v2072 = vunpack.c.l.b16 %v491
    %v2073 = vunpack.c.h.b16 %v491
    %v2074 = vunpack.c.l.b16 %v492
    %v2075 = vunpack.c.h.b16 %v492
    %v2076 = vunpack.c.l.b16 %v493
    %v2077 = vunpack.c.h.b16 %v493
    %v2078 = vunpack.c.l.b16 %v494
    %v2079 = vunpack.c.h.b16 %v494
    %v2080 = vunpack.c.l.b16 %v495
    %v2081 = vunpack.c.h.b16 %v495
    %v2082 = vunpack.c.l.b16 %v496
    %v2083 = vunpack.c.h.b16 %v496
    %v2084 = vunpack.c.l.b16 %v497
    %v2085 = vunpack.c.h.b16 %v497
    %v2086 = vunpack.c.l.b16 %v498
    %v2087 = vunpack.c.h.b16 %v498
    %v2088 = vunpack.c.l.b16 %v499
    %v2089 = vunpack.c.h.b16 %v499
    %v2090 = vunpack.c.l.b16 %v500
    %v2091 = vunpack.c.h.b16 %v500
    %v2092 = vunpack.c.l.b16 %v501
    %v2093 = vunpack.c.h.b16 %v501
    %v2094 = vunpack.c.l.b16 %v502
    %v2095 = vunpack.c.h.b16 %v502
    %v2096 = vunpack.c.l.b16 %v503
    %v2097 = vunpack.c.h.b16 %v503
    %v2098 = vunpack.c.l.b16 %v504
    %v2099 = vunpack.c.h.b16 %v504
    %v2100 = vunpack.c.l.b16 %v505
    %v2101 = vunpack.c.h.b16 %v505
    %v2102 = vunpack.c.l.b16 %v506
    %v2103 = vunpack.c.h.b16 %v506
    %v2104 = vunpack.c.l.b16 %v507
    %v2105 = vunpack.c.h.b16 %v507
    %v2106 = vunpack.c.l.b16 %v508
    %v2107 = vunpack.c.h.b16 %v508
    %v2108 = vunpack.c.l.b16 %v509
    %v2109 = vunpack.c.h.b16 %v509
    %v2110 = vunpack.c.l.b16 %v510
    %v2111 = vunpack.c.h.b16 %v510
    %v2112 = vunpack.c.l.b16 %v511
    %v2113 = vunpack.c.h.b16 %v511
    %v2114 = vunpack.c.l.b16 %v512
    %v2115 = vunpack.c.h.b16 %v512
    %v2116 = vunpack.c.l.b16 %v513
    %v2117 = vunpack.c.h.b16 %v513
    %v2118 = vunpack.c.l.b16 %v514
    %v2119 = vunpack.c.h.b16 %v514
    %v2120 = vunpack.c.l.b16 %v515
    %v2121 = vunpack.c.h.b16 %v515
    %v2122 = vunpack.c.l.b16 %v516
    %v2123 = vunpack.c.h.b16 %v516
    %v2124 = vunpack.c.l.b16 %v517
    %v2125 = vunpack.c.h.b16 %v517
    %v2126 = vunpack.c.l.b16 %v518
    %v2127 = vunpack.c.h.b16 %v518
    %v2128 = vunpack.c.l.b16 %v519
    %v2129 = vunpack.c.h.b16 %v519
    %v2130 = vunpack.c.l.b16 %v520
    %v2131 = vunpack.c.h.b16 %v520
    %v2132 = vunpack.c.l.b16 %v521
    %v2133 = vunpack.c.h.b16 %v521
    %v2134 = vunpack.c.l.b16 %v522
    %v2135 = vunpack.c.h.b16 %v522
    %v2136 = vunpack.c.l.b16 %v523
    %v2137 = vunpack.c.h.b16 %v523
    %v2138 = vunpack.c.l.b16 %v524
    %v2139 = vunpack.c.h.b16 %v524
    %v2140 = vunpack.c.l.b16 %v525
    %v2141 = vunpack.c.h.b16 %v525
    %v2142 = vunpack.c.l.b16 %v526
    %v2143 = vunpack.c.h.b16 %v526
    %v2144 = vunpack.c.l.b16 %v527
    %v2145 = vunpack.c.h.b16 %v527
    %v2146 = vunpack.c.l.b16 %v528
    %v2147 = vunpack.c.h.b16 %v528
    %v2148 = vunpack.c.l.b16 %v529
    %v2149 = vunpack.c.h.b16 %v529
    %v2150 = vunpack.c.l.b16 %v530
    %v2151 = vunpack.c.h.b16 %v530
    %v2152 = vunpack.c.l.b16 %v531
    %v2153 = vunpack.c.h.b16 %v531
    %v2154 = vunpack.c.l.b16 %v532
    %v2155 = vunpack.c.h.b16 %v532
    %v2156 = vunpack.c.l.b16 %v533
    %v2157 = vunpack.c.h.b16 %v533
    %v2158 = vunpack.c.l.b16 %v534
    %v2159 = vunpack.c.h.b16 %v534
    %v2160 = vunpack.c.l.b16 %v535
    %v2161 = vunpack.c.h.b16 %v535
    %v2162 = vunpack.c.l.b16 %v536
    %v2163 = vunpack.c.h.b16 %v536
    %v2164 = vunpack.c.l.b16 %v537
    %v2165 = vunpack.c.h.b16 %v537
    %v2166 = vunpack.c.l.b16 %v538
    %v2167 = vunpack.c.h.b16 %v538
    %v2168 = vunpack.c.l.b16 %v539
    %v2169 = vunpack.c.h.b16 %v539
    %v2170 = vunpack.c.l.b16 %v540
    %v2171 = vunpack.c.h.b16 %v540
    %v2172 = vunpack.c.l.b16 %v541
    %v2173 = vunpack.c.h.b16 %v541
    %v2174 = vunpack.c.l.b16 %v542
    %v2175 = vunpack.c.h.b16 %v542
    %v2176 = vunpack.c.l.b16 %v543
    %v2177 = vunpack.c.h.b16 %v543
    %v2178 = vunpack.c.l.b16 %v544
    %v2179 = vunpack.c.h.b16 %v544
    %v2180 = vunpack.c.l.b16 %v545
    %v2181 = vunpack.c.h.b16 %v545
    %v2182 = vunpack.c.l.b16 %v546
    %v2183 = vunpack.c.h.b16 %v546
    %v2184 = vunpack.c.l.b16 %v547
    %v2185 = vunpack.c.h.b16 %v547
    %v2186 = vunpack.c.l.b16 %v548
    %v2187 = vunpack.c.h.b16 %v548
    %v2188 = vunpack.c.l.b16 %v549
    %v2189 = vunpack.c.h.b16 %v549
    %v2190 = vunpack.c.l.b16 %v550
    %v2191 = vunpack.c.h.b16 %v550
    %v2192 = vunpack.c.l.b16 %v551
    %v2193 = vunpack.c.h.b16 %v551
    %v2194 = vunpack.c.l.b16 %v552
    %v2195 = vunpack.c.h.b16 %v552
    %v2196 = vunpack.c.l.b16 %v553
    %v2197 = vunpack.c.h.b16 %v553
    %v2198 = vunpack.c.l.b16 %v554
    %v2199 = vunpack.c.h.b16 %v554
    %v2200 = vunpack.c.l.b16 %v555
    %v2201 = vunpack.c.h.b16 %v555
    %v2202 = vunpack.c.l.b16 %v556
    %v2203 = vunpack.c.h.b16 %v556
    %v2204 = vunpack.c.l.b16 %v557
    %v2205 = vunpack.c.h.b16 %v557
    %v2206 = vunpack.c.l.b16 %v558
    %v2207 = vunpack.c.h.b16 %v558
    %v2208 = vunpack.c.l.b16 %v559
    %v2209 = vunpack.c.h.b16 %v559
    %v2210 = vunpack.c.l.b16 %v560
    %v2211 = vunpack.c.h.b16 %v560
    %v2212 = vunpack.c.l.b16 %v561
    %v2213 = vunpack.c.h.b16 %v561
    %v2214 = vunpack.c.l.b16 %v562
    %v2215 = vunpack.c.h.b16 %v562
    %v2216 = vunpack.c.l.b16 %v563
    %v2217 = vunpack.c.h.b16 %v563
    %v2218 = vunpack.c.l.b16 %v564
    %v2219 = vunpack.c.h.b16 %v564
    %v2220 = vunpack.c.l.b16 %v565
    %v2221 = vunpack.c.h.b16 %v565
    %v2222 = vunpack.c.l.b16 %v566
    %v2223 = vunpack.c.h.b16 %v566
    %v2224 = vunpack.c.l.b16 %v567
    %v2225 = vunpack.c.h.b16 %v567
    %v2226 = vunpack.c.l.b16 %v568
    %v2227 = vunpack.c.h.b16 %v568
    %v2228 = vunpack.c.l.b16 %v569
    %v2229 = vunpack.c.h.b16 %v569
    %v2230 = vunpack.c.l.b16 %v570
    %v2231 = vunpack.c.h.b16 %v570
    %v2232 = vunpack.c.l.b16 %v571
    %v2233 = vunpack.c.h.b16 %v571
    %v2234 = vunpack.c.l.b16 %v572
    %v2235 = vunpack.c.h.b16 %v572
    %v2236 = vunpack.c.l.b16 %v573
    %v2237 = vunpack.c.h.b16 %v573
    %v2238 = vunpack.c.l.b16 %v574
    %v2239 = vunpack.c.h.b16 %v574
    %v2240 = vunpack.c.l.b16 %v575
    %v2241 = vunpack.c.h.b16 %v575
    %v2242 = vunpack.c.l.b16 %v576
    %v2243 = vunpack.c.h.b16 %v576
    %v2244 = vunpack.c.l.b16 %v577
    %v2245 = vunpack.c.h.b16 %v577
    %v2246 = vunpack.c.l.b16 %v578
    %v2247 = vunpack.c.h.b16 %v578
    %v2248 = vunpack.c.l.b16 %v579
    %v2249 = vunpack.c.h.b16 %v579
    %v2250 = vunpack.c.l.b16 %v580
    %v2251 = vunpack.c.h.b16 %v580
    %v2252 = vunpack.c.l.b16 %v581
    %v2253 = vunpack.c.h.b16 %v581
    %v2254 = vunpack.c.l.b16 %v582
    %v2255 = vunpack.c.h.b16 %v582
    %v2256 = vunpack.c.l.b16 %v583
    %v2257 = vunpack.c.h.b16 %v583
    %v2258 = vunpack.c.l.b16 %v584
    %v2259 = vunpack.c.h.b16 %v584
    %v2260 = vunpack.c.l.b16 %v585
    %v2261 = vunpack.c.h.b16 %v585
    %v2262 = vunpack.c.l.b16 %v586
    %v2263 = vunpack.c.h.b16 %v586
    %v2264 = vunpack.c.l.b16 %v587
    %v2265 = vunpack.c.h.b16 %v587
    %v2266 = vunpack.c.l.b16 %v588
    %v2267 = vunpack.c.h.b16 %v588
    %v2268 = vunpack.c.l.b16 %v589
    %v2269 = vunpack.c.h.b16 %v589
    %v2270 = vunpack.c.l.b16 %v590
    %v2271 = vunpack.c.h.b16 %v590
    %v2272 = vunpack.c.l.b16 %v591
    %v2273 = vunpack.c.h.b16 %v591
    %v2274 = vunpack.c.l.b16 %v592
    %v2275 = vunpack.c.h.b16 %v592
    %v2276 = vunpack.c.l.b16 %v593
    %v2277 = vunpack.c.h.b16 %v593
    %v2278 = vunpack.c.l.b16 %v594
    %v2279 = vunpack.c.h.b16 %v594
    %v2280 = vunpack.c.l.b16 %v595
    %v2281 = vunpack.c.h.b16 %v595
    %v2282 = vunpack.c.l.b16 %v596
    %v2283 = vunpack.c.h.b16 %v596
    %v2284 = vunpack.c.l.b16 %v597
    %v2285 = vunpack.c.h.b16 %v597
    %v2286 = vunpack.c.l.b16 %v598
    %v2287 = vunpack.c.h.b16 %v598
    %v2288 = vunpack.c.l.b16 %v599
    %v2289 = vunpack.c.h.b16 %v599
    %v2290 = vunpack.c.l.b16 %v600
    %v2291 = vunpack.c.h.b16 %v600
    %v2292 = vunpack.c.l.b16 %v601
    %v2293 = vunpack.c.h.b16 %v601
    %v2294 = vunpack.c.l.b16 %v602
    %v2295 = vunpack.c.h.b16 %v602
    %v2296 = vunpack.c.l.b16 %v603
    %v2297 = vunpack.c.h.b16 %v603
    %v2298 = vunpack.c.l.b16 %v604
    %v2299 = vunpack.c.h.b16 %v604
    %v2300 = vunpack.c.l.b16 %v605
    %v2301 = vunpack.c.h.b16 %v605
    %v2302 = vunpack.c.l.b16 %v606
    %v2303 = vunpack.c.h.b16 %v606
    %v2304 = vunpack.c.l.b16 %v607
    %v2305 = vunpack.c.h.b16 %v607
    %v2306 = vunpack.c.l.b16 %v608
    %v2307 = vunpack.c.h.b16 %v608
    %v2308 = vunpack.c.l.b16 %v609
    %v2309 = vunpack.c.h.b16 %v609
    %v2310 = vunpack.c.l.b16 %v610
    %v2311 = vunpack.c.h.b16 %v610
    %v2312 = vunpack.c.l.b16 %v611
    %v2313 = vunpack.c.h.b16 %v611
    %v2314 = vunpack.c.l.b16 %v612
    %v2315 = vunpack.c.h.b16 %v612
    %v2316 = vunpack.c.l.b16 %v613
    %v2317 = vunpack.c.h.b16 %v613
    %v2318 = vunpack.c.l.b16 %v614
    %v2319 = vunpack.c.h.b16 %v614
    %v2320 = vunpack.c.l.b16 %v615
    %v2321 = vunpack.c.h.b16 %v615
    %v2322 = vunpack.c.l.b16 %v616
    %v2323 = vunpack.c.h.b16 %v616
    %v2324 = vunpack.c.l.b16 %v617
    %v2325 = vunpack.c.h.b16 %v617
    %v2326 = vunpack.c.l.b16 %v618
    %v2327 = vunpack.c.h.b16 %v618
    %v2328 = vunpack.c.l.b16 %v619
    %v2329 = vunpack.c.h.b16 %v619
    %v2330 = vunpack.c.l.b16 %v620
    %v2331 = vunpack.c.h.b16 %v620
    %v2332 = vunpack.c.l.b16 %v621
    %v2333 = vunpack.c.h.b16 %v621
    %v2334 = vunpack.c.l.b16 %v622
    %v2335 = vunpack.c.h.b16 %v622
    %v2336 = vunpack.c.l.b16 %v623
    %v2337 = vunpack.c.h.b16 %v623
    %v2338 = vunpack.c.l.b16 %v624
    %v2339 = vunpack.c.h.b16 %v624
    %v2340 = vunpack.c.l.b16 %v625
    %v2341 = vunpack.c.h.b16 %v625
    %v2342 = vunpack.c.l.b16 %v626
    %v2343 = vunpack.c.h.b16 %v626
    %v2344 = vunpack.c.l.b16 %v627
    %v2345 = vunpack.c.h.b16 %v627
    %v2346 = vunpack.c.l.b16 %v628
    %v2347 = vunpack.c.h.b16 %v628
    %v2348 = vunpack.c.l.b16 %v629
    %v2349 = vunpack.c.h.b16 %v629
    %v2350 = vunpack.c.l.b16 %v630
    %v2351 = vunpack.c.h.b16 %v630
    %v2352 = vunpack.c.l.b16 %v631
    %v2353 = vunpack.c.h.b16 %v631
    %v2354 = vunpack.c.l.b16 %v632
    %v2355 = vunpack.c.h.b16 %v632
    %v2356 = vunpack.c.l.b16 %v633
    %v2357 = vunpack.c.h.b16 %v633
    %v2358 = vunpack.c.l.b16 %v634
    %v2359 = vunpack.c.h.b16 %v634
    %v2360 = vunpack.c.l.b16 %v635
    %v2361 = vunpack.c.h.b16 %v635
    %v2362 = vunpack.c.l.b16 %v636
    %v2363 = vunpack.c.h.b16 %v636
    %v2364 = vunpack.c.l.b16 %v637
    %v2365 = vunpack.c.h.b16 %v637
    %v2366 = vunpack.c.l.b16 %v638
    %v2367 = vunpack.c.h.b16 %v638
    %v2368 = vunpack.c.l.b16 %v639
    %v2369 = vunpack.c.h.b16 %v639
    %v2370 = vunpack.c.l.b16 %v640
    %v2371 = vunpack.c.h.b16 %v640
    %v2372 = vunpack.c.l.b16 %v641
    %v2373 = vunpack.c.h.b16 %v641
    %v2374 = vunpack.c.l.b16 %v642
    %v2375 = vunpack.c.h.b16 %v642
    %v2376 = vunpack.c.l.b16 %v643
    %v2377 = vunpack.c.h.b16 %v643
    %v2378 = vunpack.c.l.b16 %v644
    %v2379 = vunpack.c.h.b16 %v644
    %v2380 = vunpack.c.l.b16 %v645
    %v2381 = vunpack.c.h.b16 %v645
    %v2382 = vunpack.c.l.b16 %v646
    %v2383 = vunpack.c.h.b16 %v646
    %v2384 = vunpack.c.l.b16 %v647
    %v2385 = vunpack.c.h.b16 %v647
    %v2386 = vunpack.c.l.b16 %v648
    %v2387 = vunpack.c.h.b16 %v648
    %v2388 = vunpack.c.l.b16 %v649
    %v2389 = vunpack.c.h.b16 %v649
    %v2390 = vunpack.c.l.b16 %v650
    %v2391 = vunpack.c.h.b16 %v650
    %v2392 = vunpack.c.l.b16 %v651
    %v2393 = vunpack.c.h.b16 %v651
    %v2394 = vunpack.c.l.b16 %v652
    %v2395 = vunpack.c.h.b16 %v652
    %v2396 = vunpack.c.l.b16 %v653
    %v2397 = vunpack.c.h.b16 %v653
    %v2398 = vunpack.c.l.b16 %v654
    %v2399 = vunpack.c.h.b16 %v654
    %v2400 = vunpack.c.l.b16 %v655
    %v2401 = vunpack.c.h.b16 %v655
    %v2402 = vunpack.c.l.b16 %v656
    %v2403 = vunpack.c.h.b16 %v656
    %v2404 = vunpack.c.l.b16 %v657
    %v2405 = vunpack.c.h.b16 %v657
    %v2406 = vunpack.c.l.b16 %v658
    %v2407 = vunpack.c.h.b16 %v658
    %v2408 = vunpack.c.l.b16 %v659
    %v2409 = vunpack.c.h.b16 %v659
    %v2410 = vunpack.c.l.b16 %v660
    %v2411 = vunpack.c.h.b16 %v660
    %v2412 = vunpack.c.l.b16 %v661
    %v2413 = vunpack.c.h.b16 %v661
    %v2414 = vunpack.c.l.b16 %v662
    %v2415 = vunpack.c.h.b16 %v662
    %v2416 = vunpack.c.l.b16 %v663
    %v2417 = vunpack.c.h.b16 %v663
    %v2418 = vunpack.c.l.b16 %v664
    %v2419 = vunpack.c.h.b16 %v664
    %v2420 = vunpack.c.l.b16 %v665
    %v2421 = vunpack.c.h.b16 %v665
    %v2422 = vunpack.c.l.b16 %v666
    %v2423 = vunpack.c.h.b16 %v666
    %v2424 = vunpack.c.l.b16 %v667
    %v2425 = vunpack.c.h.b16 %v667
    %v2426 = vunpack.c.l.b16 %v668
    %v2427 = vunpack.c.h.b16 %v668
    %v2428 = vunpack.c.l.b16 %v669
    %v2429 = vunpack.c.h.b16 %v669
    %v2430 = vunpack.c.l.b16 %v670
    %v2431 = vunpack.c.h.b16 %v670
    %v2432 = vunpack.c.l.b16 %v671
    %v2433 = vunpack.c.h.b16 %v671
    %v2434 = vunpack.c.l.b16 %v672
    %v2435 = vunpack.c.h.b16 %v672
    %v2436 = vunpack.c.l.b16 %v673
    %v2437 = vunpack.c.h.b16 %v673
    %v2438 = vunpack.c.l.b16 %v674
    %v2439 = vunpack.c.h.b16 %v674
    %v2440 = vunpack.c.l.b16 %v675
    %v2441 = vunpack.c.h.b16 %v675
    %v2442 = vunpack.c.l.b16 %v676
    %v2443 = vunpack.c.h.b16 %v676
    %v2444 = vunpack.c.l.b16 %v677
    %v2445 = vunpack.c.h.b16 %v677
    %v2446 = vunpack.c.l.b16 %v678
    %v2447 = vunpack.c.h.b16 %v678
    %v2448 = vunpack.c.l.b16 %v679
    %v2449 = vunpack.c.h.b16 %v679
    %v2450 = vunpack.c.l.b16 %v680
    %v2451 = vunpack.c.h.b16 %v680
    %v2452 = vunpack.c.l.b16 %v681
    %v2453 = vunpack.c.h.b16 %v681
    %v2454 = vunpack.c.l.b16 %v682
    %v2455 = vunpack.c.h.b16 %v682
    %v2456 = vunpack.c.l.b16 %v683
    %v2457 = vunpack.c.h.b16 %v683
    %v2458 = vunpack.c.l.b16 %v684
    %v2459 = vunpack.c.h.b16 %v684
    %v2460 = vunpack.c.l.b16 %v685
    %v2461 = vunpack.c.h.b16 %v685
    %v2462 = vunpack.c.l.b16 %v686
    %v2463 = vunpack.c.h.b16 %v686
    %v2464 = vunpack.c.l.b16 %v687
    %v2465 = vunpack.c.h.b16 %v687
    %v2466 = vunpack.c.l.b16 %v688
    %v2467 = vunpack.c.h.b16 %v688
    %v2468 = vunpack.c.l.b16 %v689
    %v2469 = vunpack.c.h.b16 %v689
    %v2470 = vunpack.c.l.b16 %v690
    %v2471 = vunpack.c.h.b16 %v690
    %v2472 = vunpack.c.l.b16 %v691
    %v2473 = vunpack.c.h.b16 %v691
    %v2474 = vunpack.c.l.b16 %v692
    %v2475 = vunpack.c.h.b16 %v692
    %v2476 = vunpack.c.l.b16 %v693
    %v2477 = vunpack.c.h.b16 %v693
    %v2478 = vunpack.c.l.b16 %v694
    %v2479 = vunpack.c.h.b16 %v694
    %v2480 = vunpack.c.l.b16 %v695
    %v2481 = vunpack.c.h.b16 %v695
    %v2482 = vpack.c.b16 %v1342, %v1330
    %v2483 = vpack.c.b16 %v1343, %v1331
    %v2484 = vpack.c.b16 %v1344, %v1332
    %v2485 = vpack.c.b16 %v1345, %v1333
    %v2486 = vpack.c.b16 %v1346, %v1334
    %v2487 = vpack.c.b16 %v1347, %v1335
    %v2488 = vpack.c.b16 %v1348, %v1336
    %v2489 = vpack.c.b16 %v1349, %v1337
    %v2490 = vpack.c.b16 %v1350, %v1338
    %v2491 = vpack.c.b16 %v1351, %v1339
    %v2492 = vpack.c.b16 %v1352, %v1340
    %v2493 = vpack.c.b16 %v1353, %v1341
    %v2494 = vpack.c.b16 %v1366, %v1354
    %v2495 = vpack.c.b16 %v1367, %v1355
    %v2496 = vpack.c.b16 %v1368, %v1356
    %v2497 = vpack.c.b16 %v1369, %v1357
    %v2498 = vpack.c.b16 %v1370, %v1358
    %v2499 = vpack.c.b16 %v1371, %v1359
    %v2500 = vpack.c.b16 %v1372, %v1360
    %v2501 = vpack.c.b16 %v1373, %v1361
    %v2502 = vpack.c.b16 %v1374, %v1362
    %v2503 = vpack.c.b16 %v1375, %v1363
    %v2504 = vpack.c.b16 %v1376, %v1364
    %v2505 = vpack.c.b16 %v1377, %v1365
    %v2506 = vpack.c.b16 %v1390, %v1378
    %v2507 = vpack.c.b16 %v1391, %v1379
    %v2508 = vpack.c.b16 %v1392, %v1380
    %v2509 = vpack.c.b16 %v1393, %v1381
    %v2510 = vpack.c.b16 %v1394, %v1382
    %v2511 = vpack.c.b16 %v1395, %v1383
    %v2512 = vpack.c.b16 %v1396, %v1384
    %v2513 = vpack.c.b16 %v1397, %v1385
    %v2514 = vpack.c.b16 %v1398, %v1386
    %v2515 = vpack.c.b16 %v1399, %v1387
    %v2516 = vpack.c.b16 %v1400, %v1388
    %v2517 = vpack.c.b16 %v1401, %v1389
    %v2518 = vpack.c.b16 %v1414, %v1402
    %v2519 = vpack.c.b16 %v1415, %v1403
    %v2520 = vpack.c.b16 %v1416, %v1404
    %v2521 = vpack.c.b16 %v1417, %v1405
    %v2522 = vpack.c.b16 %v1418, %v1406
    %v2523 = vpack.c.b16 %v1419, %v1407
    %v2524 = vpack.c.b16 %v1420, %v1408
    %v2525 = vpack.c.b16 %v1421, %v1409
    %v2526 = vpack.c.b16 %v1422, %v1410
    %v2527 = vpack.c.b16 %v1423, %v1411
    %v2528 = vpack.c.b16 %v1424, %v1412
    %v2529 = vpack.c.b16 %v1425, %v1413
    %v2530 = vpack.c.b16 %v1438, %v1426
    %v2531 = vpack.c.b16 %v1439, %v1427
    %v2532 = vpack.c.b16 %v1440, %v1428
    %v2533 = vpack.c.b16 %v1441, %v1429
    %v2534 = vpack.c.b16 %v1442, %v1430
    %v2535 = vpack.c.b16 %v1443, %v1431
    %v2536 = vpack.c.b16 %v1444, %v1432
    %v2537 = vpack.c.b16 %v1445, %v1433
    %v2538 = vpack.c.b16 %v1446, %v1434
    %v2539 = vpack.c.b16 %v1447, %v1435
    %v2540 = vpack.c.b16 %v1448, %v1436
    %v2541 = vpack.c.b16 %v1449, %v1437
    %v2542 = vpack.c.b16 %v1462, %v1450
    %v2543 = vpack.c.b16 %v1463, %v1451
    %v2544 = vpack.c.b16 %v1464, %v1452
    %v2545 = vpack.c.b16 %v1465, %v1453
    %v2546 = vpack.c.b16 %v1466, %v1454
    %v2547 = vpack.c.b16 %v1467, %v1455
    %v2548 = vpack.c.b16 %v1468, %v1456
    %v2549 = vpack.c.b16 %v1469, %v1457
    %v2550 = vpack.c.b16 %v1470, %v1458
    %v2551 = vpack.c.b16 %v1471, %v1459
    %v2552 = vpack.c.b16 %v1472, %v1460
    %v2553 = vpack.c.b16 %v1473, %v1461
    %v2554 = vpack.c.b16 %v1486, %v1474
    %v2555 = vpack.c.b16 %v1487, %v1475
    %v2556 = vpack.c.b16 %v1488, %v1476
    %v2557 = vpack.c.b16 %v1489, %v1477
    %v2558 = vpack.c.b16 %v1490, %v1478
    %v2559 = vpack.c.b16 %v1491, %v1479
    %v2560 = vpack.c.b16 %v1492, %v1480
    %v2561 = vpack.c.b16 %v1493, %v1481
    %v2562 = vpack.c.b16 %v1494, %v1482
    %v2563 = vpack.c.b16 %v1495, %v1483
    %v2564 = vpack.c.b16 %v1496, %v1484
    %v2565 = vpack.c.b16 %v1497, %v1485
    %v2566 = vpack.c.b16 %v1510, %v1498
    %v2567 = vpack.c.b16 %v1511, %v1499
    %v2568 = vpack.c.b16 %v1512, %v1500
    %v2569 = vpack.c.b16 %v1513, %v1501
    %v2570 = vpack.c.b16 %v1514, %v1502
    %v2571 = vpack.c.b16 %v1515, %v1503
    %v2572 = vpack.c.b16 %v1516, %v1504
    %v2573 = vpack.c.b16 %v1517, %v1505
    %v2574 = vpack.c.b16 %v1518, %v1506
    %v2575 = vpack.c.b16 %v1519, %v1507
    %v2576 = vpack.c.b16 %v1520, %v1508
    %v2577 = vpack.c.b16 %v1521, %v1509
    %v2578 = vpack.c.b16 %v1534, %v1522
    %v2579 = vpack.c.b16 %v1535, %v1523
    %v2580 = vpack.c.b16 %v1536, %v1524
    %v2581 = vpack.c.b16 %v1537, %v1525
    %v2582 = vpack.c.b16 %v1538, %v1526
    %v2583 = vpack.c.b16 %v1539, %v1527
    %v2584 = vpack.c.b16 %v1540, %v1528
    %v2585 = vpack.c.b16 %v1541, %v1529
    %v2586 = vpack.c.b16 %v1542, %v1530
    %v2587 = vpack.c.b16 %v1543, %v1531
    %v2588 = vpack.c.b16 %v1544, %v1532
    %v2589 = vpack.c.b16 %v1545, %v1533
    %v2590 = vpack.c.b16 %v1558, %v1546
    %v2591 = vpack.c.b16 %v1559, %v1547
    %v2592 = vpack.c.b16 %v1560, %v1548
    %v2593 = vpack.c.b16 %v1561, %v1549
    %v2594 = vpack.c.b16 %v1562, %v1550
    %v2595 = vpack.c.b16 %v1563, %v1551
    %v2596 = vpack.c.b16 %v1564, %v1552
    %v2597 = vpack.c.b16 %v1565, %v1553
    %v2598 = vpack.c.b16 %v1566, %v1554
    %v2599 = vpack.c.b16 %v1567, %v1555
    %v2600 = vpack.c.b16 %v1568, %v1556
    %v2601 = vpack.c.b16 %v1569, %v1557
    %v2602 = vpack.c.b16 %v1582, %v1570
    %v2603 = vpack.c.b16 %v1583, %v1571
    %v2604 = vpack.c.b16 %v1584, %v1572
    %v2605 = vpack.c.b16 %v1585, %v1573
    %v2606 = vpack.c.b16 %v1586, %v1574
    %v2607 = vpack.c.b16 %v1587, %v1575
    %v2608 = vpack.c.b16 %v1588, %v1576
    %v2609 = vpack.c.b16 %v1589, %v1577
    %v2610 = vpack.c.b16 %v1590, %v1578
    %v2611 = vpack.c.b16 %v1591, %v1579
    %v2612 = vpack.c.b16 %v1592, %v1580
    %v2613 = vpack.c.b16 %v1593, %v1581
    %v2614 = vpack.c.b16 %v1606, %v1594
    %v2615 = vpack.c.b16 %v1607, %v1595
    %v2616 = vpack.c.b16 %v1608, %v1596
    %v2617 = vpack.c.b16 %v1609, %v1597
    %v2618 = vpack.c.b16 %v1610, %v1598
    %v2619 = vpack.c.b16 %v1611, %v1599
    %v2620 = vpack.c.b16 %v1612, %v1600
    %v2621 = vpack.c.b16 %v1613, %v1601
    %v2622 = vpack.c.b16 %v1614, %v1602
    %v2623 = vpack.c.b16 %v1615, %v1603
    %v2624 = vpack.c.b16 %v1616, %v1604
    %v2625 = vpack.c.b16 %v1617, %v1605
    %v2626 = vpack.c.b16 %v1630, %v1618
    %v2627 = vpack.c.b16 %v1631, %v1619
    %v2628 = vpack.c.b16 %v1632, %v1620
    %v2629 = vpack.c.b16 %v1633, %v1621
    %v2630 = vpack.c.b16 %v1634, %v1622
    %v2631 = vpack.c.b16 %v1635, %v1623
    %v2632 = vpack.c.b16 %v1636, %v1624
    %v2633 = vpack.c.b16 %v1637, %v1625
    %v2634 = vpack.c.b16 %v1638, %v1626
    %v2635 = vpack.c.b16 %v1639, %v1627
    %v2636 = vpack.c.b16 %v1640, %v1628
    %v2637 = vpack.c.b16 %v1641, %v1629
    %v2638 = vpack.c.b16 %v1654, %v1642
    %v2639 = vpack.c.b16 %v1655, %v1643
    %v2640 = vpack.c.b16 %v1656, %v1644
    %v2641 = vpack.c.b16 %v1657, %v1645
    %v2642 = vpack.c.b16 %v1658, %v1646
    %v2643 = vpack.c.b16 %v1659, %v1647
    %v2644 = vpack.c.b16 %v1660, %v1648
    %v2645 = vpack.c.b16 %v1661, %v1649
    %v2646 = vpack.c.b16 %v1662, %v1650
    %v2647 = vpack.c.b16 %v1663, %v1651
    %v2648 = vpack.c.b16 %v1664, %v1652
    %v2649 = vpack.c.b16 %v1665, %v1653
    %v2650 = vpack.c.b16 %v1678, %v1666
    %v2651 = vpack.c.b16 %v1679, %v1667
    %v2652 = vpack.c.b16 %v1680, %v1668
    %v2653 = vpack.c.b16 %v1681, %v1669
    %v2654 = vpack.c.b16 %v1682, %v1670
    %v2655 = vpack.c.b16 %v1683, %v1671
    %v2656 = vpack.c.b16 %v1684, %v1672
    %v2657 = vpack.c.b16 %v1685, %v1673
    %v2658 = vpack.c.b16 %v1686, %v1674
    %v2659 = vpack.c.b16 %v1687, %v1675
    %v2660 = vpack.c.b16 %v1688, %v1676
    %v2661 = vpack.c.b16 %v1689, %v1677
    %v2662 = vpack.c.b16 %v1702, %v1690
    %v2663 = vpack.c.b16 %v1703, %v1691
    %v2664 = vpack.c.b16 %v1704, %v1692
    %v2665 = vpack.c.b16 %v1705, %v1693
    %v2666 = vpack.c.b16 %v1706, %v1694
    %v2667 = vpack.c.b16 %v1707, %v1695
    %v2668 = vpack.c.b16 %v1708, %v1696
    %v2669 = vpack.c.b16 %v1709, %v1697
    %v2670 = vpack.c.b16 %v1710, %v1698
    %v2671 = vpack.c.b16 %v1711, %v1699
    %v2672 = vpack.c.b16 %v1712, %v1700
    %v2673 = vpack.c.b16 %v1713, %v1701
    %v2674 = vpack.c.b16 %v1726, %v1714
    %v2675 = vpack.c.b16 %v1727, %v1715
    %v2676 = vpack.c.b16 %v1728, %v1716
    %v2677 = vpack.c.b16 %v1729, %v1717
    %v2678 = vpack.c.b16 %v1730, %v1718
    %v2679 = vpack.c.b16 %v1731, %v1719
    %v2680 = vpack.c.b16 %v1732, %v1720
    %v2681 = vpack.c.b16 %v1733, %v1721
    %v2682 = vpack.c.b16 %v1734, %v1722
    %v2683 = vpack.c.b16 %v1735, %v1723
    %v2684 = vpack.c.b16 %v1736, %v1724
    %v2685 = vpack.c.b16 %v1737, %v1725
    %v2686 = vpack.c.b16 %v1750, %v1738
    %v2687 = vpack.c.b16 %v1751, %v1739
    %v2688 = vpack.c.b16 %v1752, %v1740
    %v2689 = vpack.c.b16 %v1753, %v1741
    %v2690 = vpack.c.b16 %v1754, %v1742
    %v2691 = vpack.c.b16 %v1755, %v1743
    %v2692 = vpack.c.b16 %v1756, %v1744
    %v2693 = vpack.c.b16 %v1757, %v1745
    %v2694 = vpack.c.b16 %v1758, %v1746
    %v2695 = vpack.c.b16 %v1759, %v1747
    %v2696 = vpack.c.b16 %v1760, %v1748
    %v2697 = vpack.c.b16 %v1761, %v1749
    %v2698 = vpack.c.b16 %v1774, %v1762
    %v2699 = vpack.c.b16 %v1775, %v1763
    %v2700 = vpack.c.b16 %v1776, %v1764
    %v2701 = vpack.c.b16 %v1777, %v1765
    %v2702 = vpack.c.b16 %v1778, %v1766
    %v2703 = vpack.c.b16 %v1779, %v1767
    %v2704 = vpack.c.b16 %v1780, %v1768
    %v2705 = vpack.c.b16 %v1781, %v1769
    %v2706 = vpack.c.b16 %v1782, %v1770
    %v2707 = vpack.c.b16 %v1783, %v1771
    %v2708 = vpack.c.b16 %v1784, %v1772
    %v2709 = vpack.c.b16 %v1785, %v1773
    %v2710 = vpack.c.b16 %v1798, %v1786
    %v2711 = vpack.c.b16 %v1799, %v1787
    %v2712 = vpack.c.b16 %v1800, %v1788
    %v2713 = vpack.c.b16 %v1801, %v1789
    %v2714 = vpack.c.b16 %v1802, %v1790
    %v2715 = vpack.c.b16 %v1803, %v1791
    %v2716 = vpack.c.b16 %v1804, %v1792
    %v2717 = vpack.c.b16 %v1805, %v1793
    %v2718 = vpack.c.b16 %v1806, %v1794
    %v2719 = vpack.c.b16 %v1807, %v1795
    %v2720 = vpack.c.b16 %v1808, %v1796
    %v2721 = vpack.c.b16 %v1809, %v1797
    %v2722 = vpack.c.b16 %v1822, %v1810
    %v2723 = vpack.c.b16 %v1823, %v1811
    %v2724 = vpack.c.b16 %v1824, %v1812
    %v2725 = vpack.c.b16 %v1825, %v1813
    %v2726 = vpack.c.b16 %v1826, %v1814
    %v2727 = vpack.c.b16 %v1827, %v1815
    %v2728 = vpack.c.b16 %v1828, %v1816
    %v2729 = vpack.c.b16 %v1829, %v1817
    %v2730 = vpack.c.b16 %v1830, %v1818
    %v2731 = vpack.c.b16 %v1831, %v1819
    %v2732 = vpack.c.b16 %v1832, %v1820
    %v2733 = vpack.c.b16 %v1833, %v1821
    %v2734 = vpack.c.b16 %v1846, %v1834
    %v2735 = vpack.c.b16 %v1847, %v1835
    %v2736 = vpack.c.b16 %v1848, %v1836
    %v2737 = vpack.c.b16 %v1849, %v1837
    %v2738 = vpack.c.b16 %v1850, %v1838
    %v2739 = vpack.c.b16 %v1851, %v1839
    %v2740 = vpack.c.b16 %v1852, %v1840
    %v2741 = vpack.c.b16 %v1853, %v1841
    %v2742 = vpack.c.b16 %v1854, %v1842
    %v2743 = vpack.c.b16 %v1855, %v1843
    %v2744 = vpack.c.b16 %v1856, %v1844
    %v2745 = vpack.c.b16 %v1857, %v1845
    %v2746 = vpack.c.b16 %v1870, %v1858
    %v2747 = vpack.c.b16 %v1871, %v1859
    %v2748 = vpack.c.b16 %v1872, %v1860
    %v2749 = vpack.c.b16 %v1873, %v1861
    %v2750 = vpack.c.b16 %v1874, %v1862
    %v2751 = vpack.c.b16 %v1875, %v1863
    %v2752 = vpack.c.b16 %v1876, %v1864
    %v2753 = vpack.c.b16 %v1877, %v1865
    %v2754 = vpack.c.b16 %v1878, %v1866
    %v2755 = vpack.c.b16 %v1879, %v1867
    %v2756 = vpack.c.b16 %v1880, %v1868
    %v2757 = vpack.c.b16 %v1881, %v1869
    %v2758 = vpack.c.b16 %v1894, %v1882
    %v2759 = vpack.c.b16 %v1895, %v1883
    %v2760 = vpack.c.b16 %v1896, %v1884
    %v2761 = vpack.c.b16 %v1897, %v1885
    %v2762 = vpack.c.b16 %v1898, %v1886
    %v2763 = vpack.c.b16 %v1899, %v1887
    %v2764 = vpack.c.b16 %v1900, %v1888
    %v2765 = vpack.c.b16 %v1901, %v1889
    %v2766 = vpack.c.b16 %v1902, %v1890
    %v2767 = vpack.c.b16 %v1903, %v1891
    %v2768 = vpack.c.b16 %v1904, %v1892
    %v2769 = vpack.c.b16 %v1905, %v1893
    %v2770 = vpack.c.b16 %v1918, %v1906
    %v2771 = vpack.c.b16 %v1919, %v1907
    %v2772 = vpack.c.b16 %v1920, %v1908
    %v2773 = vpack.c.b16 %v1921, %v1909
    %v2774 = vpack.c.b16 %v1922, %v1910
    %v2775 = vpack.c.b16 %v1923, %v1911
    %v2776 = vpack.c.b16 %v1924, %v1912
    %v2777 = vpack.c.b16 %v1925, %v1913
    %v2778 = vpack.c.b16 %v1926, %v1914
    %v2779 = vpack.c.b16 %v1927, %v1915
    %v2780 = vpack.c.b16 %v1928, %v1916
    %v2781 = vpack.c.b16 %v1929, %v1917
    %v2782 = vpack.c.b16 %v1942, %v1930
    %v2783 = vpack.c.b16 %v1943, %v1931
    %v2784 = vpack.c.b16 %v1944, %v1932
    %v2785 = vpack.c.b16 %v1945, %v1933
    %v2786 = vpack.c.b16 %v1946, %v1934
    %v2787 = vpack.c.b16 %v1947, %v1935
    %v2788 = vpack.c.b16 %v1948, %v1936
    %v2789 = vpack.c.b16 %v1949, %v1937
    %v2790 = vpack.c.b16 %v1950, %v1938
    %v2791 = vpack.c.b16 %v1951, %v1939
    %v2792 = vpack.c.b16 %v1952, %v1940
    %v2793 = vpack.c.b16 %v1953, %v1941
    %v2794 = vpack.c.b16 %v1966, %v1954
    %v2795 = vpack.c.b16 %v1967, %v1955
    %v2796 = vpack.c.b16 %v1968, %v1956
    %v2797 = vpack.c.b16 %v1969, %v1957
    %v2798 = vpack.c.b16 %v1970, %v1958
    %v2799 = vpack.c.b16 %v1971, %v1959
    %v2800 = vpack.c.b16 %v1972, %v1960
    %v2801 = vpack.c.b16 %v1973, %v1961
    %v2802 = vpack.c.b16 %v1974, %v1962
    %v2803 = vpack.c.b16 %v1975, %v1963
    %v2804 = vpack.c.b16 %v1976, %v1964
    %v2805 = vpack.c.b16 %v1977, %v1965
    %v2806 = vpack.c.b16 %v1990, %v1978
    %v2807 = vpack.c.b16 %v1991, %v1979
    %v2808 = vpack.c.b16 %v1992, %v1980
    %v2809 = vpack.c.b16 %v1993, %v1981
    %v2810 = vpack.c.b16 %v1994, %v1982
    %v2811 = vpack.c.b16 %v1995, %v1983
    %v2812 = vpack.c.b16 %v1996, %v1984
    %v2813 = vpack.c.b16 %v1997, %v1985
    %v2814 = vpack.c.b16 %v1998, %v1986
    %v2815 = vpack.c.b16 %v1999, %v1987
    %v2816 = vpack.c.b16 %v2000, %v1988
    %v2817 = vpack.c.b16 %v2001, %v1989
    %v2818 = vpack.c.b16 %v2014, %v2002
    %v2819 = vpack.c.b16 %v2015, %v2003
    %v2820 = vpack.c.b16 %v2016, %v2004
    %v2821 = vpack.c.b16 %v2017, %v2005
    %v2822 = vpack.c.b16 %v2018, %v2006
    %v2823 = vpack.c.b16 %v2019, %v2007
    %v2824 = vpack.c.b16 %v2020, %v2008
    %v2825 = vpack.c.b16 %v2021, %v2009
    %v2826 = vpack.c.b16 %v2022, %v2010
    %v2827 = vpack.c.b16 %v2023, %v2011
    %v2828 = vpack.c.b16 %v2024, %v2012
    %v2829 = vpack.c.b16 %v2025, %v2013
    %v2830 = vpack.c.b16 %v2038, %v2026
    %v2831 = vpack.c.b16 %v2039, %v2027
    %v2832 = vpack.c.b16 %v2040, %v2028
    %v2833 = vpack.c.b16 %v2041, %v2029
    %v2834 = vpack.c.b16 %v2042, %v2030
    %v2835 = vpack.c.b16 %v2043, %v2031
    %v2836 = vpack.c.b16 %v2044, %v2032
    %v2837 = vpack.c.b16 %v2045, %v2033
    %v2838 = vpack.c.b16 %v2046, %v2034
    %v2839 = vpack.c.b16 %v2047, %v2035
    %v2840 = vpack.c.b16 %v2048, %v2036
    %v2841 = vpack.c.b16 %v2049, %v2037
    %v2842 = vpack.c.b16 %v2062, %v2050
    %v2843 = vpack.c.b16 %v2063, %v2051
    %v2844 = vpack.c.b16 %v2064, %v2052
    %v2845 = vpack.c.b16 %v2065, %v2053
    %v2846 = vpack.c.b16 %v2066, %v2054
    %v2847 = vpack.c.b16 %v2067, %v2055
    %v2848 = vpack.c.b16 %v2068, %v2056
    %v2849 = vpack.c.b16 %v2069, %v2057
    %v2850 = vpack.c.b16 %v2070, %v2058
    %v2851 = vpack.c.b16 %v2071, %v2059
    %v2852 = vpack.c.b16 %v2072, %v2060
    %v2853 = vpack.c.b16 %v2073, %v2061
    %v2854 = vpack.c.b16 %v2086, %v2074
    %v2855 = vpack.c.b16 %v2087, %v2075
    %v2856 = vpack.c.b16 %v2088, %v2076
    %v2857 = vpack.c.b16 %v2089, %v2077
    %v2858 = vpack.c.b16 %v2090, %v2078
    %v2859 = vpack.c.b16 %v2091, %v2079
    %v2860 = vpack.c.b16 %v2092, %v2080
    %v2861 = vpack.c.b16 %v2093, %v2081
    %v2862 = vpack.c.b16 %v2094, %v2082
    %v2863 = vpack.c.b16 %v2095, %v2083
    %v2864 = vpack.c.b16 %v2096, %v2084
    %v2865 = vpack.c.b16 %v2097, %v2085
    %v2866 = vpack.c.b16 %v2110, %v2098
    %v2867 = vpack.c.b16 %v2111, %v2099
    %v2868 = vpack.c.b16 %v2112, %v2100
    %v2869 = vpack.c.b16 %v2113, %v2101
    %v2870 = vpack.c.b16 %v2114, %v2102
    %v2871 = vpack.c.b16 %v2115, %v2103
    %v2872 = vpack.c.b16 %v2116, %v2104
    %v2873 = vpack.c.b16 %v2117, %v2105
    %v2874 = vpack.c.b16 %v2118, %v2106
    %v2875 = vpack.c.b16 %v2119, %v2107
    %v2876 = vpack.c.b16 %v2120, %v2108
    %v2877 = vpack.c.b16 %v2121, %v2109
    %v2878 = vpack.c.b16 %v2134, %v2122
    %v2879 = vpack.c.b16 %v2135, %v2123
    %v2880 = vpack.c.b16 %v2136, %v2124
    %v2881 = vpack.c.b16 %v2137, %v2125
    %v2882 = vpack.c.b16 %v2138, %v2126
    %v2883 = vpack.c.b16 %v2139, %v2127
    %v2884 = vpack.c.b16 %v2140, %v2128
    %v2885 = vpack.c.b16 %v2141, %v2129
    %v2886 = vpack.c.b16 %v2142, %v2130
    %v2887 = vpack.c.b16 %v2143, %v2131
    %v2888 = vpack.c.b16 %v2144, %v2132
    %v2889 = vpack.c.b16 %v2145, %v2133
    %v2890 = vpack.c.b16 %v2158, %v2146
    %v2891 = vpack.c.b16 %v2159, %v2147
    %v2892 = vpack.c.b16 %v2160, %v2148
    %v2893 = vpack.c.b16 %v2161, %v2149
    %v2894 = vpack.c.b16 %v2162, %v2150
    %v2895 = vpack.c.b16 %v2163, %v2151
    %v2896 = vpack.c.b16 %v2164, %v2152
    %v2897 = vpack.c.b16 %v2165, %v2153
    %v2898 = vpack.c.b16 %v2166, %v2154
    %v2899 = vpack.c.b16 %v2167, %v2155
    %v2900 = vpack.c.b16 %v2168, %v2156
    %v2901 = vpack.c.b16 %v2169, %v2157
    %v2902 = vpack.c.b16 %v2182, %v2170
    %v2903 = vpack.c.b16 %v2183, %v2171
    %v2904 = vpack.c.b16 %v2184, %v2172
    %v2905 = vpack.c.b16 %v2185, %v2173
    %v2906 = vpack.c.b16 %v2186, %v2174
    %v2907 = vpack.c.b16 %v2187, %v2175
    %v2908 = vpack.c.b16 %v2188, %v2176
    %v2909 = vpack.c.b16 %v2189, %v2177
    %v2910 = vpack.c.b16 %v2190, %v2178
    %v2911 = vpack.c.b16 %v2191, %v2179
    %v2912 = vpack.c.b16 %v2192, %v2180
    %v2913 = vpack.c.b16 %v2193, %v2181
    %v2914 = vpack.c.b16 %v2206, %v2194
    %v2915 = vpack.c.b16 %v2207, %v2195
    %v2916 = vpack.c.b16 %v2208, %v2196
    %v2917 = vpack.c.b16 %v2209, %v2197
    %v2918 = vpack.c.b16 %v2210, %v2198
    %v2919 = vpack.c.b16 %v2211, %v2199
    %v2920 = vpack.c.b16 %v2212, %v2200
    %v2921 = vpack.c.b16 %v2213, %v2201
    %v2922 = vpack.c.b16 %v2214, %v2202
    %v2923 = vpack.c.b16 %v2215, %v2203
    %v2924 = vpack.c.b16 %v2216, %v2204
    %v2925 = vpack.c.b16 %v2217, %v2205
    %v2926 = vpack.c.b16 %v2230, %v2218
    %v2927 = vpack.c.b16 %v2231, %v2219
    %v2928 = vpack.c.b16 %v2232, %v2220
    %v2929 = vpack.c.b16 %v2233, %v2221
    %v2930 = vpack.c.b16 %v2234, %v2222
    %v2931 = vpack.c.b16 %v2235, %v2223
    %v2932 = vpack.c.b16 %v2236, %v2224
    %v2933 = vpack.c.b16 %v2237, %v2225
    %v2934 = vpack.c.b16 %v2238, %v2226
    %v2935 = vpack.c.b16 %v2239, %v2227
    %v2936 = vpack.c.b16 %v2240, %v2228
    %v2937 = vpack.c.b16 %v2241, %v2229
    %v2938 = vpack.c.b16 %v2254, %v2242
    %v2939 = vpack.c.b16 %v2255, %v2243
    %v2940 = vpack.c.b16 %v2256, %v2244
    %v2941 = vpack.c.b16 %v2257, %v2245
    %v2942 = vpack.c.b16 %v2258, %v2246
    %v2943 = vpack.c.b16 %v2259, %v2247
    %v2944 = vpack.c.b16 %v2260, %v2248
    %v2945 = vpack.c.b16 %v2261, %v2249
    %v2946 = vpack.c.b16 %v2262, %v2250
    %v2947 = vpack.c.b16 %v2263, %v2251
    %v2948 = vpack.c.b16 %v2264, %v2252
    %v2949 = vpack.c.b16 %v2265, %v2253
    %v2950 = vpack.c.b16 %v2278, %v2266
    %v2951 = vpack.c.b16 %v2279, %v2267
    %v2952 = vpack.c.b16 %v2280, %v2268
    %v2953 = vpack.c.b16 %v2281, %v2269
    %v2954 = vpack.c.b16 %v2282, %v2270
    %v2955 = vpack.c.b16 %v2283, %v2271
    %v2956 = vpack.c.b16 %v2284, %v2272
    %v2957 = vpack.c.b16 %v2285, %v2273
    %v2958 = vpack.c.b16 %v2286, %v2274
    %v2959 = vpack.c.b16 %v2287, %v2275
    %v2960 = vpack.c.b16 %v2288, %v2276
    %v2961 = vpack.c.b16 %v2289, %v2277
    %v2962 = vpack.c.b16 %v2302, %v2290
    %v2963 = vpack.c.b16 %v2303, %v2291
    %v2964 = vpack.c.b16 %v2304, %v2292
    %v2965 = vpack.c.b16 %v2305, %v2293
    %v2966 = vpack.c.b16 %v2306, %v2294
    %v2967 = vpack.c.b16 %v2307, %v2295
    %v2968 = vpack.c.b16 %v2308, %v2296
    %v2969 = vpack.c.b16 %v2309, %v2297
    %v2970 = vpack.c.b16 %v2310, %v2298
    %v2971 = vpack.c.b16 %v2311, %v2299
    %v2972 = vpack.c.b16 %v2312, %v2300
    %v2973 = vpack.c.b16 %v2313, %v2301
    %v2974 = vpack.c.b16 %v2326, %v2314
    %v2975 = vpack.c.b16 %v2327, %v2315
    %v2976 = vpack.c.b16 %v2328, %v2316
    %v2977 = vpack.c.b16 %v2329, %v2317
    %v2978 = vpack.c.b16 %v2330, %v2318
    %v2979 = vpack.c.b16 %v2331, %v2319
    %v2980 = vpack.c.b16 %v2332, %v2320
    %v2981 = vpack.c.b16 %v2333, %v2321
    %v2982 = vpack.c.b16 %v2334, %v2322
    %v2983 = vpack.c.b16 %v2335, %v2323
    %v2984 = vpack.c.b16 %v2336, %v2324
    %v2985 = vpack.c.b16 %v2337, %v2325
    %v2986 = vpack.c.b16 %v2350, %v2338
    %v2987 = vpack.c.b16 %v2351, %v2339
    %v2988 = vpack.c.b16 %v2352, %v2340
    %v2989 = vpack.c.b16 %v2353, %v2341
    %v2990 = vpack.c.b16 %v2354, %v2342
    %v2991 = vpack.c.b16 %v2355, %v2343
    %v2992 = vpack.c.b16 %v2356, %v2344
    %v2993 = vpack.c.b16 %v2357, %v2345
    %v2994 = vpack.c.b16 %v2358, %v2346
    %v2995 = vpack.c.b16 %v2359, %v2347
    %v2996 = vpack.c.b16 %v2360, %v2348
    %v2997 = vpack.c.b16 %v2361, %v2349
    %v2998 = vpack.c.b16 %v2374, %v2362
    %v2999 = vpack.c.b16 %v2375, %v2363
    %v3000 = vpack.c.b16 %v2376, %v2364
    %v3001 = vpack.c.b16 %v2377, %v2365
    %v3002 = vpack.c.b16 %v2378, %v2366
    %v3003 = vpack.c.b16 %v2379, %v2367
    %v3004 = vpack.c.b16 %v2380, %v2368
    %v3005 = vpack.c.b16 %v2381, %v2369
    %v3006 = vpack.c.b16 %v2382, %v2370
    %v3007 = vpack.c.b16 %v2383, %v2371
    %v3008 = vpack.c.b16 %v2384, %v2372
    %v3009 = vpack.c.b16 %v2385, %v2373
    %v3010 = vpack.c.b16 %v2398, %v2386
    %v3011 = vpack.c.b16 %v2399, %v2387
    %v3012 = vpack.c.b16 %v2400, %v2388
    %v3013 = vpack.c.b16 %v2401, %v2389
    %v3014 = vpack.c.b16 %v2402, %v2390
    %v3015 = vpack.c.b16 %v2403, %v2391
    %v3016 = vpack.c.b16 %v2404, %v2392
    %v3017 = vpack.c.b16 %v2405, %v2393
    %v3018 = vpack.c.b16 %v2406, %v2394
    %v3019 = vpack.c.b16 %v2407, %v2395
    %v3020 = vpack.c.b16 %v2408, %v2396
    %v3021 = vpack.c.b16 %v2409, %v2397
    %v3022 = vpack.c.b16 %v2422, %v2410
    %v3023 = vpack.c.b16 %v2423, %v2411
    %v3024 = vpack.c.b16 %v2424, %v2412
    %v3025 = vpack.c.b16 %v2425, %v2413
    %v3026 = vpack.c.b16 %v2426, %v2414
    %v3027 = vpack.c.b16 %v2427, %v2415
    %v3028 = vpack.c.b16 %v2428, %v2416
    %v3029 = vpack.c.b16 %v2429, %v2417
    %v3030 = vpack.c.b16 %v2430, %v2418
    %v3031 = vpack.c.b16 %v2431, %v2419
    %v3032 = vpack.c.b16 %v2432, %v2420
    %v3033 = vpack.c.b16 %v2433, %v2421
    %v3034 = vpack.c.b16 %v2446, %v2434
    %v3035 = vpack.c.b16 %v2447, %v2435
    %v3036 = vpack.c.b16 %v2448, %v2436
    %v3037 = vpack.c.b16 %v2449, %v2437
    %v3038 = vpack.c.b16 %v2450, %v2438
    %v3039 = vpack.c.b16 %v2451, %v2439
    %v3040 = vpack.c.b16 %v2452, %v2440
    %v3041 = vpack.c.b16 %v2453, %v2441
    %v3042 = vpack.c.b16 %v2454, %v2442
    %v3043 = vpack.c.b16 %v2455, %v2443
    %v3044 = vpack.c.b16 %v2456, %v2444
    %v3045 = vpack.c.b16 %v2457, %v2445
    %v3046 = vpack.c.b16 %v2470, %v2458
    %v3047 = vpack.c.b16 %v2471, %v2459
    %v3048 = vpack.c.b16 %v2472, %v2460
    %v3049 = vpack.c.b16 %v2473, %v2461
    %v3050 = vpack.c.b16 %v2474, %v2462
    %v3051 = vpack.c.b16 %v2475, %v2463
    %v3052 = vpack.c.b16 %v2476, %v2464
    %v3053 = vpack.c.b16 %v2477, %v2465
    %v3054 = vpack.c.b16 %v2478, %v2466
    %v3055 = vpack.c.b16 %v2479, %v2467
    %v3056 = vpack.c.b16 %v2480, %v2468
    %v3057 = vpack.c.b16 %v2481, %v2469
    %3634 = vmatpush.bf16.msra.mxu0 %v2566
    %3635 = vmatpush.bf16.msra.mxu0 %v2554
    %3636 = vmatpush.bf16.msra.mxu0 %v2542
    %3637 = vmatpush.bf16.msra.mxu0 %v2530
    %3638 = vmatpush.bf16.msra.mxu0 %v2518
    %3639 = vmatpush.bf16.msra.mxu0 %v2506
    %3640 = vmatpush.bf16.msra.mxu0 %v2494
    %3641 = vmatpush.bf16.msra.mxu0 %v2482
    %3642 = vmatmul.bf16.gmra.mxu0 %v742
    %v3643 = vpop.f32.mrf.mxu0
    %v3644 = vadd.f32 %v700, %v3643
    %v3645 = vpop.f32.mrf.mxu0
    %v3646 = vadd.f32 %v700, %v3645
    %3647 = vdwg.mxu0
    %3648 = vmatpush.bf16.msra.mxu0 %v2662
    %3649 = vmatpush.bf16.msra.mxu0 %v2650
    %3650 = vmatpush.bf16.msra.mxu0 %v2638
    %3651 = vmatpush.bf16.msra.mxu0 %v2626
    %3652 = vmatpush.bf16.msra.mxu0 %v2614
    %3653 = vmatpush.bf16.msra.mxu0 %v2602
    %3654 = vmatpush.bf16.msra.mxu0 %v2590
    %3655 = vmatpush.bf16.msra.mxu0 %v2578
    %3656 = vmatmul.bf16.gmra.mxu0 %v743
    %v3657 = vpop.f32.mrf.mxu0
    %v3658 = vadd.f32 %v3644, %v3657
    %v3659 = vpop.f32.mrf.mxu0
    %v3660 = vadd.f32 %v3646, %v3659
    %3661 = vdwg.mxu0
    %3662 = vmatpush.bf16.msra.mxu0 %v2758
    %3663 = vmatpush.bf16.msra.mxu0 %v2746
    %3664 = vmatpush.bf16.msra.mxu0 %v2734
    %3665 = vmatpush.bf16.msra.mxu0 %v2722
    %3666 = vmatpush.bf16.msra.mxu0 %v2710
    %3667 = vmatpush.bf16.msra.mxu0 %v2698
    %3668 = vmatpush.bf16.msra.mxu0 %v2686
    %3669 = vmatpush.bf16.msra.mxu0 %v2674
    %3670 = vmatmul.bf16.gmra.mxu0 %v744
    %v3671 = vpop.f32.mrf.mxu0
    %v3672 = vadd.f32 %v3658, %v3671
    %v3673 = vpop.f32.mrf.mxu0
    %v3674 = vadd.f32 %v3660, %v3673
    %3675 = vdwg.mxu0
    %3676 = vmatpush.bf16.msra.mxu0 %v2854
    %3677 = vmatpush.bf16.msra.mxu0 %v2842
    %3678 = vmatpush.bf16.msra.mxu0 %v2830
    %3679 = vmatpush.bf16.msra.mxu0 %v2818
    %3680 = vmatpush.bf16.msra.mxu0 %v2806
    %3681 = vmatpush.bf16.msra.mxu0 %v2794
    %3682 = vmatpush.bf16.msra.mxu0 %v2782
    %3683 = vmatpush.bf16.msra.mxu0 %v2770
    %3684 = vmatmul.bf16.gmra.mxu0 %v745
    %v3685 = vpop.f32.mrf.mxu0
    %v3686 = vadd.f32 %v3672, %v3685
    %v3687 = vpop.f32.mrf.mxu0
    %v3688 = vadd.f32 %v3674, %v3687
    %3689 = vdwg.mxu0
    %3690 = vmatpush.bf16.msra.mxu0 %v2950
    %3691 = vmatpush.bf16.msra.mxu0 %v2938
    %3692 = vmatpush.bf16.msra.mxu0 %v2926
    %3693 = vmatpush.bf16.msra.mxu0 %v2914
    %3694 = vmatpush.bf16.msra.mxu0 %v2902
    %3695 = vmatpush.bf16.msra.mxu0 %v2890
    %3696 = vmatpush.bf16.msra.mxu0 %v2878
    %3697 = vmatpush.bf16.msra.mxu0 %v2866
    %3698 = vmatmul.bf16.gmra.mxu0 %v746
    %v3699 = vpop.f32.mrf.mxu0
    %v3700 = vadd.f32 %v3686, %v3699
    %v3701 = vpop.f32.mrf.mxu0
    %v3702 = vadd.f32 %v3688, %v3701
    %3703 = vdwg.mxu0
    %3704 = vmatpush.bf16.msra.mxu0 %v3046
    %3705 = vmatpush.bf16.msra.mxu0 %v3034
    %3706 = vmatpush.bf16.msra.mxu0 %v3022
    %3707 = vmatpush.bf16.msra.mxu0 %v3010
    %3708 = vmatpush.bf16.msra.mxu0 %v2998
    %3709 = vmatpush.bf16.msra.mxu0 %v2986
    %3710 = vmatpush.bf16.msra.mxu0 %v2974
    %3711 = vmatpush.bf16.msra.mxu0 %v2962
    %3712 = vmatmul.bf16.gmra.mxu0 %v747
    %v3713 = vpop.f32.mrf.mxu0
    %v3714 = vadd.f32 %v3700, %v3713
    %v3715 = vpop.f32.mrf.mxu0
    %v3716 = vadd.f32 %v3702, %v3715
    %3717 = vdwg.mxu0
    %3718 = vmatpush.bf16.msra.mxu0 %v2567
    %3719 = vmatpush.bf16.msra.mxu0 %v2555
    %3720 = vmatpush.bf16.msra.mxu0 %v2543
    %3721 = vmatpush.bf16.msra.mxu0 %v2531
    %3722 = vmatpush.bf16.msra.mxu0 %v2519
    %3723 = vmatpush.bf16.msra.mxu0 %v2507
    %3724 = vmatpush.bf16.msra.mxu0 %v2495
    %3725 = vmatpush.bf16.msra.mxu0 %v2483
    %3726 = vmatmul.bf16.gmra.mxu0 %v742
    %v3727 = vpop.f32.mrf.mxu0
    %v3728 = vadd.f32 %v701, %v3727
    %v3729 = vpop.f32.mrf.mxu0
    %v3730 = vadd.f32 %v701, %v3729
    %3731 = vdwg.mxu0
    %3732 = vmatpush.bf16.msra.mxu0 %v2663
    %3733 = vmatpush.bf16.msra.mxu0 %v2651
    %3734 = vmatpush.bf16.msra.mxu0 %v2639
    %3735 = vmatpush.bf16.msra.mxu0 %v2627
    %3736 = vmatpush.bf16.msra.mxu0 %v2615
    %3737 = vmatpush.bf16.msra.mxu0 %v2603
    %3738 = vmatpush.bf16.msra.mxu0 %v2591
    %3739 = vmatpush.bf16.msra.mxu0 %v2579
    %3740 = vmatmul.bf16.gmra.mxu0 %v743
    %v3741 = vpop.f32.mrf.mxu0
    %v3742 = vadd.f32 %v3728, %v3741
    %v3743 = vpop.f32.mrf.mxu0
    %v3744 = vadd.f32 %v3730, %v3743
    %3745 = vdwg.mxu0
    %3746 = vmatpush.bf16.msra.mxu0 %v2759
    %3747 = vmatpush.bf16.msra.mxu0 %v2747
    %3748 = vmatpush.bf16.msra.mxu0 %v2735
    %3749 = vmatpush.bf16.msra.mxu0 %v2723
    %3750 = vmatpush.bf16.msra.mxu0 %v2711
    %3751 = vmatpush.bf16.msra.mxu0 %v2699
    %3752 = vmatpush.bf16.msra.mxu0 %v2687
    %3753 = vmatpush.bf16.msra.mxu0 %v2675
    %3754 = vmatmul.bf16.gmra.mxu0 %v744
    %v3755 = vpop.f32.mrf.mxu0
    %v3756 = vadd.f32 %v3742, %v3755
    %v3757 = vpop.f32.mrf.mxu0
    %v3758 = vadd.f32 %v3744, %v3757
    %3759 = vdwg.mxu0
    %3760 = vmatpush.bf16.msra.mxu0 %v2855
    %3761 = vmatpush.bf16.msra.mxu0 %v2843
    %3762 = vmatpush.bf16.msra.mxu0 %v2831
    %3763 = vmatpush.bf16.msra.mxu0 %v2819
    %3764 = vmatpush.bf16.msra.mxu0 %v2807
    %3765 = vmatpush.bf16.msra.mxu0 %v2795
    %3766 = vmatpush.bf16.msra.mxu0 %v2783
    %3767 = vmatpush.bf16.msra.mxu0 %v2771
    %3768 = vmatmul.bf16.gmra.mxu0 %v745
    %v3769 = vpop.f32.mrf.mxu0
    %v3770 = vadd.f32 %v3756, %v3769
    %v3771 = vpop.f32.mrf.mxu0
    %v3772 = vadd.f32 %v3758, %v3771
    %3773 = vdwg.mxu0
    %3774 = vmatpush.bf16.msra.mxu0 %v2951
    %3775 = vmatpush.bf16.msra.mxu0 %v2939
    %3776 = vmatpush.bf16.msra.mxu0 %v2927
    %3777 = vmatpush.bf16.msra.mxu0 %v2915
    %3778 = vmatpush.bf16.msra.mxu0 %v2903
    %3779 = vmatpush.bf16.msra.mxu0 %v2891
    %3780 = vmatpush.bf16.msra.mxu0 %v2879
    %3781 = vmatpush.bf16.msra.mxu0 %v2867
    %3782 = vmatmul.bf16.gmra.mxu0 %v746
    %v3783 = vpop.f32.mrf.mxu0
    %v3784 = vadd.f32 %v3770, %v3783
    %v3785 = vpop.f32.mrf.mxu0
    %v3786 = vadd.f32 %v3772, %v3785
    %3787 = vdwg.mxu0
    %3788 = vmatpush.bf16.msra.mxu0 %v3047
    %3789 = vmatpush.bf16.msra.mxu0 %v3035
    %3790 = vmatpush.bf16.msra.mxu0 %v3023
    %3791 = vmatpush.bf16.msra.mxu0 %v3011
    %3792 = vmatpush.bf16.msra.mxu0 %v2999
    %3793 = vmatpush.bf16.msra.mxu0 %v2987
    %3794 = vmatpush.bf16.msra.mxu0 %v2975
    %3795 = vmatpush.bf16.msra.mxu0 %v2963
    %3796 = vmatmul.bf16.gmra.mxu0 %v747
    %v3797 = vpop.f32.mrf.mxu0
    %v3798 = vadd.f32 %v3784, %v3797
    %v3799 = vpop.f32.mrf.mxu0
    %v3800 = vadd.f32 %v3786, %v3799
    %3801 = vdwg.mxu0
    %3802 = vmatpush.bf16.msra.mxu0 %v2568
    %3803 = vmatpush.bf16.msra.mxu0 %v2556
    %3804 = vmatpush.bf16.msra.mxu0 %v2544
    %3805 = vmatpush.bf16.msra.mxu0 %v2532
    %3806 = vmatpush.bf16.msra.mxu0 %v2520
    %3807 = vmatpush.bf16.msra.mxu0 %v2508
    %3808 = vmatpush.bf16.msra.mxu0 %v2496
    %3809 = vmatpush.bf16.msra.mxu0 %v2484
    %3810 = vmatmul.bf16.gmra.mxu0 %v742
    %v3811 = vpop.f32.mrf.mxu0
    %v3812 = vadd.f32 %v702, %v3811
    %v3813 = vpop.f32.mrf.mxu0
    %v3814 = vadd.f32 %v702, %v3813
    %3815 = vdwg.mxu0
    %3816 = vmatpush.bf16.msra.mxu0 %v2664
    %3817 = vmatpush.bf16.msra.mxu0 %v2652
    %3818 = vmatpush.bf16.msra.mxu0 %v2640
    %3819 = vmatpush.bf16.msra.mxu0 %v2628
    %3820 = vmatpush.bf16.msra.mxu0 %v2616
    %3821 = vmatpush.bf16.msra.mxu0 %v2604
    %3822 = vmatpush.bf16.msra.mxu0 %v2592
    %3823 = vmatpush.bf16.msra.mxu0 %v2580
    %3824 = vmatmul.bf16.gmra.mxu0 %v743
    %v3825 = vpop.f32.mrf.mxu0
    %v3826 = vadd.f32 %v3812, %v3825
    %v3827 = vpop.f32.mrf.mxu0
    %v3828 = vadd.f32 %v3814, %v3827
    %3829 = vdwg.mxu0
    %3830 = vmatpush.bf16.msra.mxu0 %v2760
    %3831 = vmatpush.bf16.msra.mxu0 %v2748
    %3832 = vmatpush.bf16.msra.mxu0 %v2736
    %3833 = vmatpush.bf16.msra.mxu0 %v2724
    %3834 = vmatpush.bf16.msra.mxu0 %v2712
    %3835 = vmatpush.bf16.msra.mxu0 %v2700
    %3836 = vmatpush.bf16.msra.mxu0 %v2688
    %3837 = vmatpush.bf16.msra.mxu0 %v2676
    %3838 = vmatmul.bf16.gmra.mxu0 %v744
    %v3839 = vpop.f32.mrf.mxu0
    %v3840 = vadd.f32 %v3826, %v3839
    %v3841 = vpop.f32.mrf.mxu0
    %v3842 = vadd.f32 %v3828, %v3841
    %3843 = vdwg.mxu0
    %3844 = vmatpush.bf16.msra.mxu0 %v2856
    %3845 = vmatpush.bf16.msra.mxu0 %v2844
    %3846 = vmatpush.bf16.msra.mxu0 %v2832
    %3847 = vmatpush.bf16.msra.mxu0 %v2820
    %3848 = vmatpush.bf16.msra.mxu0 %v2808
    %3849 = vmatpush.bf16.msra.mxu0 %v2796
    %3850 = vmatpush.bf16.msra.mxu0 %v2784
    %3851 = vmatpush.bf16.msra.mxu0 %v2772
    %3852 = vmatmul.bf16.gmra.mxu0 %v745
    %v3853 = vpop.f32.mrf.mxu0
    %v3854 = vadd.f32 %v3840, %v3853
    %v3855 = vpop.f32.mrf.mxu0
    %v3856 = vadd.f32 %v3842, %v3855
    %3857 = vdwg.mxu0
    %3858 = vmatpush.bf16.msra.mxu0 %v2952
    %3859 = vmatpush.bf16.msra.mxu0 %v2940
    %3860 = vmatpush.bf16.msra.mxu0 %v2928
    %3861 = vmatpush.bf16.msra.mxu0 %v2916
    %3862 = vmatpush.bf16.msra.mxu0 %v2904
    %3863 = vmatpush.bf16.msra.mxu0 %v2892
    %3864 = vmatpush.bf16.msra.mxu0 %v2880
    %3865 = vmatpush.bf16.msra.mxu0 %v2868
    %3866 = vmatmul.bf16.gmra.mxu0 %v746
    %v3867 = vpop.f32.mrf.mxu0
    %v3868 = vadd.f32 %v3854, %v3867
    %v3869 = vpop.f32.mrf.mxu0
    %v3870 = vadd.f32 %v3856, %v3869
    %3871 = vdwg.mxu0
    %3872 = vmatpush.bf16.msra.mxu0 %v3048
    %3873 = vmatpush.bf16.msra.mxu0 %v3036
    %3874 = vmatpush.bf16.msra.mxu0 %v3024
    %3875 = vmatpush.bf16.msra.mxu0 %v3012
    %3876 = vmatpush.bf16.msra.mxu0 %v3000
    %3877 = vmatpush.bf16.msra.mxu0 %v2988
    %3878 = vmatpush.bf16.msra.mxu0 %v2976
    %3879 = vmatpush.bf16.msra.mxu0 %v2964
    %3880 = vmatmul.bf16.gmra.mxu0 %v747
    %v3881 = vpop.f32.mrf.mxu0
    %v3882 = vadd.f32 %v3868, %v3881
    %v3883 = vpop.f32.mrf.mxu0
    %v3884 = vadd.f32 %v3870, %v3883
    %3885 = vdwg.mxu0
    %3886 = vmatpush.bf16.msra.mxu0 %v2569
    %3887 = vmatpush.bf16.msra.mxu0 %v2557
    %3888 = vmatpush.bf16.msra.mxu0 %v2545
    %3889 = vmatpush.bf16.msra.mxu0 %v2533
    %3890 = vmatpush.bf16.msra.mxu0 %v2521
    %3891 = vmatpush.bf16.msra.mxu0 %v2509
    %3892 = vmatpush.bf16.msra.mxu0 %v2497
    %3893 = vmatpush.bf16.msra.mxu0 %v2485
    %3894 = vmatmul.bf16.gmra.mxu0 %v742
    %v3895 = vpop.f32.mrf.mxu0
    %v3896 = vadd.f32 %v703, %v3895
    %v3897 = vpop.f32.mrf.mxu0
    %v3898 = vadd.f32 %v703, %v3897
    %3899 = vdwg.mxu0
    %3900 = vmatpush.bf16.msra.mxu0 %v2665
    %3901 = vmatpush.bf16.msra.mxu0 %v2653
    %3902 = vmatpush.bf16.msra.mxu0 %v2641
    %3903 = vmatpush.bf16.msra.mxu0 %v2629
    %3904 = vmatpush.bf16.msra.mxu0 %v2617
    %3905 = vmatpush.bf16.msra.mxu0 %v2605
    %3906 = vmatpush.bf16.msra.mxu0 %v2593
    %3907 = vmatpush.bf16.msra.mxu0 %v2581
    %3908 = vmatmul.bf16.gmra.mxu0 %v743
    %v3909 = vpop.f32.mrf.mxu0
    %v3910 = vadd.f32 %v3896, %v3909
    %v3911 = vpop.f32.mrf.mxu0
    %v3912 = vadd.f32 %v3898, %v3911
    %3913 = vdwg.mxu0
    %3914 = vmatpush.bf16.msra.mxu0 %v2761
    %3915 = vmatpush.bf16.msra.mxu0 %v2749
    %3916 = vmatpush.bf16.msra.mxu0 %v2737
    %3917 = vmatpush.bf16.msra.mxu0 %v2725
    %3918 = vmatpush.bf16.msra.mxu0 %v2713
    %3919 = vmatpush.bf16.msra.mxu0 %v2701
    %3920 = vmatpush.bf16.msra.mxu0 %v2689
    %3921 = vmatpush.bf16.msra.mxu0 %v2677
    %3922 = vmatmul.bf16.gmra.mxu0 %v744
    %v3923 = vpop.f32.mrf.mxu0
    %v3924 = vadd.f32 %v3910, %v3923
    %v3925 = vpop.f32.mrf.mxu0
    %v3926 = vadd.f32 %v3912, %v3925
    %3927 = vdwg.mxu0
    %3928 = vmatpush.bf16.msra.mxu0 %v2857
    %3929 = vmatpush.bf16.msra.mxu0 %v2845
    %3930 = vmatpush.bf16.msra.mxu0 %v2833
    %3931 = vmatpush.bf16.msra.mxu0 %v2821
    %3932 = vmatpush.bf16.msra.mxu0 %v2809
    %3933 = vmatpush.bf16.msra.mxu0 %v2797
    %3934 = vmatpush.bf16.msra.mxu0 %v2785
    %3935 = vmatpush.bf16.msra.mxu0 %v2773
    %3936 = vmatmul.bf16.gmra.mxu0 %v745
    %v3937 = vpop.f32.mrf.mxu0
    %v3938 = vadd.f32 %v3924, %v3937
    %v3939 = vpop.f32.mrf.mxu0
    %v3940 = vadd.f32 %v3926, %v3939
    %3941 = vdwg.mxu0
    %3942 = vmatpush.bf16.msra.mxu0 %v2953
    %3943 = vmatpush.bf16.msra.mxu0 %v2941
    %3944 = vmatpush.bf16.msra.mxu0 %v2929
    %3945 = vmatpush.bf16.msra.mxu0 %v2917
    %3946 = vmatpush.bf16.msra.mxu0 %v2905
    %3947 = vmatpush.bf16.msra.mxu0 %v2893
    %3948 = vmatpush.bf16.msra.mxu0 %v2881
    %3949 = vmatpush.bf16.msra.mxu0 %v2869
    %3950 = vmatmul.bf16.gmra.mxu0 %v746
    %v3951 = vpop.f32.mrf.mxu0
    %v3952 = vadd.f32 %v3938, %v3951
    %v3953 = vpop.f32.mrf.mxu0
    %v3954 = vadd.f32 %v3940, %v3953
    %3955 = vdwg.mxu0
    %3956 = vmatpush.bf16.msra.mxu0 %v3049
    %3957 = vmatpush.bf16.msra.mxu0 %v3037
    %3958 = vmatpush.bf16.msra.mxu0 %v3025
    %3959 = vmatpush.bf16.msra.mxu0 %v3013
    %3960 = vmatpush.bf16.msra.mxu0 %v3001
    %3961 = vmatpush.bf16.msra.mxu0 %v2989
    %3962 = vmatpush.bf16.msra.mxu0 %v2977
    %3963 = vmatpush.bf16.msra.mxu0 %v2965
    %3964 = vmatmul.bf16.gmra.mxu0 %v747
    %v3965 = vpop.f32.mrf.mxu0
    %v3966 = vadd.f32 %v3952, %v3965
    %v3967 = vpop.f32.mrf.mxu0
    %v3968 = vadd.f32 %v3954, %v3967
    %3969 = vdwg.mxu0
    %3970 = vmatpush.bf16.msra.mxu0 %v2570
    %3971 = vmatpush.bf16.msra.mxu0 %v2558
    %3972 = vmatpush.bf16.msra.mxu0 %v2546
    %3973 = vmatpush.bf16.msra.mxu0 %v2534
    %3974 = vmatpush.bf16.msra.mxu0 %v2522
    %3975 = vmatpush.bf16.msra.mxu0 %v2510
    %3976 = vmatpush.bf16.msra.mxu0 %v2498
    %3977 = vmatpush.bf16.msra.mxu0 %v2486
    %3978 = vmatmul.bf16.gmra.mxu0 %v742
    %v3979 = vpop.f32.mrf.mxu0
    %v3980 = vadd.f32 %v704, %v3979
    %v3981 = vpop.f32.mrf.mxu0
    %v3982 = vadd.f32 %v704, %v3981
    %3983 = vdwg.mxu0
    %3984 = vmatpush.bf16.msra.mxu0 %v2666
    %3985 = vmatpush.bf16.msra.mxu0 %v2654
    %3986 = vmatpush.bf16.msra.mxu0 %v2642
    %3987 = vmatpush.bf16.msra.mxu0 %v2630
    %3988 = vmatpush.bf16.msra.mxu0 %v2618
    %3989 = vmatpush.bf16.msra.mxu0 %v2606
    %3990 = vmatpush.bf16.msra.mxu0 %v2594
    %3991 = vmatpush.bf16.msra.mxu0 %v2582
    %3992 = vmatmul.bf16.gmra.mxu0 %v743
    %v3993 = vpop.f32.mrf.mxu0
    %v3994 = vadd.f32 %v3980, %v3993
    %v3995 = vpop.f32.mrf.mxu0
    %v3996 = vadd.f32 %v3982, %v3995
    %3997 = vdwg.mxu0
    %3998 = vmatpush.bf16.msra.mxu0 %v2762
    %3999 = vmatpush.bf16.msra.mxu0 %v2750
    %4000 = vmatpush.bf16.msra.mxu0 %v2738
    %4001 = vmatpush.bf16.msra.mxu0 %v2726
    %4002 = vmatpush.bf16.msra.mxu0 %v2714
    %4003 = vmatpush.bf16.msra.mxu0 %v2702
    %4004 = vmatpush.bf16.msra.mxu0 %v2690
    %4005 = vmatpush.bf16.msra.mxu0 %v2678
    %4006 = vmatmul.bf16.gmra.mxu0 %v744
    %v4007 = vpop.f32.mrf.mxu0
    %v4008 = vadd.f32 %v3994, %v4007
    %v4009 = vpop.f32.mrf.mxu0
    %v4010 = vadd.f32 %v3996, %v4009
    %4011 = vdwg.mxu0
    %4012 = vmatpush.bf16.msra.mxu0 %v2858
    %4013 = vmatpush.bf16.msra.mxu0 %v2846
    %4014 = vmatpush.bf16.msra.mxu0 %v2834
    %4015 = vmatpush.bf16.msra.mxu0 %v2822
    %4016 = vmatpush.bf16.msra.mxu0 %v2810
    %4017 = vmatpush.bf16.msra.mxu0 %v2798
    %4018 = vmatpush.bf16.msra.mxu0 %v2786
    %4019 = vmatpush.bf16.msra.mxu0 %v2774
    %4020 = vmatmul.bf16.gmra.mxu0 %v745
    %v4021 = vpop.f32.mrf.mxu0
    %v4022 = vadd.f32 %v4008, %v4021
    %v4023 = vpop.f32.mrf.mxu0
    %v4024 = vadd.f32 %v4010, %v4023
    %4025 = vdwg.mxu0
    %4026 = vmatpush.bf16.msra.mxu0 %v2954
    %4027 = vmatpush.bf16.msra.mxu0 %v2942
    %4028 = vmatpush.bf16.msra.mxu0 %v2930
    %4029 = vmatpush.bf16.msra.mxu0 %v2918
    %4030 = vmatpush.bf16.msra.mxu0 %v2906
    %4031 = vmatpush.bf16.msra.mxu0 %v2894
    %4032 = vmatpush.bf16.msra.mxu0 %v2882
    %4033 = vmatpush.bf16.msra.mxu0 %v2870
    %4034 = vmatmul.bf16.gmra.mxu0 %v746
    %v4035 = vpop.f32.mrf.mxu0
    %v4036 = vadd.f32 %v4022, %v4035
    %v4037 = vpop.f32.mrf.mxu0
    %v4038 = vadd.f32 %v4024, %v4037
    %4039 = vdwg.mxu0
    %4040 = vmatpush.bf16.msra.mxu0 %v3050
    %4041 = vmatpush.bf16.msra.mxu0 %v3038
    %4042 = vmatpush.bf16.msra.mxu0 %v3026
    %4043 = vmatpush.bf16.msra.mxu0 %v3014
    %4044 = vmatpush.bf16.msra.mxu0 %v3002
    %4045 = vmatpush.bf16.msra.mxu0 %v2990
    %4046 = vmatpush.bf16.msra.mxu0 %v2978
    %4047 = vmatpush.bf16.msra.mxu0 %v2966
    %4048 = vmatmul.bf16.gmra.mxu0 %v747
    %v4049 = vpop.f32.mrf.mxu0
    %v4050 = vadd.f32 %v4036, %v4049
    %v4051 = vpop.f32.mrf.mxu0
    %v4052 = vadd.f32 %v4038, %v4051
    %4053 = vdwg.mxu0
    %4054 = vmatpush.bf16.msra.mxu0 %v2571
    %4055 = vmatpush.bf16.msra.mxu0 %v2559
    %4056 = vmatpush.bf16.msra.mxu0 %v2547
    %4057 = vmatpush.bf16.msra.mxu0 %v2535
    %4058 = vmatpush.bf16.msra.mxu0 %v2523
    %4059 = vmatpush.bf16.msra.mxu0 %v2511
    %4060 = vmatpush.bf16.msra.mxu0 %v2499
    %4061 = vmatpush.bf16.msra.mxu0 %v2487
    %4062 = vmatmul.bf16.gmra.mxu0 %v742
    %v4063 = vpop.f32.mrf.mxu0
    %v4064 = vadd.f32 %v705, %v4063
    %v4065 = vpop.f32.mrf.mxu0
    %v4066 = vadd.f32 %v705, %v4065
    %4067 = vdwg.mxu0
    %4068 = vmatpush.bf16.msra.mxu0 %v2667
    %4069 = vmatpush.bf16.msra.mxu0 %v2655
    %4070 = vmatpush.bf16.msra.mxu0 %v2643
    %4071 = vmatpush.bf16.msra.mxu0 %v2631
    %4072 = vmatpush.bf16.msra.mxu0 %v2619
    %4073 = vmatpush.bf16.msra.mxu0 %v2607
    %4074 = vmatpush.bf16.msra.mxu0 %v2595
    %4075 = vmatpush.bf16.msra.mxu0 %v2583
    %4076 = vmatmul.bf16.gmra.mxu0 %v743
    %v4077 = vpop.f32.mrf.mxu0
    %v4078 = vadd.f32 %v4064, %v4077
    %v4079 = vpop.f32.mrf.mxu0
    %v4080 = vadd.f32 %v4066, %v4079
    %4081 = vdwg.mxu0
    %4082 = vmatpush.bf16.msra.mxu0 %v2763
    %4083 = vmatpush.bf16.msra.mxu0 %v2751
    %4084 = vmatpush.bf16.msra.mxu0 %v2739
    %4085 = vmatpush.bf16.msra.mxu0 %v2727
    %4086 = vmatpush.bf16.msra.mxu0 %v2715
    %4087 = vmatpush.bf16.msra.mxu0 %v2703
    %4088 = vmatpush.bf16.msra.mxu0 %v2691
    %4089 = vmatpush.bf16.msra.mxu0 %v2679
    %4090 = vmatmul.bf16.gmra.mxu0 %v744
    %v4091 = vpop.f32.mrf.mxu0
    %v4092 = vadd.f32 %v4078, %v4091
    %v4093 = vpop.f32.mrf.mxu0
    %v4094 = vadd.f32 %v4080, %v4093
    %4095 = vdwg.mxu0
    %4096 = vmatpush.bf16.msra.mxu0 %v2859
    %4097 = vmatpush.bf16.msra.mxu0 %v2847
    %4098 = vmatpush.bf16.msra.mxu0 %v2835
    %4099 = vmatpush.bf16.msra.mxu0 %v2823
    %4100 = vmatpush.bf16.msra.mxu0 %v2811
    %4101 = vmatpush.bf16.msra.mxu0 %v2799
    %4102 = vmatpush.bf16.msra.mxu0 %v2787
    %4103 = vmatpush.bf16.msra.mxu0 %v2775
    %4104 = vmatmul.bf16.gmra.mxu0 %v745
    %v4105 = vpop.f32.mrf.mxu0
    %v4106 = vadd.f32 %v4092, %v4105
    %v4107 = vpop.f32.mrf.mxu0
    %v4108 = vadd.f32 %v4094, %v4107
    %4109 = vdwg.mxu0
    %4110 = vmatpush.bf16.msra.mxu0 %v2955
    %4111 = vmatpush.bf16.msra.mxu0 %v2943
    %4112 = vmatpush.bf16.msra.mxu0 %v2931
    %4113 = vmatpush.bf16.msra.mxu0 %v2919
    %4114 = vmatpush.bf16.msra.mxu0 %v2907
    %4115 = vmatpush.bf16.msra.mxu0 %v2895
    %4116 = vmatpush.bf16.msra.mxu0 %v2883
    %4117 = vmatpush.bf16.msra.mxu0 %v2871
    %4118 = vmatmul.bf16.gmra.mxu0 %v746
    %v4119 = vpop.f32.mrf.mxu0
    %v4120 = vadd.f32 %v4106, %v4119
    %v4121 = vpop.f32.mrf.mxu0
    %v4122 = vadd.f32 %v4108, %v4121
    %4123 = vdwg.mxu0
    %4124 = vmatpush.bf16.msra.mxu0 %v3051
    %4125 = vmatpush.bf16.msra.mxu0 %v3039
    %4126 = vmatpush.bf16.msra.mxu0 %v3027
    %4127 = vmatpush.bf16.msra.mxu0 %v3015
    %4128 = vmatpush.bf16.msra.mxu0 %v3003
    %4129 = vmatpush.bf16.msra.mxu0 %v2991
    %4130 = vmatpush.bf16.msra.mxu0 %v2979
    %4131 = vmatpush.bf16.msra.mxu0 %v2967
    %4132 = vmatmul.bf16.gmra.mxu0 %v747
    %v4133 = vpop.f32.mrf.mxu0
    %v4134 = vadd.f32 %v4120, %v4133
    %v4135 = vpop.f32.mrf.mxu0
    %v4136 = vadd.f32 %v4122, %v4135
    %4137 = vdwg.mxu0
    %4138 = vmatpush.bf16.msra.mxu0 %v2572
    %4139 = vmatpush.bf16.msra.mxu0 %v2560
    %4140 = vmatpush.bf16.msra.mxu0 %v2548
    %4141 = vmatpush.bf16.msra.mxu0 %v2536
    %4142 = vmatpush.bf16.msra.mxu0 %v2524
    %4143 = vmatpush.bf16.msra.mxu0 %v2512
    %4144 = vmatpush.bf16.msra.mxu0 %v2500
    %4145 = vmatpush.bf16.msra.mxu0 %v2488
    %4146 = vmatmul.bf16.gmra.mxu0 %v742
    %v4147 = vpop.f32.mrf.mxu0
    %v4148 = vadd.f32 %v706, %v4147
    %v4149 = vpop.f32.mrf.mxu0
    %v4150 = vadd.f32 %v706, %v4149
    %4151 = vdwg.mxu0
    %4152 = vmatpush.bf16.msra.mxu0 %v2668
    %4153 = vmatpush.bf16.msra.mxu0 %v2656
    %4154 = vmatpush.bf16.msra.mxu0 %v2644
    %4155 = vmatpush.bf16.msra.mxu0 %v2632
    %4156 = vmatpush.bf16.msra.mxu0 %v2620
    %4157 = vmatpush.bf16.msra.mxu0 %v2608
    %4158 = vmatpush.bf16.msra.mxu0 %v2596
    %4159 = vmatpush.bf16.msra.mxu0 %v2584
    %4160 = vmatmul.bf16.gmra.mxu0 %v743
    %v4161 = vpop.f32.mrf.mxu0
    %v4162 = vadd.f32 %v4148, %v4161
    %v4163 = vpop.f32.mrf.mxu0
    %v4164 = vadd.f32 %v4150, %v4163
    %4165 = vdwg.mxu0
    %4166 = vmatpush.bf16.msra.mxu0 %v2764
    %4167 = vmatpush.bf16.msra.mxu0 %v2752
    %4168 = vmatpush.bf16.msra.mxu0 %v2740
    %4169 = vmatpush.bf16.msra.mxu0 %v2728
    %4170 = vmatpush.bf16.msra.mxu0 %v2716
    %4171 = vmatpush.bf16.msra.mxu0 %v2704
    %4172 = vmatpush.bf16.msra.mxu0 %v2692
    %4173 = vmatpush.bf16.msra.mxu0 %v2680
    %4174 = vmatmul.bf16.gmra.mxu0 %v744
    %v4175 = vpop.f32.mrf.mxu0
    %v4176 = vadd.f32 %v4162, %v4175
    %v4177 = vpop.f32.mrf.mxu0
    %v4178 = vadd.f32 %v4164, %v4177
    %4179 = vdwg.mxu0
    %4180 = vmatpush.bf16.msra.mxu0 %v2860
    %4181 = vmatpush.bf16.msra.mxu0 %v2848
    %4182 = vmatpush.bf16.msra.mxu0 %v2836
    %4183 = vmatpush.bf16.msra.mxu0 %v2824
    %4184 = vmatpush.bf16.msra.mxu0 %v2812
    %4185 = vmatpush.bf16.msra.mxu0 %v2800
    %4186 = vmatpush.bf16.msra.mxu0 %v2788
    %4187 = vmatpush.bf16.msra.mxu0 %v2776
    %4188 = vmatmul.bf16.gmra.mxu0 %v745
    %v4189 = vpop.f32.mrf.mxu0
    %v4190 = vadd.f32 %v4176, %v4189
    %v4191 = vpop.f32.mrf.mxu0
    %v4192 = vadd.f32 %v4178, %v4191
    %4193 = vdwg.mxu0
    %4194 = vmatpush.bf16.msra.mxu0 %v2956
    %4195 = vmatpush.bf16.msra.mxu0 %v2944
    %4196 = vmatpush.bf16.msra.mxu0 %v2932
    %4197 = vmatpush.bf16.msra.mxu0 %v2920
    %4198 = vmatpush.bf16.msra.mxu0 %v2908
    %4199 = vmatpush.bf16.msra.mxu0 %v2896
    %4200 = vmatpush.bf16.msra.mxu0 %v2884
    %4201 = vmatpush.bf16.msra.mxu0 %v2872
    %4202 = vmatmul.bf16.gmra.mxu0 %v746
    %v4203 = vpop.f32.mrf.mxu0
    %v4204 = vadd.f32 %v4190, %v4203
    %v4205 = vpop.f32.mrf.mxu0
    %v4206 = vadd.f32 %v4192, %v4205
    %4207 = vdwg.mxu0
    %4208 = vmatpush.bf16.msra.mxu0 %v3052
    %4209 = vmatpush.bf16.msra.mxu0 %v3040
    %4210 = vmatpush.bf16.msra.mxu0 %v3028
    %4211 = vmatpush.bf16.msra.mxu0 %v3016
    %4212 = vmatpush.bf16.msra.mxu0 %v3004
    %4213 = vmatpush.bf16.msra.mxu0 %v2992
    %4214 = vmatpush.bf16.msra.mxu0 %v2980
    %4215 = vmatpush.bf16.msra.mxu0 %v2968
    %4216 = vmatmul.bf16.gmra.mxu0 %v747
    %v4217 = vpop.f32.mrf.mxu0
    %v4218 = vadd.f32 %v4204, %v4217
    %v4219 = vpop.f32.mrf.mxu0
    %v4220 = vadd.f32 %v4206, %v4219
    %4221 = vdwg.mxu0
    %4222 = vmatpush.bf16.msra.mxu0 %v2573
    %4223 = vmatpush.bf16.msra.mxu0 %v2561
    %4224 = vmatpush.bf16.msra.mxu0 %v2549
    %4225 = vmatpush.bf16.msra.mxu0 %v2537
    %4226 = vmatpush.bf16.msra.mxu0 %v2525
    %4227 = vmatpush.bf16.msra.mxu0 %v2513
    %4228 = vmatpush.bf16.msra.mxu0 %v2501
    %4229 = vmatpush.bf16.msra.mxu0 %v2489
    %4230 = vmatmul.bf16.gmra.mxu0 %v742
    %v4231 = vpop.f32.mrf.mxu0
    %v4232 = vadd.f32 %v707, %v4231
    %v4233 = vpop.f32.mrf.mxu0
    %v4234 = vadd.f32 %v707, %v4233
    %4235 = vdwg.mxu0
    %4236 = vmatpush.bf16.msra.mxu0 %v2669
    %4237 = vmatpush.bf16.msra.mxu0 %v2657
    %4238 = vmatpush.bf16.msra.mxu0 %v2645
    %4239 = vmatpush.bf16.msra.mxu0 %v2633
    %4240 = vmatpush.bf16.msra.mxu0 %v2621
    %4241 = vmatpush.bf16.msra.mxu0 %v2609
    %4242 = vmatpush.bf16.msra.mxu0 %v2597
    %4243 = vmatpush.bf16.msra.mxu0 %v2585
    %4244 = vmatmul.bf16.gmra.mxu0 %v743
    %v4245 = vpop.f32.mrf.mxu0
    %v4246 = vadd.f32 %v4232, %v4245
    %v4247 = vpop.f32.mrf.mxu0
    %v4248 = vadd.f32 %v4234, %v4247
    %4249 = vdwg.mxu0
    %4250 = vmatpush.bf16.msra.mxu0 %v2765
    %4251 = vmatpush.bf16.msra.mxu0 %v2753
    %4252 = vmatpush.bf16.msra.mxu0 %v2741
    %4253 = vmatpush.bf16.msra.mxu0 %v2729
    %4254 = vmatpush.bf16.msra.mxu0 %v2717
    %4255 = vmatpush.bf16.msra.mxu0 %v2705
    %4256 = vmatpush.bf16.msra.mxu0 %v2693
    %4257 = vmatpush.bf16.msra.mxu0 %v2681
    %4258 = vmatmul.bf16.gmra.mxu0 %v744
    %v4259 = vpop.f32.mrf.mxu0
    %v4260 = vadd.f32 %v4246, %v4259
    %v4261 = vpop.f32.mrf.mxu0
    %v4262 = vadd.f32 %v4248, %v4261
    %4263 = vdwg.mxu0
    %4264 = vmatpush.bf16.msra.mxu0 %v2861
    %4265 = vmatpush.bf16.msra.mxu0 %v2849
    %4266 = vmatpush.bf16.msra.mxu0 %v2837
    %4267 = vmatpush.bf16.msra.mxu0 %v2825
    %4268 = vmatpush.bf16.msra.mxu0 %v2813
    %4269 = vmatpush.bf16.msra.mxu0 %v2801
    %4270 = vmatpush.bf16.msra.mxu0 %v2789
    %4271 = vmatpush.bf16.msra.mxu0 %v2777
    %4272 = vmatmul.bf16.gmra.mxu0 %v745
    %v4273 = vpop.f32.mrf.mxu0
    %v4274 = vadd.f32 %v4260, %v4273
    %v4275 = vpop.f32.mrf.mxu0
    %v4276 = vadd.f32 %v4262, %v4275
    %4277 = vdwg.mxu0
    %4278 = vmatpush.bf16.msra.mxu0 %v2957
    %4279 = vmatpush.bf16.msra.mxu0 %v2945
    %4280 = vmatpush.bf16.msra.mxu0 %v2933
    %4281 = vmatpush.bf16.msra.mxu0 %v2921
    %4282 = vmatpush.bf16.msra.mxu0 %v2909
    %4283 = vmatpush.bf16.msra.mxu0 %v2897
    %4284 = vmatpush.bf16.msra.mxu0 %v2885
    %4285 = vmatpush.bf16.msra.mxu0 %v2873
    %4286 = vmatmul.bf16.gmra.mxu0 %v746
    %v4287 = vpop.f32.mrf.mxu0
    %v4288 = vadd.f32 %v4274, %v4287
    %v4289 = vpop.f32.mrf.mxu0
    %v4290 = vadd.f32 %v4276, %v4289
    %4291 = vdwg.mxu0
    %4292 = vmatpush.bf16.msra.mxu0 %v3053
    %4293 = vmatpush.bf16.msra.mxu0 %v3041
    %4294 = vmatpush.bf16.msra.mxu0 %v3029
    %4295 = vmatpush.bf16.msra.mxu0 %v3017
    %4296 = vmatpush.bf16.msra.mxu0 %v3005
    %4297 = vmatpush.bf16.msra.mxu0 %v2993
    %4298 = vmatpush.bf16.msra.mxu0 %v2981
    %4299 = vmatpush.bf16.msra.mxu0 %v2969
    %4300 = vmatmul.bf16.gmra.mxu0 %v747
    %v4301 = vpop.f32.mrf.mxu0
    %v4302 = vadd.f32 %v4288, %v4301
    %v4303 = vpop.f32.mrf.mxu0
    %v4304 = vadd.f32 %v4290, %v4303
    %4305 = vdwg.mxu0
    %4306 = vmatpush.bf16.msra.mxu0 %v2574
    %4307 = vmatpush.bf16.msra.mxu0 %v2562
    %4308 = vmatpush.bf16.msra.mxu0 %v2550
    %4309 = vmatpush.bf16.msra.mxu0 %v2538
    %4310 = vmatpush.bf16.msra.mxu0 %v2526
    %4311 = vmatpush.bf16.msra.mxu0 %v2514
    %4312 = vmatpush.bf16.msra.mxu0 %v2502
    %4313 = vmatpush.bf16.msra.mxu0 %v2490
    %4314 = vmatmul.bf16.gmra.mxu0 %v742
    %v4315 = vpop.f32.mrf.mxu0
    %v4316 = vadd.f32 %v708, %v4315
    %v4317 = vpop.f32.mrf.mxu0
    %v4318 = vadd.f32 %v708, %v4317
    %4319 = vdwg.mxu0
    %4320 = vmatpush.bf16.msra.mxu0 %v2670
    %4321 = vmatpush.bf16.msra.mxu0 %v2658
    %4322 = vmatpush.bf16.msra.mxu0 %v2646
    %4323 = vmatpush.bf16.msra.mxu0 %v2634
    %4324 = vmatpush.bf16.msra.mxu0 %v2622
    %4325 = vmatpush.bf16.msra.mxu0 %v2610
    %4326 = vmatpush.bf16.msra.mxu0 %v2598
    %4327 = vmatpush.bf16.msra.mxu0 %v2586
    %4328 = vmatmul.bf16.gmra.mxu0 %v743
    %v4329 = vpop.f32.mrf.mxu0
    %v4330 = vadd.f32 %v4316, %v4329
    %v4331 = vpop.f32.mrf.mxu0
    %v4332 = vadd.f32 %v4318, %v4331
    %4333 = vdwg.mxu0
    %4334 = vmatpush.bf16.msra.mxu0 %v2766
    %4335 = vmatpush.bf16.msra.mxu0 %v2754
    %4336 = vmatpush.bf16.msra.mxu0 %v2742
    %4337 = vmatpush.bf16.msra.mxu0 %v2730
    %4338 = vmatpush.bf16.msra.mxu0 %v2718
    %4339 = vmatpush.bf16.msra.mxu0 %v2706
    %4340 = vmatpush.bf16.msra.mxu0 %v2694
    %4341 = vmatpush.bf16.msra.mxu0 %v2682
    %4342 = vmatmul.bf16.gmra.mxu0 %v744
    %v4343 = vpop.f32.mrf.mxu0
    %v4344 = vadd.f32 %v4330, %v4343
    %v4345 = vpop.f32.mrf.mxu0
    %v4346 = vadd.f32 %v4332, %v4345
    %4347 = vdwg.mxu0
    %4348 = vmatpush.bf16.msra.mxu0 %v2862
    %4349 = vmatpush.bf16.msra.mxu0 %v2850
    %4350 = vmatpush.bf16.msra.mxu0 %v2838
    %4351 = vmatpush.bf16.msra.mxu0 %v2826
    %4352 = vmatpush.bf16.msra.mxu0 %v2814
    %4353 = vmatpush.bf16.msra.mxu0 %v2802
    %4354 = vmatpush.bf16.msra.mxu0 %v2790
    %4355 = vmatpush.bf16.msra.mxu0 %v2778
    %4356 = vmatmul.bf16.gmra.mxu0 %v745
    %v4357 = vpop.f32.mrf.mxu0
    %v4358 = vadd.f32 %v4344, %v4357
    %v4359 = vpop.f32.mrf.mxu0
    %v4360 = vadd.f32 %v4346, %v4359
    %4361 = vdwg.mxu0
    %4362 = vmatpush.bf16.msra.mxu0 %v2958
    %4363 = vmatpush.bf16.msra.mxu0 %v2946
    %4364 = vmatpush.bf16.msra.mxu0 %v2934
    %4365 = vmatpush.bf16.msra.mxu0 %v2922
    %4366 = vmatpush.bf16.msra.mxu0 %v2910
    %4367 = vmatpush.bf16.msra.mxu0 %v2898
    %4368 = vmatpush.bf16.msra.mxu0 %v2886
    %4369 = vmatpush.bf16.msra.mxu0 %v2874
    %4370 = vmatmul.bf16.gmra.mxu0 %v746
    %v4371 = vpop.f32.mrf.mxu0
    %v4372 = vadd.f32 %v4358, %v4371
    %v4373 = vpop.f32.mrf.mxu0
    %v4374 = vadd.f32 %v4360, %v4373
    %4375 = vdwg.mxu0
    %4376 = vmatpush.bf16.msra.mxu0 %v3054
    %4377 = vmatpush.bf16.msra.mxu0 %v3042
    %4378 = vmatpush.bf16.msra.mxu0 %v3030
    %4379 = vmatpush.bf16.msra.mxu0 %v3018
    %4380 = vmatpush.bf16.msra.mxu0 %v3006
    %4381 = vmatpush.bf16.msra.mxu0 %v2994
    %4382 = vmatpush.bf16.msra.mxu0 %v2982
    %4383 = vmatpush.bf16.msra.mxu0 %v2970
    %4384 = vmatmul.bf16.gmra.mxu0 %v747
    %v4385 = vpop.f32.mrf.mxu0
    %v4386 = vadd.f32 %v4372, %v4385
    %v4387 = vpop.f32.mrf.mxu0
    %v4388 = vadd.f32 %v4374, %v4387
    %4389 = vdwg.mxu0
    %4390 = vmatpush.bf16.msra.mxu0 %v2575
    %4391 = vmatpush.bf16.msra.mxu0 %v2563
    %4392 = vmatpush.bf16.msra.mxu0 %v2551
    %4393 = vmatpush.bf16.msra.mxu0 %v2539
    %4394 = vmatpush.bf16.msra.mxu0 %v2527
    %4395 = vmatpush.bf16.msra.mxu0 %v2515
    %4396 = vmatpush.bf16.msra.mxu0 %v2503
    %4397 = vmatpush.bf16.msra.mxu0 %v2491
    %4398 = vmatmul.bf16.gmra.mxu0 %v742
    %v4399 = vpop.f32.mrf.mxu0
    %v4400 = vadd.f32 %v709, %v4399
    %v4401 = vpop.f32.mrf.mxu0
    %v4402 = vadd.f32 %v709, %v4401
    %4403 = vdwg.mxu0
    %4404 = vmatpush.bf16.msra.mxu0 %v2671
    %4405 = vmatpush.bf16.msra.mxu0 %v2659
    %4406 = vmatpush.bf16.msra.mxu0 %v2647
    %4407 = vmatpush.bf16.msra.mxu0 %v2635
    %4408 = vmatpush.bf16.msra.mxu0 %v2623
    %4409 = vmatpush.bf16.msra.mxu0 %v2611
    %4410 = vmatpush.bf16.msra.mxu0 %v2599
    %4411 = vmatpush.bf16.msra.mxu0 %v2587
    %4412 = vmatmul.bf16.gmra.mxu0 %v743
    %v4413 = vpop.f32.mrf.mxu0
    %v4414 = vadd.f32 %v4400, %v4413
    %v4415 = vpop.f32.mrf.mxu0
    %v4416 = vadd.f32 %v4402, %v4415
    %4417 = vdwg.mxu0
    %4418 = vmatpush.bf16.msra.mxu0 %v2767
    %4419 = vmatpush.bf16.msra.mxu0 %v2755
    %4420 = vmatpush.bf16.msra.mxu0 %v2743
    %4421 = vmatpush.bf16.msra.mxu0 %v2731
    %4422 = vmatpush.bf16.msra.mxu0 %v2719
    %4423 = vmatpush.bf16.msra.mxu0 %v2707
    %4424 = vmatpush.bf16.msra.mxu0 %v2695
    %4425 = vmatpush.bf16.msra.mxu0 %v2683
    %4426 = vmatmul.bf16.gmra.mxu0 %v744
    %v4427 = vpop.f32.mrf.mxu0
    %v4428 = vadd.f32 %v4414, %v4427
    %v4429 = vpop.f32.mrf.mxu0
    %v4430 = vadd.f32 %v4416, %v4429
    %4431 = vdwg.mxu0
    %4432 = vmatpush.bf16.msra.mxu0 %v2863
    %4433 = vmatpush.bf16.msra.mxu0 %v2851
    %4434 = vmatpush.bf16.msra.mxu0 %v2839
    %4435 = vmatpush.bf16.msra.mxu0 %v2827
    %4436 = vmatpush.bf16.msra.mxu0 %v2815
    %4437 = vmatpush.bf16.msra.mxu0 %v2803
    %4438 = vmatpush.bf16.msra.mxu0 %v2791
    %4439 = vmatpush.bf16.msra.mxu0 %v2779
    %4440 = vmatmul.bf16.gmra.mxu0 %v745
    %v4441 = vpop.f32.mrf.mxu0
    %v4442 = vadd.f32 %v4428, %v4441
    %v4443 = vpop.f32.mrf.mxu0
    %v4444 = vadd.f32 %v4430, %v4443
    %4445 = vdwg.mxu0
    %4446 = vmatpush.bf16.msra.mxu0 %v2959
    %4447 = vmatpush.bf16.msra.mxu0 %v2947
    %4448 = vmatpush.bf16.msra.mxu0 %v2935
    %4449 = vmatpush.bf16.msra.mxu0 %v2923
    %4450 = vmatpush.bf16.msra.mxu0 %v2911
    %4451 = vmatpush.bf16.msra.mxu0 %v2899
    %4452 = vmatpush.bf16.msra.mxu0 %v2887
    %4453 = vmatpush.bf16.msra.mxu0 %v2875
    %4454 = vmatmul.bf16.gmra.mxu0 %v746
    %v4455 = vpop.f32.mrf.mxu0
    %v4456 = vadd.f32 %v4442, %v4455
    %v4457 = vpop.f32.mrf.mxu0
    %v4458 = vadd.f32 %v4444, %v4457
    %4459 = vdwg.mxu0
    %4460 = vmatpush.bf16.msra.mxu0 %v3055
    %4461 = vmatpush.bf16.msra.mxu0 %v3043
    %4462 = vmatpush.bf16.msra.mxu0 %v3031
    %4463 = vmatpush.bf16.msra.mxu0 %v3019
    %4464 = vmatpush.bf16.msra.mxu0 %v3007
    %4465 = vmatpush.bf16.msra.mxu0 %v2995
    %4466 = vmatpush.bf16.msra.mxu0 %v2983
    %4467 = vmatpush.bf16.msra.mxu0 %v2971
    %4468 = vmatmul.bf16.gmra.mxu0 %v747
    %v4469 = vpop.f32.mrf.mxu0
    %v4470 = vadd.f32 %v4456, %v4469
    %v4471 = vpop.f32.mrf.mxu0
    %v4472 = vadd.f32 %v4458, %v4471
    %4473 = vdwg.mxu0
    %4474 = vmatpush.bf16.msra.mxu0 %v2576
    %4475 = vmatpush.bf16.msra.mxu0 %v2564
    %4476 = vmatpush.bf16.msra.mxu0 %v2552
    %4477 = vmatpush.bf16.msra.mxu0 %v2540
    %4478 = vmatpush.bf16.msra.mxu0 %v2528
    %4479 = vmatpush.bf16.msra.mxu0 %v2516
    %4480 = vmatpush.bf16.msra.mxu0 %v2504
    %4481 = vmatpush.bf16.msra.mxu0 %v2492
    %4482 = vmatmul.bf16.gmra.mxu0 %v742
    %v4483 = vpop.f32.mrf.mxu0
    %v4484 = vadd.f32 %v710, %v4483
    %v4485 = vpop.f32.mrf.mxu0
    %v4486 = vadd.f32 %v710, %v4485
    %4487 = vdwg.mxu0
    %4488 = vmatpush.bf16.msra.mxu0 %v2672
    %4489 = vmatpush.bf16.msra.mxu0 %v2660
    %4490 = vmatpush.bf16.msra.mxu0 %v2648
    %4491 = vmatpush.bf16.msra.mxu0 %v2636
    %4492 = vmatpush.bf16.msra.mxu0 %v2624
    %4493 = vmatpush.bf16.msra.mxu0 %v2612
    %4494 = vmatpush.bf16.msra.mxu0 %v2600
    %4495 = vmatpush.bf16.msra.mxu0 %v2588
    %4496 = vmatmul.bf16.gmra.mxu0 %v743
    %v4497 = vpop.f32.mrf.mxu0
    %v4498 = vadd.f32 %v4484, %v4497
    %v4499 = vpop.f32.mrf.mxu0
    %v4500 = vadd.f32 %v4486, %v4499
    %4501 = vdwg.mxu0
    %4502 = vmatpush.bf16.msra.mxu0 %v2768
    %4503 = vmatpush.bf16.msra.mxu0 %v2756
    %4504 = vmatpush.bf16.msra.mxu0 %v2744
    %4505 = vmatpush.bf16.msra.mxu0 %v2732
    %4506 = vmatpush.bf16.msra.mxu0 %v2720
    %4507 = vmatpush.bf16.msra.mxu0 %v2708
    %4508 = vmatpush.bf16.msra.mxu0 %v2696
    %4509 = vmatpush.bf16.msra.mxu0 %v2684
    %4510 = vmatmul.bf16.gmra.mxu0 %v744
    %v4511 = vpop.f32.mrf.mxu0
    %v4512 = vadd.f32 %v4498, %v4511
    %v4513 = vpop.f32.mrf.mxu0
    %v4514 = vadd.f32 %v4500, %v4513
    %4515 = vdwg.mxu0
    %4516 = vmatpush.bf16.msra.mxu0 %v2864
    %4517 = vmatpush.bf16.msra.mxu0 %v2852
    %4518 = vmatpush.bf16.msra.mxu0 %v2840
    %4519 = vmatpush.bf16.msra.mxu0 %v2828
    %4520 = vmatpush.bf16.msra.mxu0 %v2816
    %4521 = vmatpush.bf16.msra.mxu0 %v2804
    %4522 = vmatpush.bf16.msra.mxu0 %v2792
    %4523 = vmatpush.bf16.msra.mxu0 %v2780
    %4524 = vmatmul.bf16.gmra.mxu0 %v745
    %v4525 = vpop.f32.mrf.mxu0
    %v4526 = vadd.f32 %v4512, %v4525
    %v4527 = vpop.f32.mrf.mxu0
    %v4528 = vadd.f32 %v4514, %v4527
    %4529 = vdwg.mxu0
    %4530 = vmatpush.bf16.msra.mxu0 %v2960
    %4531 = vmatpush.bf16.msra.mxu0 %v2948
    %4532 = vmatpush.bf16.msra.mxu0 %v2936
    %4533 = vmatpush.bf16.msra.mxu0 %v2924
    %4534 = vmatpush.bf16.msra.mxu0 %v2912
    %4535 = vmatpush.bf16.msra.mxu0 %v2900
    %4536 = vmatpush.bf16.msra.mxu0 %v2888
    %4537 = vmatpush.bf16.msra.mxu0 %v2876
    %4538 = vmatmul.bf16.gmra.mxu0 %v746
    %v4539 = vpop.f32.mrf.mxu0
    %v4540 = vadd.f32 %v4526, %v4539
    %v4541 = vpop.f32.mrf.mxu0
    %v4542 = vadd.f32 %v4528, %v4541
    %4543 = vdwg.mxu0
    %4544 = vmatpush.bf16.msra.mxu0 %v3056
    %4545 = vmatpush.bf16.msra.mxu0 %v3044
    %4546 = vmatpush.bf16.msra.mxu0 %v3032
    %4547 = vmatpush.bf16.msra.mxu0 %v3020
    %4548 = vmatpush.bf16.msra.mxu0 %v3008
    %4549 = vmatpush.bf16.msra.mxu0 %v2996
    %4550 = vmatpush.bf16.msra.mxu0 %v2984
    %4551 = vmatpush.bf16.msra.mxu0 %v2972
    %4552 = vmatmul.bf16.gmra.mxu0 %v747
    %v4553 = vpop.f32.mrf.mxu0
    %v4554 = vadd.f32 %v4540, %v4553
    %v4555 = vpop.f32.mrf.mxu0
    %v4556 = vadd.f32 %v4542, %v4555
    %4557 = vdwg.mxu0
    %4558 = vmatpush.bf16.msra.mxu0 %v2577
    %4559 = vmatpush.bf16.msra.mxu0 %v2565
    %4560 = vmatpush.bf16.msra.mxu0 %v2553
    %4561 = vmatpush.bf16.msra.mxu0 %v2541
    %4562 = vmatpush.bf16.msra.mxu0 %v2529
    %4563 = vmatpush.bf16.msra.mxu0 %v2517
    %4564 = vmatpush.bf16.msra.mxu0 %v2505
    %4565 = vmatpush.bf16.msra.mxu0 %v2493
    %4566 = vmatmul.bf16.gmra.mxu0 %v742
    %v4567 = vpop.f32.mrf.mxu0
    %v4568 = vadd.f32 %v711, %v4567
    %v4569 = vpop.f32.mrf.mxu0
    %v4570 = vadd.f32 %v711, %v4569
    %4571 = vdwg.mxu0
    %4572 = vmatpush.bf16.msra.mxu0 %v2673
    %4573 = vmatpush.bf16.msra.mxu0 %v2661
    %4574 = vmatpush.bf16.msra.mxu0 %v2649
    %4575 = vmatpush.bf16.msra.mxu0 %v2637
    %4576 = vmatpush.bf16.msra.mxu0 %v2625
    %4577 = vmatpush.bf16.msra.mxu0 %v2613
    %4578 = vmatpush.bf16.msra.mxu0 %v2601
    %4579 = vmatpush.bf16.msra.mxu0 %v2589
    %4580 = vmatmul.bf16.gmra.mxu0 %v743
    %v4581 = vpop.f32.mrf.mxu0
    %v4582 = vadd.f32 %v4568, %v4581
    %v4583 = vpop.f32.mrf.mxu0
    %v4584 = vadd.f32 %v4570, %v4583
    %4585 = vdwg.mxu0
    %4586 = vmatpush.bf16.msra.mxu0 %v2769
    %4587 = vmatpush.bf16.msra.mxu0 %v2757
    %4588 = vmatpush.bf16.msra.mxu0 %v2745
    %4589 = vmatpush.bf16.msra.mxu0 %v2733
    %4590 = vmatpush.bf16.msra.mxu0 %v2721
    %4591 = vmatpush.bf16.msra.mxu0 %v2709
    %4592 = vmatpush.bf16.msra.mxu0 %v2697
    %4593 = vmatpush.bf16.msra.mxu0 %v2685
    %4594 = vmatmul.bf16.gmra.mxu0 %v744
    %v4595 = vpop.f32.mrf.mxu0
    %v4596 = vadd.f32 %v4582, %v4595
    %v4597 = vpop.f32.mrf.mxu0
    %v4598 = vadd.f32 %v4584, %v4597
    %4599 = vdwg.mxu0
    %4600 = vmatpush.bf16.msra.mxu0 %v2865
    %4601 = vmatpush.bf16.msra.mxu0 %v2853
    %4602 = vmatpush.bf16.msra.mxu0 %v2841
    %4603 = vmatpush.bf16.msra.mxu0 %v2829
    %4604 = vmatpush.bf16.msra.mxu0 %v2817
    %4605 = vmatpush.bf16.msra.mxu0 %v2805
    %4606 = vmatpush.bf16.msra.mxu0 %v2793
    %4607 = vmatpush.bf16.msra.mxu0 %v2781
    %4608 = vmatmul.bf16.gmra.mxu0 %v745
    %v4609 = vpop.f32.mrf.mxu0
    %v4610 = vadd.f32 %v4596, %v4609
    %v4611 = vpop.f32.mrf.mxu0
    %v4612 = vadd.f32 %v4598, %v4611
    %4613 = vdwg.mxu0
    %4614 = vmatpush.bf16.msra.mxu0 %v2961
    %4615 = vmatpush.bf16.msra.mxu0 %v2949
    %4616 = vmatpush.bf16.msra.mxu0 %v2937
    %4617 = vmatpush.bf16.msra.mxu0 %v2925
    %4618 = vmatpush.bf16.msra.mxu0 %v2913
    %4619 = vmatpush.bf16.msra.mxu0 %v2901
    %4620 = vmatpush.bf16.msra.mxu0 %v2889
    %4621 = vmatpush.bf16.msra.mxu0 %v2877
    %4622 = vmatmul.bf16.gmra.mxu0 %v746
    %v4623 = vpop.f32.mrf.mxu0
    %v4624 = vadd.f32 %v4610, %v4623
    %v4625 = vpop.f32.mrf.mxu0
    %v4626 = vadd.f32 %v4612, %v4625
    %4627 = vdwg.mxu0
    %4628 = vmatpush.bf16.msra.mxu0 %v3057
    %4629 = vmatpush.bf16.msra.mxu0 %v3045
    %4630 = vmatpush.bf16.msra.mxu0 %v3033
    %4631 = vmatpush.bf16.msra.mxu0 %v3021
    %4632 = vmatpush.bf16.msra.mxu0 %v3009
    %4633 = vmatpush.bf16.msra.mxu0 %v2997
    %4634 = vmatpush.bf16.msra.mxu0 %v2985
    %4635 = vmatpush.bf16.msra.mxu0 %v2973
    %4636 = vmatmul.bf16.gmra.mxu0 %v747
    %v4637 = vpop.f32.mrf.mxu0
    %v4638 = vadd.f32 %v4624, %v4637
    %v4639 = vpop.f32.mrf.mxu0
    %v4640 = vadd.f32 %v4626, %v4639
    %4641 = vdwg.mxu0
    %v4642 = vpack.c.bf16 %v3798, %v3714
    %v4643 = vpack.c.bf16 %v3966, %v3882
    %v4644 = vpack.c.bf16 %v4134, %v4050
    %v4645 = vpack.c.bf16 %v3800, %v3716
    %v4646 = vpack.c.bf16 %v3968, %v3884
    %v4647 = vpack.c.bf16 %v4136, %v4052
    %v4648 = vpack.c.bf16 %v4302, %v4218
    %v4649 = vpack.c.bf16 %v4470, %v4386
    %v4650 = vpack.c.bf16 %v4638, %v4554
    %v4651 = vpack.c.bf16 %v4304, %v4220
    %v4652 = vpack.c.bf16 %v4472, %v4388
    %v4653 = vpack.c.bf16 %v4640, %v4556
    %v4657 = vunpack.c.l.b16 %v4642
    %v4658 = vunpack.c.h.b16 %v4642
    %v4659 = vunpack.c.l.b16 %v4643
    %v4660 = vunpack.c.h.b16 %v4643
    %v4661 = vunpack.c.l.b16 %v4644
    %v4662 = vunpack.c.h.b16 %v4644
    %v4663 = vpack.c.b16 %v4657, %v4657
    %v4664 = vpack.c.b16 %v4658, %v4658
    %v4665 = vpack.c.b16 %v4659, %v4659
    %v4666 = vpack.c.b16 %v4660, %v4660
    %v4667 = vpack.c.b16 %v4661, %v4661
    %v4668 = vpack.c.b16 %v4662, %v4662
    %v4678 = vunpack.c.l.b16 %v4648
    %v4679 = vunpack.c.h.b16 %v4648
    %v4680 = vunpack.c.l.b16 %v4649
    %v4681 = vunpack.c.h.b16 %v4649
    %v4682 = vunpack.c.l.b16 %v4650
    %v4683 = vunpack.c.h.b16 %v4650
    %v4684 = vpack.c.b16 %v4678, %v4678
    %v4685 = vpack.c.b16 %v4679, %v4679
    %v4686 = vpack.c.b16 %v4680, %v4680
    %v4687 = vpack.c.b16 %v4681, %v4681
    %v4688 = vpack.c.b16 %v4682, %v4682
    %v4689 = vpack.c.b16 %v4683, %v4683
    %4696 = vmatpush.bf16.xpose.msra.mxu0 0
    %4697 = vmatpush.bf16.xpose.msra.mxu0 0
    %4698 = vmatpush.bf16.xpose.msra.mxu0 0
    %4699 = vmatpush.bf16.xpose.msra.mxu0 0
    %4700 = vmatpush.bf16.xpose.msra.mxu0 0
    %4701 = vmatpush.bf16.xpose.msra.mxu0 0
    %4702 = vmatpush.bf16.xpose.msra.mxu0 0
    %4703 = vmatpush.bf16.xpose.msra.mxu0 %v4684
    %4704 = vmatmul.bf16.gmra.mxu0 %v4663
    %v4705 = vpop.f32.mrf.mxu0
    %v4706 = vadd.f32 0.0, %v4705
    %v4707 = vpop.f32.mrf.mxu0
    %4708 = vdwg.mxu0
    %4709 = vmatpush.bf16.xpose.msra.mxu0 0
    %4710 = vmatpush.bf16.xpose.msra.mxu0 0
    %4711 = vmatpush.bf16.xpose.msra.mxu0 0
    %4712 = vmatpush.bf16.xpose.msra.mxu0 0
    %4713 = vmatpush.bf16.xpose.msra.mxu0 0
    %4714 = vmatpush.bf16.xpose.msra.mxu0 0
    %4715 = vmatpush.bf16.xpose.msra.mxu0 0
    %4716 = vmatpush.bf16.xpose.msra.mxu0 %v4685
    %4717 = vmatmul.bf16.gmra.mxu0 %v4664
    %v4718 = vpop.f32.mrf.mxu0
    %v4719 = vadd.f32 %v4706, %v4718
    %v4720 = vpop.f32.mrf.mxu0
    %4721 = vdwg.mxu0
    %4722 = vmatpush.bf16.xpose.msra.mxu0 0
    %4723 = vmatpush.bf16.xpose.msra.mxu0 0
    %4724 = vmatpush.bf16.xpose.msra.mxu0 0
    %4725 = vmatpush.bf16.xpose.msra.mxu0 0
    %4726 = vmatpush.bf16.xpose.msra.mxu0 0
    %4727 = vmatpush.bf16.xpose.msra.mxu0 0
    %4728 = vmatpush.bf16.xpose.msra.mxu0 0
    %4729 = vmatpush.bf16.xpose.msra.mxu0 %v4686
    %4730 = vmatmul.bf16.gmra.mxu0 %v4665
    %v4731 = vpop.f32.mrf.mxu0
    %v4732 = vadd.f32 %v4719, %v4731
    %v4733 = vpop.f32.mrf.mxu0
    %4734 = vdwg.mxu0
    %4735 = vmatpush.bf16.xpose.msra.mxu0 0
    %4736 = vmatpush.bf16.xpose.msra.mxu0 0
    %4737 = vmatpush.bf16.xpose.msra.mxu0 0
    %4738 = vmatpush.bf16.xpose.msra.mxu0 0
    %4739 = vmatpush.bf16.xpose.msra.mxu0 0
    %4740 = vmatpush.bf16.xpose.msra.mxu0 0
    %4741 = vmatpush.bf16.xpose.msra.mxu0 0
    %4742 = vmatpush.bf16.xpose.msra.mxu0 %v4687
    %4743 = vmatmul.bf16.gmra.mxu0 %v4666
    %v4744 = vpop.f32.mrf.mxu0
    %v4745 = vadd.f32 %v4732, %v4744
    %v4746 = vpop.f32.mrf.mxu0
    %4747 = vdwg.mxu0
    %4748 = vmatpush.bf16.xpose.msra.mxu0 0
    %4749 = vmatpush.bf16.xpose.msra.mxu0 0
    %4750 = vmatpush.bf16.xpose.msra.mxu0 0
    %4751 = vmatpush.bf16.xpose.msra.mxu0 0
    %4752 = vmatpush.bf16.xpose.msra.mxu0 0
    %4753 = vmatpush.bf16.xpose.msra.mxu0 0
    %4754 = vmatpush.bf16.xpose.msra.mxu0 0
    %4755 = vmatpush.bf16.xpose.msra.mxu0 %v4688
    %4756 = vmatmul.bf16.gmra.mxu0 %v4667
    %v4757 = vpop.f32.mrf.mxu0
    %v4758 = vadd.f32 %v4745, %v4757
    %v4759 = vpop.f32.mrf.mxu0
    %4760 = vdwg.mxu0
    %4761 = vmatpush.bf16.xpose.msra.mxu0 0
    %4762 = vmatpush.bf16.xpose.msra.mxu0 0
    %4763 = vmatpush.bf16.xpose.msra.mxu0 0
    %4764 = vmatpush.bf16.xpose.msra.mxu0 0
    %4765 = vmatpush.bf16.xpose.msra.mxu0 0
    %4766 = vmatpush.bf16.xpose.msra.mxu0 0
    %4767 = vmatpush.bf16.xpose.msra.mxu0 0
    %4768 = vmatpush.bf16.xpose.msra.mxu0 %v4689
    %4769 = vmatmul.bf16.gmra.mxu0 %v4668
    %v4770 = vpop.f32.mrf.mxu0
    %v4771 = vadd.f32 %v4758, %v4770
    %v4772 = vpop.f32.mrf.mxu0
    %4773 = vdwg.mxu0
    %v4777 = vunpack.c.l.b16 %v4645
    %v4778 = vunpack.c.h.b16 %v4645
    %v4779 = vunpack.c.l.b16 %v4646
    %v4780 = vunpack.c.h.b16 %v4646
    %v4781 = vunpack.c.l.b16 %v4647
    %v4782 = vunpack.c.h.b16 %v4647
    %v4783 = vpack.c.b16 %v4777, %v4777
    %v4784 = vpack.c.b16 %v4778, %v4778
    %v4785 = vpack.c.b16 %v4779, %v4779
    %v4786 = vpack.c.b16 %v4780, %v4780
    %v4787 = vpack.c.b16 %v4781, %v4781
    %v4788 = vpack.c.b16 %v4782, %v4782
    %v4798 = vunpack.c.l.b16 %v4651
    %v4799 = vunpack.c.h.b16 %v4651
    %v4800 = vunpack.c.l.b16 %v4652
    %v4801 = vunpack.c.h.b16 %v4652
    %v4802 = vunpack.c.l.b16 %v4653
    %v4803 = vunpack.c.h.b16 %v4653
    %v4804 = vpack.c.b16 %v4798, %v4798
    %v4805 = vpack.c.b16 %v4799, %v4799
    %v4806 = vpack.c.b16 %v4800, %v4800
    %v4807 = vpack.c.b16 %v4801, %v4801
    %v4808 = vpack.c.b16 %v4802, %v4802
    %v4809 = vpack.c.b16 %v4803, %v4803
    %4816 = vmatpush.bf16.xpose.msra.mxu0 0
    %4817 = vmatpush.bf16.xpose.msra.mxu0 0
    %4818 = vmatpush.bf16.xpose.msra.mxu0 0
    %4819 = vmatpush.bf16.xpose.msra.mxu0 0
    %4820 = vmatpush.bf16.xpose.msra.mxu0 0
    %4821 = vmatpush.bf16.xpose.msra.mxu0 0
    %4822 = vmatpush.bf16.xpose.msra.mxu0 0
    %4823 = vmatpush.bf16.xpose.msra.mxu0 %v4804
    %4824 = vmatmul.bf16.gmra.mxu0 %v4783
    %v4825 = vpop.f32.mrf.mxu0
    %v4826 = vadd.f32 0.0, %v4825
    %v4827 = vpop.f32.mrf.mxu0
    %4828 = vdwg.mxu0
    %4829 = vmatpush.bf16.xpose.msra.mxu0 0
    %4830 = vmatpush.bf16.xpose.msra.mxu0 0
    %4831 = vmatpush.bf16.xpose.msra.mxu0 0
    %4832 = vmatpush.bf16.xpose.msra.mxu0 0
    %4833 = vmatpush.bf16.xpose.msra.mxu0 0
    %4834 = vmatpush.bf16.xpose.msra.mxu0 0
    %4835 = vmatpush.bf16.xpose.msra.mxu0 0
    %4836 = vmatpush.bf16.xpose.msra.mxu0 %v4805
    %4837 = vmatmul.bf16.gmra.mxu0 %v4784
    %v4838 = vpop.f32.mrf.mxu0
    %v4839 = vadd.f32 %v4826, %v4838
    %v4840 = vpop.f32.mrf.mxu0
    %4841 = vdwg.mxu0
    %4842 = vmatpush.bf16.xpose.msra.mxu0 0
    %4843 = vmatpush.bf16.xpose.msra.mxu0 0
    %4844 = vmatpush.bf16.xpose.msra.mxu0 0
    %4845 = vmatpush.bf16.xpose.msra.mxu0 0
    %4846 = vmatpush.bf16.xpose.msra.mxu0 0
    %4847 = vmatpush.bf16.xpose.msra.mxu0 0
    %4848 = vmatpush.bf16.xpose.msra.mxu0 0
    %4849 = vmatpush.bf16.xpose.msra.mxu0 %v4806
    %4850 = vmatmul.bf16.gmra.mxu0 %v4785
    %v4851 = vpop.f32.mrf.mxu0
    %v4852 = vadd.f32 %v4839, %v4851
    %v4853 = vpop.f32.mrf.mxu0
    %4854 = vdwg.mxu0
    %4855 = vmatpush.bf16.xpose.msra.mxu0 0
    %4856 = vmatpush.bf16.xpose.msra.mxu0 0
    %4857 = vmatpush.bf16.xpose.msra.mxu0 0
    %4858 = vmatpush.bf16.xpose.msra.mxu0 0
    %4859 = vmatpush.bf16.xpose.msra.mxu0 0
    %4860 = vmatpush.bf16.xpose.msra.mxu0 0
    %4861 = vmatpush.bf16.xpose.msra.mxu0 0
    %4862 = vmatpush.bf16.xpose.msra.mxu0 %v4807
    %4863 = vmatmul.bf16.gmra.mxu0 %v4786
    %v4864 = vpop.f32.mrf.mxu0
    %v4865 = vadd.f32 %v4852, %v4864
    %v4866 = vpop.f32.mrf.mxu0
    %4867 = vdwg.mxu0
    %4868 = vmatpush.bf16.xpose.msra.mxu0 0
    %4869 = vmatpush.bf16.xpose.msra.mxu0 0
    %4870 = vmatpush.bf16.xpose.msra.mxu0 0
    %4871 = vmatpush.bf16.xpose.msra.mxu0 0
    %4872 = vmatpush.bf16.xpose.msra.mxu0 0
    %4873 = vmatpush.bf16.xpose.msra.mxu0 0
    %4874 = vmatpush.bf16.xpose.msra.mxu0 0
    %4875 = vmatpush.bf16.xpose.msra.mxu0 %v4808
    %4876 = vmatmul.bf16.gmra.mxu0 %v4787
    %v4877 = vpop.f32.mrf.mxu0
    %v4878 = vadd.f32 %v4865, %v4877
    %v4879 = vpop.f32.mrf.mxu0
    %4880 = vdwg.mxu0
    %4881 = vmatpush.bf16.xpose.msra.mxu0 0
    %4882 = vmatpush.bf16.xpose.msra.mxu0 0
    %4883 = vmatpush.bf16.xpose.msra.mxu0 0
    %4884 = vmatpush.bf16.xpose.msra.mxu0 0
    %4885 = vmatpush.bf16.xpose.msra.mxu0 0
    %4886 = vmatpush.bf16.xpose.msra.mxu0 0
    %4887 = vmatpush.bf16.xpose.msra.mxu0 0
    %4888 = vmatpush.bf16.xpose.msra.mxu0 %v4809
    %4889 = vmatmul.bf16.gmra.mxu0 %v4788
    %v4890 = vpop.f32.mrf.mxu0
    %v4891 = vadd.f32 %v4878, %v4890
    %v4892 = vpop.f32.mrf.mxu0
    %4893 = vdwg.mxu0
    %vm4894 = vcmask 64512
    %v4895 = vsel %vm4894, %v4771, -inf
    %4896 = vmax.xlane.f32.xlu0 %v4895
    %v4897 = vpop.xlane.xlu0 %4896
    %v4898 = vsel %vm4894, %v4891, -inf
    %4899 = vmax.xlane.f32.xlu0 %v4898
    %v4900 = vpop.xlane.xlu0 %4899
    %v4901 = vsub.f32 %v4771, %v4897
    %v4902 = vsub.f32 %v4891, %v4900
    %v4903 = vmul.f32 %v4901, 1.442695
    %v4904 = vpow.pop %v4903
    %v4905 = vmul.f32 %v4902, 1.442695
    %v4906 = vpow.pop %v4905
    %v4907 = vsel %vm4894, %v4904, 0.0
    %4908 = vadd.xlane.f32.xlu0 %v4907
    %v4909 = vpop.xlane.xlu0 %4908
    %v4910 = vsel %vm4894, %v4906, 0.0
    %4911 = vadd.xlane.f32.xlu0 %v4910
    %v4912 = vpop.xlane.xlu0 %4911
    %v4913 = vrcp.pop %v4909
    %v4914 = vrcp.pop %v4912
    %v4915 = vmul.f32 %v4904, %v4913
    %v4916 = vmul.f32 %v4906, %v4914
    %v4917 = vpack.c.bf16 %v4915, %v4915
    %v4918 = vpack.c.bf16 %v4916, %v4916
    %v4919 = vld [vmem:[#allocation7] sm:$0xff]
    %v4920 = vld [vmem:[#allocation7 + $0x8] sm:$0xff]
    %v4921 = vld [vmem:[#allocation7 + $0x10] sm:$0xff]
    %v4922 = vld [vmem:[#allocation7 + $0x18] sm:$0xff]
    %v4923 = vld [vmem:[#allocation7 + $0x20] sm:$0xff]
    %v4924 = vld [vmem:[#allocation7 + $0x28] sm:$0xff]
    %v4928 = vunpack.c.l.b16 %v4919
    %v4929 = vunpack.c.h.b16 %v4919
    %v4930 = vunpack.c.l.b16 %v4920
    %v4931 = vunpack.c.h.b16 %v4920
    %v4932 = vunpack.c.l.b16 %v4921
    %v4933 = vunpack.c.h.b16 %v4921
    %v4934 = vpack.c.b16 %v4928, %v4928
    %v4935 = vpack.c.b16 %v4929, %v4929
    %v4936 = vpack.c.b16 %v4930, %v4930
    %v4937 = vpack.c.b16 %v4931, %v4931
    %v4938 = vpack.c.b16 %v4932, %v4932
    %v4939 = vpack.c.b16 %v4933, %v4933
    %v4941 = vsel %vm4894, %v4917, 0
    %vm4943 = vcmask 1043456
    %v4945 = vsel %vm4943, %v4934, 0
    %v4948 = vsel %vm4943, %v4935, 0
    %v4951 = vsel %vm4943, %v4936, 0
    %v4954 = vsel %vm4943, %v4937, 0
    %v4957 = vsel %vm4943, %v4938, 0
    %v4960 = vsel %vm4943, %v4939, 0
    %4962 = vmatpush.bf16.msra.mxu0 0
    %4963 = vmatpush.bf16.msra.mxu0 0
    %4964 = vmatpush.bf16.msra.mxu0 0
    %4965 = vmatpush.bf16.msra.mxu0 0
    %4966 = vmatpush.bf16.msra.mxu0 0
    %4967 = vmatpush.bf16.msra.mxu0 0
    %4968 = vmatpush.bf16.msra.mxu0 0
    %4969 = vmatpush.bf16.msra.mxu0 %v4945
    %4970 = vmatmul.bf16.gmra.mxu0 %v4941
    %v4971 = vpop.f32.mrf.mxu0
    %v4972 = vadd.f32 0.0, %v4971
    %v4973 = vpop.f32.mrf.mxu0
    %4974 = vdwg.mxu0
    %4975 = vmatpush.bf16.msra.mxu0 0
    %4976 = vmatpush.bf16.msra.mxu0 0
    %4977 = vmatpush.bf16.msra.mxu0 0
    %4978 = vmatpush.bf16.msra.mxu0 0
    %4979 = vmatpush.bf16.msra.mxu0 0
    %4980 = vmatpush.bf16.msra.mxu0 0
    %4981 = vmatpush.bf16.msra.mxu0 0
    %4982 = vmatpush.bf16.msra.mxu0 %v4948
    %4983 = vmatmul.bf16.gmra.mxu0 %v4941
    %v4984 = vpop.f32.mrf.mxu0
    %v4985 = vadd.f32 0.0, %v4984
    %v4986 = vpop.f32.mrf.mxu0
    %4987 = vdwg.mxu0
    %4988 = vmatpush.bf16.msra.mxu0 0
    %4989 = vmatpush.bf16.msra.mxu0 0
    %4990 = vmatpush.bf16.msra.mxu0 0
    %4991 = vmatpush.bf16.msra.mxu0 0
    %4992 = vmatpush.bf16.msra.mxu0 0
    %4993 = vmatpush.bf16.msra.mxu0 0
    %4994 = vmatpush.bf16.msra.mxu0 0
    %4995 = vmatpush.bf16.msra.mxu0 %v4951
    %4996 = vmatmul.bf16.gmra.mxu0 %v4941
    %v4997 = vpop.f32.mrf.mxu0
    %v4998 = vadd.f32 0.0, %v4997
    %v4999 = vpop.f32.mrf.mxu0
    %5000 = vdwg.mxu0
    %5001 = vmatpush.bf16.msra.mxu0 0
    %5002 = vmatpush.bf16.msra.mxu0 0
    %5003 = vmatpush.bf16.msra.mxu0 0
    %5004 = vmatpush.bf16.msra.mxu0 0
    %5005 = vmatpush.bf16.msra.mxu0 0
    %5006 = vmatpush.bf16.msra.mxu0 0
    %5007 = vmatpush.bf16.msra.mxu0 0
    %5008 = vmatpush.bf16.msra.mxu0 %v4954
    %5009 = vmatmul.bf16.gmra.mxu0 %v4941
    %v5010 = vpop.f32.mrf.mxu0
    %v5011 = vadd.f32 0.0, %v5010
    %v5012 = vpop.f32.mrf.mxu0
    %5013 = vdwg.mxu0
    %5014 = vmatpush.bf16.msra.mxu0 0
    %5015 = vmatpush.bf16.msra.mxu0 0
    %5016 = vmatpush.bf16.msra.mxu0 0
    %5017 = vmatpush.bf16.msra.mxu0 0
    %5018 = vmatpush.bf16.msra.mxu0 0
    %5019 = vmatpush.bf16.msra.mxu0 0
    %5020 = vmatpush.bf16.msra.mxu0 0
    %5021 = vmatpush.bf16.msra.mxu0 %v4957
    %5022 = vmatmul.bf16.gmra.mxu0 %v4941
    %v5023 = vpop.f32.mrf.mxu0
    %v5024 = vadd.f32 0.0, %v5023
    %v5025 = vpop.f32.mrf.mxu0
    %5026 = vdwg.mxu0
    %5027 = vmatpush.bf16.msra.mxu0 0
    %5028 = vmatpush.bf16.msra.mxu0 0
    %5029 = vmatpush.bf16.msra.mxu0 0
    %5030 = vmatpush.bf16.msra.mxu0 0
    %5031 = vmatpush.bf16.msra.mxu0 0
    %5032 = vmatpush.bf16.msra.mxu0 0
    %5033 = vmatpush.bf16.msra.mxu0 0
    %5034 = vmatpush.bf16.msra.mxu0 %v4960
    %5035 = vmatmul.bf16.gmra.mxu0 %v4941
    %v5036 = vpop.f32.mrf.mxu0
    %v5037 = vadd.f32 0.0, %v5036
    %v5038 = vpop.f32.mrf.mxu0
    %5039 = vdwg.mxu0
    %v5043 = vunpack.c.l.b16 %v4922
    %v5044 = vunpack.c.h.b16 %v4922
    %v5045 = vunpack.c.l.b16 %v4923
    %v5046 = vunpack.c.h.b16 %v4923
    %v5047 = vunpack.c.l.b16 %v4924
    %v5048 = vunpack.c.h.b16 %v4924
    %v5049 = vpack.c.b16 %v5043, %v5043
    %v5050 = vpack.c.b16 %v5044, %v5044
    %v5051 = vpack.c.b16 %v5045, %v5045
    %v5052 = vpack.c.b16 %v5046, %v5046
    %v5053 = vpack.c.b16 %v5047, %v5047
    %v5054 = vpack.c.b16 %v5048, %v5048
    %v5056 = vsel %vm4894, %v4918, 0
    %v5059 = vsel %vm4943, %v5049, 0
    %v5062 = vsel %vm4943, %v5050, 0
    %v5065 = vsel %vm4943, %v5051, 0
    %v5068 = vsel %vm4943, %v5052, 0
    %v5071 = vsel %vm4943, %v5053, 0
    %v5074 = vsel %vm4943, %v5054, 0
    %5076 = vmatpush.bf16.msra.mxu0 0
    %5077 = vmatpush.bf16.msra.mxu0 0
    %5078 = vmatpush.bf16.msra.mxu0 0
    %5079 = vmatpush.bf16.msra.mxu0 0
    %5080 = vmatpush.bf16.msra.mxu0 0
    %5081 = vmatpush.bf16.msra.mxu0 0
    %5082 = vmatpush.bf16.msra.mxu0 0
    %5083 = vmatpush.bf16.msra.mxu0 %v5059
    %5084 = vmatmul.bf16.gmra.mxu0 %v5056
    %v5085 = vpop.f32.mrf.mxu0
    %v5086 = vadd.f32 0.0, %v5085
    %v5087 = vpop.f32.mrf.mxu0
    %5088 = vdwg.mxu0
    %5089 = vmatpush.bf16.msra.mxu0 0
    %5090 = vmatpush.bf16.msra.mxu0 0
    %5091 = vmatpush.bf16.msra.mxu0 0
    %5092 = vmatpush.bf16.msra.mxu0 0
    %5093 = vmatpush.bf16.msra.mxu0 0
    %5094 = vmatpush.bf16.msra.mxu0 0
    %5095 = vmatpush.bf16.msra.mxu0 0
    %5096 = vmatpush.bf16.msra.mxu0 %v5062
    %5097 = vmatmul.bf16.gmra.mxu0 %v5056
    %v5098 = vpop.f32.mrf.mxu0
    %v5099 = vadd.f32 0.0, %v5098
    %v5100 = vpop.f32.mrf.mxu0
    %5101 = vdwg.mxu0
    %5102 = vmatpush.bf16.msra.mxu0 0
    %5103 = vmatpush.bf16.msra.mxu0 0
    %5104 = vmatpush.bf16.msra.mxu0 0
    %5105 = vmatpush.bf16.msra.mxu0 0
    %5106 = vmatpush.bf16.msra.mxu0 0
    %5107 = vmatpush.bf16.msra.mxu0 0
    %5108 = vmatpush.bf16.msra.mxu0 0
    %5109 = vmatpush.bf16.msra.mxu0 %v5065
    %5110 = vmatmul.bf16.gmra.mxu0 %v5056
    %v5111 = vpop.f32.mrf.mxu0
    %v5112 = vadd.f32 0.0, %v5111
    %v5113 = vpop.f32.mrf.mxu0
    %5114 = vdwg.mxu0
    %5115 = vmatpush.bf16.msra.mxu0 0
    %5116 = vmatpush.bf16.msra.mxu0 0
    %5117 = vmatpush.bf16.msra.mxu0 0
    %5118 = vmatpush.bf16.msra.mxu0 0
    %5119 = vmatpush.bf16.msra.mxu0 0
    %5120 = vmatpush.bf16.msra.mxu0 0
    %5121 = vmatpush.bf16.msra.mxu0 0
    %5122 = vmatpush.bf16.msra.mxu0 %v5068
    %5123 = vmatmul.bf16.gmra.mxu0 %v5056
    %v5124 = vpop.f32.mrf.mxu0
    %v5125 = vadd.f32 0.0, %v5124
    %v5126 = vpop.f32.mrf.mxu0
    %5127 = vdwg.mxu0
    %5128 = vmatpush.bf16.msra.mxu0 0
    %5129 = vmatpush.bf16.msra.mxu0 0
    %5130 = vmatpush.bf16.msra.mxu0 0
    %5131 = vmatpush.bf16.msra.mxu0 0
    %5132 = vmatpush.bf16.msra.mxu0 0
    %5133 = vmatpush.bf16.msra.mxu0 0
    %5134 = vmatpush.bf16.msra.mxu0 0
    %5135 = vmatpush.bf16.msra.mxu0 %v5071
    %5136 = vmatmul.bf16.gmra.mxu0 %v5056
    %v5137 = vpop.f32.mrf.mxu0
    %v5138 = vadd.f32 0.0, %v5137
    %v5139 = vpop.f32.mrf.mxu0
    %5140 = vdwg.mxu0
    %5141 = vmatpush.bf16.msra.mxu0 0
    %5142 = vmatpush.bf16.msra.mxu0 0
    %5143 = vmatpush.bf16.msra.mxu0 0
    %5144 = vmatpush.bf16.msra.mxu0 0
    %5145 = vmatpush.bf16.msra.mxu0 0
    %5146 = vmatpush.bf16.msra.mxu0 0
    %5147 = vmatpush.bf16.msra.mxu0 0
    %5148 = vmatpush.bf16.msra.mxu0 %v5074
    %5149 = vmatmul.bf16.gmra.mxu0 %v5056
    %v5150 = vpop.f32.mrf.mxu0
    %v5151 = vadd.f32 0.0, %v5150
    %v5152 = vpop.f32.mrf.mxu0
    %5153 = vdwg.mxu0
    // Predicated region
    $region50: #{tpu_custom_call.1} parent=1 // pred_check
      %p5154 = pneg %p97
    $region51: #{tpu_custom_call.1} parent=1 // pred_check_branch
      %5156 = sbr.rel (%p5154) target = $region53
    $region52: #{tpu_custom_call.1} parent=1 // pred_region
      %s5157 = smul.u32 4, 96
      %s5158 = smul.u32 %s5157, 6
      %s5159 = sshll.u32 %s5158, 4
      %5160 = dma.done [#allocation3], %s5159
    $region53: #{tpu_custom_call.1} parent=1 // pred_fallthru
      _
    %v5161 = vpack.c.bf16 %v5086, %v4972
    %v5162 = vpack.c.bf16 %v5099, %v4985
    %v5163 = vpack.c.bf16 %v5112, %v4998
    %v5164 = vpack.c.bf16 %v5125, %v5011
    %v5165 = vpack.c.bf16 %v5138, %v5024
    %v5166 = vpack.c.bf16 %v5151, %v5037
    %v5167 = vld [vmem:[#allocation2] sm:$0xff]
    %v5168 = vld [vmem:[#allocation2 + $0x8] sm:$0xff]
    %v5169 = vld [vmem:[#allocation2 + $0x10] sm:$0xff]
    %v5170 = vld [vmem:[#allocation2 + $0x18] sm:$0xff]
    %v5171 = vld [vmem:[#allocation2 + $0x20] sm:$0xff]
    %v5172 = vld [vmem:[#allocation2 + $0x28] sm:$0xff]
    %v5173 = vld [vmem:[#allocation2 + $0x30] sm:$0xff]
    %v5174 = vld [vmem:[#allocation2 + $0x38] sm:$0xff]
    %v5175 = vld [vmem:[#allocation2 + $0x40] sm:$0xff]
    %v5176 = vld [vmem:[#allocation2 + $0x48] sm:$0xff]
    %v5177 = vld [vmem:[#allocation2 + $0x50] sm:$0xff]
    %v5178 = vld [vmem:[#allocation2 + $0x58] sm:$0xff]
    %v5179 = vld [vmem:[#allocation2 + $0x60] sm:$0xff]
    %v5180 = vld [vmem:[#allocation2 + $0x68] sm:$0xff]
    %v5181 = vld [vmem:[#allocation2 + $0x70] sm:$0xff]
    %v5182 = vld [vmem:[#allocation2 + $0x78] sm:$0xff]
    %v5183 = vld [vmem:[#allocation2 + $0x80] sm:$0xff]
    %v5184 = vld [vmem:[#allocation2 + $0x88] sm:$0xff]
    %v5185 = vld [vmem:[#allocation2 + $0x90] sm:$0xff]
    %v5186 = vld [vmem:[#allocation2 + $0x98] sm:$0xff]
    %v5187 = vld [vmem:[#allocation2 + $0xa0] sm:$0xff]
    %v5188 = vld [vmem:[#allocation2 + $0xa8] sm:$0xff]
    %v5189 = vld [vmem:[#allocation2 + $0xb0] sm:$0xff]
    %v5190 = vld [vmem:[#allocation2 + $0xb8] sm:$0xff]
    %v5191 = vld [vmem:[#allocation2 + $0xc0] sm:$0xff]
    %v5192 = vld [vmem:[#allocation2 + $0xc8] sm:$0xff]
    %v5193 = vld [vmem:[#allocation2 + $0xd0] sm:$0xff]
    %v5194 = vld [vmem:[#allocation2 + $0xd8] sm:$0xff]
    %v5195 = vld [vmem:[#allocation2 + $0xe0] sm:$0xff]
    %v5196 = vld [vmem:[#allocation2 + $0xe8] sm:$0xff]
    %v5197 = vld [vmem:[#allocation2 + $0xf0] sm:$0xff]
    %v5198 = vld [vmem:[#allocation2 + $0xf8] sm:$0xff]
    %v5199 = vld [vmem:[#allocation2 + $0x100] sm:$0xff]
    %v5200 = vld [vmem:[#allocation2 + $0x108] sm:$0xff]
    %v5201 = vld [vmem:[#allocation2 + $0x110] sm:$0xff]
    %v5202 = vld [vmem:[#allocation2 + $0x118] sm:$0xff]
    %v5203 = vld [vmem:[#allocation2 + $0x120] sm:$0xff]
    %v5204 = vld [vmem:[#allocation2 + $0x128] sm:$0xff]
    %v5205 = vld [vmem:[#allocation2 + $0x130] sm:$0xff]
    %v5206 = vld [vmem:[#allocation2 + $0x138] sm:$0xff]
    %v5207 = vld [vmem:[#allocation2 + $0x140] sm:$0xff]
    %v5208 = vld [vmem:[#allocation2 + $0x148] sm:$0xff]
    %v5209 = vld [vmem:[#allocation2 + $0x150] sm:$0xff]
    %v5210 = vld [vmem:[#allocation2 + $0x158] sm:$0xff]
    %v5211 = vld [vmem:[#allocation2 + $0x160] sm:$0xff]
    %v5212 = vld [vmem:[#allocation2 + $0x168] sm:$0xff]
    %v5213 = vld [vmem:[#allocation2 + $0x170] sm:$0xff]
    %v5214 = vld [vmem:[#allocation2 + $0x178] sm:$0xff]
    %v5215 = vld [vmem:[#allocation2 + $0x180] sm:$0xff]
    %v5216 = vld [vmem:[#allocation2 + $0x188] sm:$0xff]
    %v5217 = vld [vmem:[#allocation2 + $0x190] sm:$0xff]
    %v5218 = vld [vmem:[#allocation2 + $0x198] sm:$0xff]
    %v5219 = vld [vmem:[#allocation2 + $0x1a0] sm:$0xff]
    %v5220 = vld [vmem:[#allocation2 + $0x1a8] sm:$0xff]
    %v5221 = vld [vmem:[#allocation2 + $0x1b0] sm:$0xff]
    %v5222 = vld [vmem:[#allocation2 + $0x1b8] sm:$0xff]
    %v5223 = vld [vmem:[#allocation2 + $0x1c0] sm:$0xff]
    %v5224 = vld [vmem:[#allocation2 + $0x1c8] sm:$0xff]
    %v5225 = vld [vmem:[#allocation2 + $0x1d0] sm:$0xff]
    %v5226 = vld [vmem:[#allocation2 + $0x1d8] sm:$0xff]
    %v5227 = vld [vmem:[#allocation2 + $0x1e0] sm:$0xff]
    %v5228 = vld [vmem:[#allocation2 + $0x1e8] sm:$0xff]
    %v5229 = vld [vmem:[#allocation2 + $0x1f0] sm:$0xff]
    %v5230 = vld [vmem:[#allocation2 + $0x1f8] sm:$0xff]
    %v5231 = vld [vmem:[#allocation2 + $0x200] sm:$0xff]
    %v5232 = vld [vmem:[#allocation2 + $0x208] sm:$0xff]
    %v5233 = vld [vmem:[#allocation2 + $0x210] sm:$0xff]
    %v5234 = vld [vmem:[#allocation2 + $0x218] sm:$0xff]
    %v5235 = vld [vmem:[#allocation2 + $0x220] sm:$0xff]
    %v5236 = vld [vmem:[#allocation2 + $0x228] sm:$0xff]
    %v5237 = vld [vmem:[#allocation2 + $0x230] sm:$0xff]
    %v5238 = vld [vmem:[#allocation2 + $0x238] sm:$0xff]
    %v5239 = vld [vmem:[#allocation2 + $0x240] sm:$0xff]
    %v5240 = vld [vmem:[#allocation2 + $0x248] sm:$0xff]
    %v5241 = vld [vmem:[#allocation2 + $0x250] sm:$0xff]
    %v5242 = vld [vmem:[#allocation2 + $0x258] sm:$0xff]
    %v5243 = vld [vmem:[#allocation2 + $0x260] sm:$0xff]
    %v5244 = vld [vmem:[#allocation2 + $0x268] sm:$0xff]
    %v5245 = vld [vmem:[#allocation2 + $0x270] sm:$0xff]
    %v5246 = vld [vmem:[#allocation2 + $0x278] sm:$0xff]
    %v5247 = vld [vmem:[#allocation2 + $0x280] sm:$0xff]
    %v5248 = vld [vmem:[#allocation2 + $0x288] sm:$0xff]
    %v5249 = vld [vmem:[#allocation2 + $0x290] sm:$0xff]
    %v5250 = vld [vmem:[#allocation2 + $0x298] sm:$0xff]
    %v5251 = vld [vmem:[#allocation2 + $0x2a0] sm:$0xff]
    %v5252 = vld [vmem:[#allocation2 + $0x2a8] sm:$0xff]
    %v5253 = vld [vmem:[#allocation2 + $0x2b0] sm:$0xff]
    %v5254 = vld [vmem:[#allocation2 + $0x2b8] sm:$0xff]
    %v5255 = vld [vmem:[#allocation2 + $0x2c0] sm:$0xff]
    %v5256 = vld [vmem:[#allocation2 + $0x2c8] sm:$0xff]
    %v5257 = vld [vmem:[#allocation2 + $0x2d0] sm:$0xff]
    %v5258 = vld [vmem:[#allocation2 + $0x2d8] sm:$0xff]
    %v5259 = vld [vmem:[#allocation2 + $0x2e0] sm:$0xff]
    %v5260 = vld [vmem:[#allocation2 + $0x2e8] sm:$0xff]
    %v5261 = vld [vmem:[#allocation2 + $0x2f0] sm:$0xff]
    %v5262 = vld [vmem:[#allocation2 + $0x2f8] sm:$0xff]
    %v5263 = vld [vmem:[#allocation2 + $0x300] sm:$0xff]
    %v5264 = vld [vmem:[#allocation2 + $0x308] sm:$0xff]
    %v5265 = vld [vmem:[#allocation2 + $0x310] sm:$0xff]
    %v5266 = vld [vmem:[#allocation2 + $0x318] sm:$0xff]
    %v5267 = vld [vmem:[#allocation2 + $0x320] sm:$0xff]
    %v5268 = vld [vmem:[#allocation2 + $0x328] sm:$0xff]
    %v5269 = vld [vmem:[#allocation2 + $0x330] sm:$0xff]
    %v5270 = vld [vmem:[#allocation2 + $0x338] sm:$0xff]
    %v5271 = vld [vmem:[#allocation2 + $0x340] sm:$0xff]
    %v5272 = vld [vmem:[#allocation2 + $0x348] sm:$0xff]
    %v5273 = vld [vmem:[#allocation2 + $0x350] sm:$0xff]
    %v5274 = vld [vmem:[#allocation2 + $0x358] sm:$0xff]
    %v5275 = vld [vmem:[#allocation2 + $0x360] sm:$0xff]
    %v5276 = vld [vmem:[#allocation2 + $0x368] sm:$0xff]
    %v5277 = vld [vmem:[#allocation2 + $0x370] sm:$0xff]
    %v5278 = vld [vmem:[#allocation2 + $0x378] sm:$0xff]
    %v5279 = vld [vmem:[#allocation2 + $0x380] sm:$0xff]
    %v5280 = vld [vmem:[#allocation2 + $0x388] sm:$0xff]
    %v5281 = vld [vmem:[#allocation2 + $0x390] sm:$0xff]
    %v5282 = vld [vmem:[#allocation2 + $0x398] sm:$0xff]
    %v5283 = vld [vmem:[#allocation2 + $0x3a0] sm:$0xff]
    %v5284 = vld [vmem:[#allocation2 + $0x3a8] sm:$0xff]
    %v5285 = vld [vmem:[#allocation2 + $0x3b0] sm:$0xff]
    %v5286 = vld [vmem:[#allocation2 + $0x3b8] sm:$0xff]
    %v5287 = vld [vmem:[#allocation2 + $0x3c0] sm:$0xff]
    %v5288 = vld [vmem:[#allocation2 + $0x3c8] sm:$0xff]
    %v5289 = vld [vmem:[#allocation2 + $0x3d0] sm:$0xff]
    %v5290 = vld [vmem:[#allocation2 + $0x3d8] sm:$0xff]
    %v5291 = vld [vmem:[#allocation2 + $0x3e0] sm:$0xff]
    %v5292 = vld [vmem:[#allocation2 + $0x3e8] sm:$0xff]
    %v5293 = vld [vmem:[#allocation2 + $0x3f0] sm:$0xff]
    %v5294 = vld [vmem:[#allocation2 + $0x3f8] sm:$0xff]
    %v5295 = vld [vmem:[#allocation2 + $0x400] sm:$0xff]
    %v5296 = vld [vmem:[#allocation2 + $0x408] sm:$0xff]
    %v5297 = vld [vmem:[#allocation2 + $0x410] sm:$0xff]
    %v5298 = vld [vmem:[#allocation2 + $0x418] sm:$0xff]
    %v5299 = vld [vmem:[#allocation2 + $0x420] sm:$0xff]
    %v5300 = vld [vmem:[#allocation2 + $0x428] sm:$0xff]
    %v5301 = vld [vmem:[#allocation2 + $0x430] sm:$0xff]
    %v5302 = vld [vmem:[#allocation2 + $0x438] sm:$0xff]
    %v5303 = vld [vmem:[#allocation2 + $0x440] sm:$0xff]
    %v5304 = vld [vmem:[#allocation2 + $0x448] sm:$0xff]
    %v5305 = vld [vmem:[#allocation2 + $0x450] sm:$0xff]
    %v5306 = vld [vmem:[#allocation2 + $0x458] sm:$0xff]
    %v5307 = vld [vmem:[#allocation2 + $0x460] sm:$0xff]
    %v5308 = vld [vmem:[#allocation2 + $0x468] sm:$0xff]
    %v5309 = vld [vmem:[#allocation2 + $0x470] sm:$0xff]
    %v5310 = vld [vmem:[#allocation2 + $0x478] sm:$0xff]
    %v5311 = vld [vmem:[#allocation2 + $0x480] sm:$0xff]
    %v5312 = vld [vmem:[#allocation2 + $0x488] sm:$0xff]
    %v5313 = vld [vmem:[#allocation2 + $0x490] sm:$0xff]
    %v5314 = vld [vmem:[#allocation2 + $0x498] sm:$0xff]
    %v5315 = vld [vmem:[#allocation2 + $0x4a0] sm:$0xff]
    %v5316 = vld [vmem:[#allocation2 + $0x4a8] sm:$0xff]
    %v5317 = vld [vmem:[#allocation2 + $0x4b0] sm:$0xff]
    %v5318 = vld [vmem:[#allocation2 + $0x4b8] sm:$0xff]
    %v5319 = vld [vmem:[#allocation2 + $0x4c0] sm:$0xff]
    %v5320 = vld [vmem:[#allocation2 + $0x4c8] sm:$0xff]
    %v5321 = vld [vmem:[#allocation2 + $0x4d0] sm:$0xff]
    %v5322 = vld [vmem:[#allocation2 + $0x4d8] sm:$0xff]
    %v5323 = vld [vmem:[#allocation2 + $0x4e0] sm:$0xff]
    %v5324 = vld [vmem:[#allocation2 + $0x4e8] sm:$0xff]
    %v5325 = vld [vmem:[#allocation2 + $0x4f0] sm:$0xff]
    %v5326 = vld [vmem:[#allocation2 + $0x4f8] sm:$0xff]
    %v5327 = vld [vmem:[#allocation2 + $0x500] sm:$0xff]
    %v5328 = vld [vmem:[#allocation2 + $0x508] sm:$0xff]
    %v5329 = vld [vmem:[#allocation2 + $0x510] sm:$0xff]
    %v5330 = vld [vmem:[#allocation2 + $0x518] sm:$0xff]
    %v5331 = vld [vmem:[#allocation2 + $0x520] sm:$0xff]
    %v5332 = vld [vmem:[#allocation2 + $0x528] sm:$0xff]
    %v5333 = vld [vmem:[#allocation2 + $0x530] sm:$0xff]
    %v5334 = vld [vmem:[#allocation2 + $0x538] sm:$0xff]
    %v5335 = vld [vmem:[#allocation2 + $0x540] sm:$0xff]
    %v5336 = vld [vmem:[#allocation2 + $0x548] sm:$0xff]
    %v5337 = vld [vmem:[#allocation2 + $0x550] sm:$0xff]
    %v5338 = vld [vmem:[#allocation2 + $0x558] sm:$0xff]
    %v5339 = vld [vmem:[#allocation2 + $0x560] sm:$0xff]
    %v5340 = vld [vmem:[#allocation2 + $0x568] sm:$0xff]
    %v5341 = vld [vmem:[#allocation2 + $0x570] sm:$0xff]
    %v5342 = vld [vmem:[#allocation2 + $0x578] sm:$0xff]
    %v5343 = vld [vmem:[#allocation2 + $0x580] sm:$0xff]
    %v5344 = vld [vmem:[#allocation2 + $0x588] sm:$0xff]
    %v5345 = vld [vmem:[#allocation2 + $0x590] sm:$0xff]
    %v5346 = vld [vmem:[#allocation2 + $0x598] sm:$0xff]
    %v5347 = vld [vmem:[#allocation2 + $0x5a0] sm:$0xff]
    %v5348 = vld [vmem:[#allocation2 + $0x5a8] sm:$0xff]
    %v5349 = vld [vmem:[#allocation2 + $0x5b0] sm:$0xff]
    %v5350 = vld [vmem:[#allocation2 + $0x5b8] sm:$0xff]
    %v5351 = vld [vmem:[#allocation2 + $0x5c0] sm:$0xff]
    %v5352 = vld [vmem:[#allocation2 + $0x5c8] sm:$0xff]
    %v5353 = vld [vmem:[#allocation2 + $0x5d0] sm:$0xff]
    %v5354 = vld [vmem:[#allocation2 + $0x5d8] sm:$0xff]
    %v5355 = vld [vmem:[#allocation2 + $0x5e0] sm:$0xff]
    %v5356 = vld [vmem:[#allocation2 + $0x5e8] sm:$0xff]
    %v5357 = vld [vmem:[#allocation2 + $0x5f0] sm:$0xff]
    %v5358 = vld [vmem:[#allocation2 + $0x5f8] sm:$0xff]
    %v5359 = vld [vmem:[#allocation2 + $0x600] sm:$0xff]
    %v5360 = vld [vmem:[#allocation2 + $0x608] sm:$0xff]
    %v5361 = vld [vmem:[#allocation2 + $0x610] sm:$0xff]
    %v5362 = vld [vmem:[#allocation2 + $0x618] sm:$0xff]
    %v5363 = vld [vmem:[#allocation2 + $0x620] sm:$0xff]
    %v5364 = vld [vmem:[#allocation2 + $0x628] sm:$0xff]
    %v5365 = vld [vmem:[#allocation2 + $0x630] sm:$0xff]
    %v5366 = vld [vmem:[#allocation2 + $0x638] sm:$0xff]
    %v5367 = vld [vmem:[#allocation2 + $0x640] sm:$0xff]
    %v5368 = vld [vmem:[#allocation2 + $0x648] sm:$0xff]
    %v5369 = vld [vmem:[#allocation2 + $0x650] sm:$0xff]
    %v5370 = vld [vmem:[#allocation2 + $0x658] sm:$0xff]
    %v5371 = vld [vmem:[#allocation2 + $0x660] sm:$0xff]
    %v5372 = vld [vmem:[#allocation2 + $0x668] sm:$0xff]
    %v5373 = vld [vmem:[#allocation2 + $0x670] sm:$0xff]
    %v5374 = vld [vmem:[#allocation2 + $0x678] sm:$0xff]
    %v5375 = vld [vmem:[#allocation2 + $0x680] sm:$0xff]
    %v5376 = vld [vmem:[#allocation2 + $0x688] sm:$0xff]
    %v5377 = vld [vmem:[#allocation2 + $0x690] sm:$0xff]
    %v5378 = vld [vmem:[#allocation2 + $0x698] sm:$0xff]
    %v5379 = vld [vmem:[#allocation2 + $0x6a0] sm:$0xff]
    %v5380 = vld [vmem:[#allocation2 + $0x6a8] sm:$0xff]
    %v5381 = vld [vmem:[#allocation2 + $0x6b0] sm:$0xff]
    %v5382 = vld [vmem:[#allocation2 + $0x6b8] sm:$0xff]
    %v5383 = vld [vmem:[#allocation2 + $0x6c0] sm:$0xff]
    %v5384 = vld [vmem:[#allocation2 + $0x6c8] sm:$0xff]
    %v5385 = vld [vmem:[#allocation2 + $0x6d0] sm:$0xff]
    %v5386 = vld [vmem:[#allocation2 + $0x6d8] sm:$0xff]
    %v5387 = vld [vmem:[#allocation2 + $0x6e0] sm:$0xff]
    %v5388 = vld [vmem:[#allocation2 + $0x6e8] sm:$0xff]
    %v5389 = vld [vmem:[#allocation2 + $0x6f0] sm:$0xff]
    %v5390 = vld [vmem:[#allocation2 + $0x6f8] sm:$0xff]
    %v5391 = vld [vmem:[#allocation2 + $0x700] sm:$0xff]
    %v5392 = vld [vmem:[#allocation2 + $0x708] sm:$0xff]
    %v5393 = vld [vmem:[#allocation2 + $0x710] sm:$0xff]
    %v5394 = vld [vmem:[#allocation2 + $0x718] sm:$0xff]
    %v5395 = vld [vmem:[#allocation2 + $0x720] sm:$0xff]
    %v5396 = vld [vmem:[#allocation2 + $0x728] sm:$0xff]
    %v5397 = vld [vmem:[#allocation2 + $0x730] sm:$0xff]
    %v5398 = vld [vmem:[#allocation2 + $0x738] sm:$0xff]
    %v5399 = vld [vmem:[#allocation2 + $0x740] sm:$0xff]
    %v5400 = vld [vmem:[#allocation2 + $0x748] sm:$0xff]
    %v5401 = vld [vmem:[#allocation2 + $0x750] sm:$0xff]
    %v5402 = vld [vmem:[#allocation2 + $0x758] sm:$0xff]
    %v5403 = vld [vmem:[#allocation2 + $0x760] sm:$0xff]
    %v5404 = vld [vmem:[#allocation2 + $0x768] sm:$0xff]
    %v5405 = vld [vmem:[#allocation2 + $0x770] sm:$0xff]
    %v5406 = vld [vmem:[#allocation2 + $0x778] sm:$0xff]
    %v5407 = vld [vmem:[#allocation2 + $0x780] sm:$0xff]
    %v5408 = vld [vmem:[#allocation2 + $0x788] sm:$0xff]
    %v5409 = vld [vmem:[#allocation2 + $0x790] sm:$0xff]
    %v5410 = vld [vmem:[#allocation2 + $0x798] sm:$0xff]
    %v5411 = vld [vmem:[#allocation2 + $0x7a0] sm:$0xff]
    %v5412 = vld [vmem:[#allocation2 + $0x7a8] sm:$0xff]
    %v5413 = vld [vmem:[#allocation2 + $0x7b0] sm:$0xff]
    %v5414 = vld [vmem:[#allocation2 + $0x7b8] sm:$0xff]
    %v5415 = vld [vmem:[#allocation2 + $0x7c0] sm:$0xff]
    %v5416 = vld [vmem:[#allocation2 + $0x7c8] sm:$0xff]
    %v5417 = vld [vmem:[#allocation2 + $0x7d0] sm:$0xff]
    %v5418 = vld [vmem:[#allocation2 + $0x7d8] sm:$0xff]
    %v5419 = vld [vmem:[#allocation2 + $0x7e0] sm:$0xff]
    %v5420 = vld [vmem:[#allocation2 + $0x7e8] sm:$0xff]
    %v5421 = vld [vmem:[#allocation2 + $0x7f0] sm:$0xff]
    %v5422 = vld [vmem:[#allocation2 + $0x7f8] sm:$0xff]
    %v5423 = vld [vmem:[#allocation2 + $0x800] sm:$0xff]
    %v5424 = vld [vmem:[#allocation2 + $0x808] sm:$0xff]
    %v5425 = vld [vmem:[#allocation2 + $0x810] sm:$0xff]
    %v5426 = vld [vmem:[#allocation2 + $0x818] sm:$0xff]
    %v5427 = vld [vmem:[#allocation2 + $0x820] sm:$0xff]
    %v5428 = vld [vmem:[#allocation2 + $0x828] sm:$0xff]
    %v5429 = vld [vmem:[#allocation2 + $0x830] sm:$0xff]
    %v5430 = vld [vmem:[#allocation2 + $0x838] sm:$0xff]
    %v5431 = vld [vmem:[#allocation2 + $0x840] sm:$0xff]
    %v5432 = vld [vmem:[#allocation2 + $0x848] sm:$0xff]
    %v5433 = vld [vmem:[#allocation2 + $0x850] sm:$0xff]
    %v5434 = vld [vmem:[#allocation2 + $0x858] sm:$0xff]
    %v5435 = vld [vmem:[#allocation2 + $0x860] sm:$0xff]
    %v5436 = vld [vmem:[#allocation2 + $0x868] sm:$0xff]
    %v5437 = vld [vmem:[#allocation2 + $0x870] sm:$0xff]
    %v5438 = vld [vmem:[#allocation2 + $0x878] sm:$0xff]
    %v5439 = vld [vmem:[#allocation2 + $0x880] sm:$0xff]
    %v5440 = vld [vmem:[#allocation2 + $0x888] sm:$0xff]
    %v5441 = vld [vmem:[#allocation2 + $0x890] sm:$0xff]
    %v5442 = vld [vmem:[#allocation2 + $0x898] sm:$0xff]
    %v5443 = vld [vmem:[#allocation2 + $0x8a0] sm:$0xff]
    %v5444 = vld [vmem:[#allocation2 + $0x8a8] sm:$0xff]
    %v5445 = vld [vmem:[#allocation2 + $0x8b0] sm:$0xff]
    %v5446 = vld [vmem:[#allocation2 + $0x8b8] sm:$0xff]
    %v5447 = vld [vmem:[#allocation2 + $0x8c0] sm:$0xff]
    %v5448 = vld [vmem:[#allocation2 + $0x8c8] sm:$0xff]
    %v5449 = vld [vmem:[#allocation2 + $0x8d0] sm:$0xff]
    %v5450 = vld [vmem:[#allocation2 + $0x8d8] sm:$0xff]
    %v5451 = vld [vmem:[#allocation2 + $0x8e0] sm:$0xff]
    %v5452 = vld [vmem:[#allocation2 + $0x8e8] sm:$0xff]
    %v5453 = vld [vmem:[#allocation2 + $0x8f0] sm:$0xff]
    %v5454 = vld [vmem:[#allocation2 + $0x8f8] sm:$0xff]
    %v5455 = vld [vmem:[#allocation12] sm:$0x3f]
    %v5457 = vperm.slane %v5455, 0
    %v5458 = vperm.slane %v5455, 1
    %v5459 = vperm.slane %v5455, 2
    %v5460 = vperm.slane %v5455, 3
    %v5461 = vperm.slane %v5455, 4
    %v5462 = vperm.slane %v5455, 5
    %v5757 = vunpack.c.l.b16 %v5167
    %v5758 = vunpack.c.h.b16 %v5167
    %v5759 = vunpack.c.l.b16 %v5168
    %v5760 = vunpack.c.h.b16 %v5168
    %v5761 = vunpack.c.l.b16 %v5169
    %v5762 = vunpack.c.h.b16 %v5169
    %v5763 = vunpack.c.l.b16 %v5170
    %v5764 = vunpack.c.h.b16 %v5170
    %v5765 = vunpack.c.l.b16 %v5171
    %v5766 = vunpack.c.h.b16 %v5171
    %v5767 = vunpack.c.l.b16 %v5172
    %v5768 = vunpack.c.h.b16 %v5172
    %v5769 = vunpack.c.l.b16 %v5173
    %v5770 = vunpack.c.h.b16 %v5173
    %v5771 = vunpack.c.l.b16 %v5174
    %v5772 = vunpack.c.h.b16 %v5174
    %v5773 = vunpack.c.l.b16 %v5175
    %v5774 = vunpack.c.h.b16 %v5175
    %v5775 = vunpack.c.l.b16 %v5176
    %v5776 = vunpack.c.h.b16 %v5176
    %v5777 = vunpack.c.l.b16 %v5177
    %v5778 = vunpack.c.h.b16 %v5177
    %v5779 = vunpack.c.l.b16 %v5178
    %v5780 = vunpack.c.h.b16 %v5178
    %v5781 = vunpack.c.l.b16 %v5179
    %v5782 = vunpack.c.h.b16 %v5179
    %v5783 = vunpack.c.l.b16 %v5180
    %v5784 = vunpack.c.h.b16 %v5180
    %v5785 = vunpack.c.l.b16 %v5181
    %v5786 = vunpack.c.h.b16 %v5181
    %v5787 = vunpack.c.l.b16 %v5182
    %v5788 = vunpack.c.h.b16 %v5182
    %v5789 = vunpack.c.l.b16 %v5183
    %v5790 = vunpack.c.h.b16 %v5183
    %v5791 = vunpack.c.l.b16 %v5184
    %v5792 = vunpack.c.h.b16 %v5184
    %v5793 = vunpack.c.l.b16 %v5185
    %v5794 = vunpack.c.h.b16 %v5185
    %v5795 = vunpack.c.l.b16 %v5186
    %v5796 = vunpack.c.h.b16 %v5186
    %v5797 = vunpack.c.l.b16 %v5187
    %v5798 = vunpack.c.h.b16 %v5187
    %v5799 = vunpack.c.l.b16 %v5188
    %v5800 = vunpack.c.h.b16 %v5188
    %v5801 = vunpack.c.l.b16 %v5189
    %v5802 = vunpack.c.h.b16 %v5189
    %v5803 = vunpack.c.l.b16 %v5190
    %v5804 = vunpack.c.h.b16 %v5190
    %v5805 = vunpack.c.l.b16 %v5191
    %v5806 = vunpack.c.h.b16 %v5191
    %v5807 = vunpack.c.l.b16 %v5192
    %v5808 = vunpack.c.h.b16 %v5192
    %v5809 = vunpack.c.l.b16 %v5193
    %v5810 = vunpack.c.h.b16 %v5193
    %v5811 = vunpack.c.l.b16 %v5194
    %v5812 = vunpack.c.h.b16 %v5194
    %v5813 = vunpack.c.l.b16 %v5195
    %v5814 = vunpack.c.h.b16 %v5195
    %v5815 = vunpack.c.l.b16 %v5196
    %v5816 = vunpack.c.h.b16 %v5196
    %v5817 = vunpack.c.l.b16 %v5197
    %v5818 = vunpack.c.h.b16 %v5197
    %v5819 = vunpack.c.l.b16 %v5198
    %v5820 = vunpack.c.h.b16 %v5198
    %v5821 = vunpack.c.l.b16 %v5199
    %v5822 = vunpack.c.h.b16 %v5199
    %v5823 = vunpack.c.l.b16 %v5200
    %v5824 = vunpack.c.h.b16 %v5200
    %v5825 = vunpack.c.l.b16 %v5201
    %v5826 = vunpack.c.h.b16 %v5201
    %v5827 = vunpack.c.l.b16 %v5202
    %v5828 = vunpack.c.h.b16 %v5202
    %v5829 = vunpack.c.l.b16 %v5203
    %v5830 = vunpack.c.h.b16 %v5203
    %v5831 = vunpack.c.l.b16 %v5204
    %v5832 = vunpack.c.h.b16 %v5204
    %v5833 = vunpack.c.l.b16 %v5205
    %v5834 = vunpack.c.h.b16 %v5205
    %v5835 = vunpack.c.l.b16 %v5206
    %v5836 = vunpack.c.h.b16 %v5206
    %v5837 = vunpack.c.l.b16 %v5207
    %v5838 = vunpack.c.h.b16 %v5207
    %v5839 = vunpack.c.l.b16 %v5208
    %v5840 = vunpack.c.h.b16 %v5208
    %v5841 = vunpack.c.l.b16 %v5209
    %v5842 = vunpack.c.h.b16 %v5209
    %v5843 = vunpack.c.l.b16 %v5210
    %v5844 = vunpack.c.h.b16 %v5210
    %v5845 = vunpack.c.l.b16 %v5211
    %v5846 = vunpack.c.h.b16 %v5211
    %v5847 = vunpack.c.l.b16 %v5212
    %v5848 = vunpack.c.h.b16 %v5212
    %v5849 = vunpack.c.l.b16 %v5213
    %v5850 = vunpack.c.h.b16 %v5213
    %v5851 = vunpack.c.l.b16 %v5214
    %v5852 = vunpack.c.h.b16 %v5214
    %v5853 = vunpack.c.l.b16 %v5215
    %v5854 = vunpack.c.h.b16 %v5215
    %v5855 = vunpack.c.l.b16 %v5216
    %v5856 = vunpack.c.h.b16 %v5216
    %v5857 = vunpack.c.l.b16 %v5217
    %v5858 = vunpack.c.h.b16 %v5217
    %v5859 = vunpack.c.l.b16 %v5218
    %v5860 = vunpack.c.h.b16 %v5218
    %v5861 = vunpack.c.l.b16 %v5219
    %v5862 = vunpack.c.h.b16 %v5219
    %v5863 = vunpack.c.l.b16 %v5220
    %v5864 = vunpack.c.h.b16 %v5220
    %v5865 = vunpack.c.l.b16 %v5221
    %v5866 = vunpack.c.h.b16 %v5221
    %v5867 = vunpack.c.l.b16 %v5222
    %v5868 = vunpack.c.h.b16 %v5222
    %v5869 = vunpack.c.l.b16 %v5223
    %v5870 = vunpack.c.h.b16 %v5223
    %v5871 = vunpack.c.l.b16 %v5224
    %v5872 = vunpack.c.h.b16 %v5224
    %v5873 = vunpack.c.l.b16 %v5225
    %v5874 = vunpack.c.h.b16 %v5225
    %v5875 = vunpack.c.l.b16 %v5226
    %v5876 = vunpack.c.h.b16 %v5226
    %v5877 = vunpack.c.l.b16 %v5227
    %v5878 = vunpack.c.h.b16 %v5227
    %v5879 = vunpack.c.l.b16 %v5228
    %v5880 = vunpack.c.h.b16 %v5228
    %v5881 = vunpack.c.l.b16 %v5229
    %v5882 = vunpack.c.h.b16 %v5229
    %v5883 = vunpack.c.l.b16 %v5230
    %v5884 = vunpack.c.h.b16 %v5230
    %v5885 = vunpack.c.l.b16 %v5231
    %v5886 = vunpack.c.h.b16 %v5231
    %v5887 = vunpack.c.l.b16 %v5232
    %v5888 = vunpack.c.h.b16 %v5232
    %v5889 = vunpack.c.l.b16 %v5233
    %v5890 = vunpack.c.h.b16 %v5233
    %v5891 = vunpack.c.l.b16 %v5234
    %v5892 = vunpack.c.h.b16 %v5234
    %v5893 = vunpack.c.l.b16 %v5235
    %v5894 = vunpack.c.h.b16 %v5235
    %v5895 = vunpack.c.l.b16 %v5236
    %v5896 = vunpack.c.h.b16 %v5236
    %v5897 = vunpack.c.l.b16 %v5237
    %v5898 = vunpack.c.h.b16 %v5237
    %v5899 = vunpack.c.l.b16 %v5238
    %v5900 = vunpack.c.h.b16 %v5238
    %v5901 = vunpack.c.l.b16 %v5239
    %v5902 = vunpack.c.h.b16 %v5239
    %v5903 = vunpack.c.l.b16 %v5240
    %v5904 = vunpack.c.h.b16 %v5240
    %v5905 = vunpack.c.l.b16 %v5241
    %v5906 = vunpack.c.h.b16 %v5241
    %v5907 = vunpack.c.l.b16 %v5242
    %v5908 = vunpack.c.h.b16 %v5242
    %v5909 = vunpack.c.l.b16 %v5243
    %v5910 = vunpack.c.h.b16 %v5243
    %v5911 = vunpack.c.l.b16 %v5244
    %v5912 = vunpack.c.h.b16 %v5244
    %v5913 = vunpack.c.l.b16 %v5245
    %v5914 = vunpack.c.h.b16 %v5245
    %v5915 = vunpack.c.l.b16 %v5246
    %v5916 = vunpack.c.h.b16 %v5246
    %v5917 = vunpack.c.l.b16 %v5247
    %v5918 = vunpack.c.h.b16 %v5247
    %v5919 = vunpack.c.l.b16 %v5248
    %v5920 = vunpack.c.h.b16 %v5248
    %v5921 = vunpack.c.l.b16 %v5249
    %v5922 = vunpack.c.h.b16 %v5249
    %v5923 = vunpack.c.l.b16 %v5250
    %v5924 = vunpack.c.h.b16 %v5250
    %v5925 = vunpack.c.l.b16 %v5251
    %v5926 = vunpack.c.h.b16 %v5251
    %v5927 = vunpack.c.l.b16 %v5252
    %v5928 = vunpack.c.h.b16 %v5252
    %v5929 = vunpack.c.l.b16 %v5253
    %v5930 = vunpack.c.h.b16 %v5253
    %v5931 = vunpack.c.l.b16 %v5254
    %v5932 = vunpack.c.h.b16 %v5254
    %v5933 = vunpack.c.l.b16 %v5255
    %v5934 = vunpack.c.h.b16 %v5255
    %v5935 = vunpack.c.l.b16 %v5256
    %v5936 = vunpack.c.h.b16 %v5256
    %v5937 = vunpack.c.l.b16 %v5257
    %v5938 = vunpack.c.h.b16 %v5257
    %v5939 = vunpack.c.l.b16 %v5258
    %v5940 = vunpack.c.h.b16 %v5258
    %v5941 = vunpack.c.l.b16 %v5259
    %v5942 = vunpack.c.h.b16 %v5259
    %v5943 = vunpack.c.l.b16 %v5260
    %v5944 = vunpack.c.h.b16 %v5260
    %v5945 = vunpack.c.l.b16 %v5261
    %v5946 = vunpack.c.h.b16 %v5261
    %v5947 = vunpack.c.l.b16 %v5262
    %v5948 = vunpack.c.h.b16 %v5262
    %v5949 = vunpack.c.l.b16 %v5263
    %v5950 = vunpack.c.h.b16 %v5263
    %v5951 = vunpack.c.l.b16 %v5264
    %v5952 = vunpack.c.h.b16 %v5264
    %v5953 = vunpack.c.l.b16 %v5265
    %v5954 = vunpack.c.h.b16 %v5265
    %v5955 = vunpack.c.l.b16 %v5266
    %v5956 = vunpack.c.h.b16 %v5266
    %v5957 = vunpack.c.l.b16 %v5267
    %v5958 = vunpack.c.h.b16 %v5267
    %v5959 = vunpack.c.l.b16 %v5268
    %v5960 = vunpack.c.h.b16 %v5268
    %v5961 = vunpack.c.l.b16 %v5269
    %v5962 = vunpack.c.h.b16 %v5269
    %v5963 = vunpack.c.l.b16 %v5270
    %v5964 = vunpack.c.h.b16 %v5270
    %v5965 = vunpack.c.l.b16 %v5271
    %v5966 = vunpack.c.h.b16 %v5271
    %v5967 = vunpack.c.l.b16 %v5272
    %v5968 = vunpack.c.h.b16 %v5272
    %v5969 = vunpack.c.l.b16 %v5273
    %v5970 = vunpack.c.h.b16 %v5273
    %v5971 = vunpack.c.l.b16 %v5274
    %v5972 = vunpack.c.h.b16 %v5274
    %v5973 = vunpack.c.l.b16 %v5275
    %v5974 = vunpack.c.h.b16 %v5275
    %v5975 = vunpack.c.l.b16 %v5276
    %v5976 = vunpack.c.h.b16 %v5276
    %v5977 = vunpack.c.l.b16 %v5277
    %v5978 = vunpack.c.h.b16 %v5277
    %v5979 = vunpack.c.l.b16 %v5278
    %v5980 = vunpack.c.h.b16 %v5278
    %v5981 = vunpack.c.l.b16 %v5279
    %v5982 = vunpack.c.h.b16 %v5279
    %v5983 = vunpack.c.l.b16 %v5280
    %v5984 = vunpack.c.h.b16 %v5280
    %v5985 = vunpack.c.l.b16 %v5281
    %v5986 = vunpack.c.h.b16 %v5281
    %v5987 = vunpack.c.l.b16 %v5282
    %v5988 = vunpack.c.h.b16 %v5282
    %v5989 = vunpack.c.l.b16 %v5283
    %v5990 = vunpack.c.h.b16 %v5283
    %v5991 = vunpack.c.l.b16 %v5284
    %v5992 = vunpack.c.h.b16 %v5284
    %v5993 = vunpack.c.l.b16 %v5285
    %v5994 = vunpack.c.h.b16 %v5285
    %v5995 = vunpack.c.l.b16 %v5286
    %v5996 = vunpack.c.h.b16 %v5286
    %v5997 = vunpack.c.l.b16 %v5287
    %v5998 = vunpack.c.h.b16 %v5287
    %v5999 = vunpack.c.l.b16 %v5288
    %v6000 = vunpack.c.h.b16 %v5288
    %v6001 = vunpack.c.l.b16 %v5289
    %v6002 = vunpack.c.h.b16 %v5289
    %v6003 = vunpack.c.l.b16 %v5290
    %v6004 = vunpack.c.h.b16 %v5290
    %v6005 = vunpack.c.l.b16 %v5291
    %v6006 = vunpack.c.h.b16 %v5291
    %v6007 = vunpack.c.l.b16 %v5292
    %v6008 = vunpack.c.h.b16 %v5292
    %v6009 = vunpack.c.l.b16 %v5293
    %v6010 = vunpack.c.h.b16 %v5293
    %v6011 = vunpack.c.l.b16 %v5294
    %v6012 = vunpack.c.h.b16 %v5294
    %v6013 = vunpack.c.l.b16 %v5295
    %v6014 = vunpack.c.h.b16 %v5295
    %v6015 = vunpack.c.l.b16 %v5296
    %v6016 = vunpack.c.h.b16 %v5296
    %v6017 = vunpack.c.l.b16 %v5297
    %v6018 = vunpack.c.h.b16 %v5297
    %v6019 = vunpack.c.l.b16 %v5298
    %v6020 = vunpack.c.h.b16 %v5298
    %v6021 = vunpack.c.l.b16 %v5299
    %v6022 = vunpack.c.h.b16 %v5299
    %v6023 = vunpack.c.l.b16 %v5300
    %v6024 = vunpack.c.h.b16 %v5300
    %v6025 = vunpack.c.l.b16 %v5301
    %v6026 = vunpack.c.h.b16 %v5301
    %v6027 = vunpack.c.l.b16 %v5302
    %v6028 = vunpack.c.h.b16 %v5302
    %v6029 = vunpack.c.l.b16 %v5303
    %v6030 = vunpack.c.h.b16 %v5303
    %v6031 = vunpack.c.l.b16 %v5304
    %v6032 = vunpack.c.h.b16 %v5304
    %v6033 = vunpack.c.l.b16 %v5305
    %v6034 = vunpack.c.h.b16 %v5305
    %v6035 = vunpack.c.l.b16 %v5306
    %v6036 = vunpack.c.h.b16 %v5306
    %v6037 = vunpack.c.l.b16 %v5307
    %v6038 = vunpack.c.h.b16 %v5307
    %v6039 = vunpack.c.l.b16 %v5308
    %v6040 = vunpack.c.h.b16 %v5308
    %v6041 = vunpack.c.l.b16 %v5309
    %v6042 = vunpack.c.h.b16 %v5309
    %v6043 = vunpack.c.l.b16 %v5310
    %v6044 = vunpack.c.h.b16 %v5310
    %v6045 = vunpack.c.l.b16 %v5311
    %v6046 = vunpack.c.h.b16 %v5311
    %v6047 = vunpack.c.l.b16 %v5312
    %v6048 = vunpack.c.h.b16 %v5312
    %v6049 = vunpack.c.l.b16 %v5313
    %v6050 = vunpack.c.h.b16 %v5313
    %v6051 = vunpack.c.l.b16 %v5314
    %v6052 = vunpack.c.h.b16 %v5314
    %v6053 = vunpack.c.l.b16 %v5315
    %v6054 = vunpack.c.h.b16 %v5315
    %v6055 = vunpack.c.l.b16 %v5316
    %v6056 = vunpack.c.h.b16 %v5316
    %v6057 = vunpack.c.l.b16 %v5317
    %v6058 = vunpack.c.h.b16 %v5317
    %v6059 = vunpack.c.l.b16 %v5318
    %v6060 = vunpack.c.h.b16 %v5318
    %v6061 = vunpack.c.l.b16 %v5319
    %v6062 = vunpack.c.h.b16 %v5319
    %v6063 = vunpack.c.l.b16 %v5320
    %v6064 = vunpack.c.h.b16 %v5320
    %v6065 = vunpack.c.l.b16 %v5321
    %v6066 = vunpack.c.h.b16 %v5321
    %v6067 = vunpack.c.l.b16 %v5322
    %v6068 = vunpack.c.h.b16 %v5322
    %v6069 = vunpack.c.l.b16 %v5323
    %v6070 = vunpack.c.h.b16 %v5323
    %v6071 = vunpack.c.l.b16 %v5324
    %v6072 = vunpack.c.h.b16 %v5324
    %v6073 = vunpack.c.l.b16 %v5325
    %v6074 = vunpack.c.h.b16 %v5325
    %v6075 = vunpack.c.l.b16 %v5326
    %v6076 = vunpack.c.h.b16 %v5326
    %v6077 = vunpack.c.l.b16 %v5327
    %v6078 = vunpack.c.h.b16 %v5327
    %v6079 = vunpack.c.l.b16 %v5328
    %v6080 = vunpack.c.h.b16 %v5328
    %v6081 = vunpack.c.l.b16 %v5329
    %v6082 = vunpack.c.h.b16 %v5329
    %v6083 = vunpack.c.l.b16 %v5330
    %v6084 = vunpack.c.h.b16 %v5330
    %v6085 = vunpack.c.l.b16 %v5331
    %v6086 = vunpack.c.h.b16 %v5331
    %v6087 = vunpack.c.l.b16 %v5332
    %v6088 = vunpack.c.h.b16 %v5332
    %v6089 = vunpack.c.l.b16 %v5333
    %v6090 = vunpack.c.h.b16 %v5333
    %v6091 = vunpack.c.l.b16 %v5334
    %v6092 = vunpack.c.h.b16 %v5334
    %v6093 = vunpack.c.l.b16 %v5335
    %v6094 = vunpack.c.h.b16 %v5335
    %v6095 = vunpack.c.l.b16 %v5336
    %v6096 = vunpack.c.h.b16 %v5336
    %v6097 = vunpack.c.l.b16 %v5337
    %v6098 = vunpack.c.h.b16 %v5337
    %v6099 = vunpack.c.l.b16 %v5338
    %v6100 = vunpack.c.h.b16 %v5338
    %v6101 = vunpack.c.l.b16 %v5339
    %v6102 = vunpack.c.h.b16 %v5339
    %v6103 = vunpack.c.l.b16 %v5340
    %v6104 = vunpack.c.h.b16 %v5340
    %v6105 = vunpack.c.l.b16 %v5341
    %v6106 = vunpack.c.h.b16 %v5341
    %v6107 = vunpack.c.l.b16 %v5342
    %v6108 = vunpack.c.h.b16 %v5342
    %v6109 = vunpack.c.l.b16 %v5343
    %v6110 = vunpack.c.h.b16 %v5343
    %v6111 = vunpack.c.l.b16 %v5344
    %v6112 = vunpack.c.h.b16 %v5344
    %v6113 = vunpack.c.l.b16 %v5345
    %v6114 = vunpack.c.h.b16 %v5345
    %v6115 = vunpack.c.l.b16 %v5346
    %v6116 = vunpack.c.h.b16 %v5346
    %v6117 = vunpack.c.l.b16 %v5347
    %v6118 = vunpack.c.h.b16 %v5347
    %v6119 = vunpack.c.l.b16 %v5348
    %v6120 = vunpack.c.h.b16 %v5348
    %v6121 = vunpack.c.l.b16 %v5349
    %v6122 = vunpack.c.h.b16 %v5349
    %v6123 = vunpack.c.l.b16 %v5350
    %v6124 = vunpack.c.h.b16 %v5350
    %v6125 = vunpack.c.l.b16 %v5351
    %v6126 = vunpack.c.h.b16 %v5351
    %v6127 = vunpack.c.l.b16 %v5352
    %v6128 = vunpack.c.h.b16 %v5352
    %v6129 = vunpack.c.l.b16 %v5353
    %v6130 = vunpack.c.h.b16 %v5353
    %v6131 = vunpack.c.l.b16 %v5354
    %v6132 = vunpack.c.h.b16 %v5354
    %v6133 = vunpack.c.l.b16 %v5355
    %v6134 = vunpack.c.h.b16 %v5355
    %v6135 = vunpack.c.l.b16 %v5356
    %v6136 = vunpack.c.h.b16 %v5356
    %v6137 = vunpack.c.l.b16 %v5357
    %v6138 = vunpack.c.h.b16 %v5357
    %v6139 = vunpack.c.l.b16 %v5358
    %v6140 = vunpack.c.h.b16 %v5358
    %v6141 = vunpack.c.l.b16 %v5359
    %v6142 = vunpack.c.h.b16 %v5359
    %v6143 = vunpack.c.l.b16 %v5360
    %v6144 = vunpack.c.h.b16 %v5360
    %v6145 = vunpack.c.l.b16 %v5361
    %v6146 = vunpack.c.h.b16 %v5361
    %v6147 = vunpack.c.l.b16 %v5362
    %v6148 = vunpack.c.h.b16 %v5362
    %v6149 = vunpack.c.l.b16 %v5363
    %v6150 = vunpack.c.h.b16 %v5363
    %v6151 = vunpack.c.l.b16 %v5364
    %v6152 = vunpack.c.h.b16 %v5364
    %v6153 = vunpack.c.l.b16 %v5365
    %v6154 = vunpack.c.h.b16 %v5365
    %v6155 = vunpack.c.l.b16 %v5366
    %v6156 = vunpack.c.h.b16 %v5366
    %v6157 = vunpack.c.l.b16 %v5367
    %v6158 = vunpack.c.h.b16 %v5367
    %v6159 = vunpack.c.l.b16 %v5368
    %v6160 = vunpack.c.h.b16 %v5368
    %v6161 = vunpack.c.l.b16 %v5369
    %v6162 = vunpack.c.h.b16 %v5369
    %v6163 = vunpack.c.l.b16 %v5370
    %v6164 = vunpack.c.h.b16 %v5370
    %v6165 = vunpack.c.l.b16 %v5371
    %v6166 = vunpack.c.h.b16 %v5371
    %v6167 = vunpack.c.l.b16 %v5372
    %v6168 = vunpack.c.h.b16 %v5372
    %v6169 = vunpack.c.l.b16 %v5373
    %v6170 = vunpack.c.h.b16 %v5373
    %v6171 = vunpack.c.l.b16 %v5374
    %v6172 = vunpack.c.h.b16 %v5374
    %v6173 = vunpack.c.l.b16 %v5375
    %v6174 = vunpack.c.h.b16 %v5375
    %v6175 = vunpack.c.l.b16 %v5376
    %v6176 = vunpack.c.h.b16 %v5376
    %v6177 = vunpack.c.l.b16 %v5377
    %v6178 = vunpack.c.h.b16 %v5377
    %v6179 = vunpack.c.l.b16 %v5378
    %v6180 = vunpack.c.h.b16 %v5378
    %v6181 = vunpack.c.l.b16 %v5379
    %v6182 = vunpack.c.h.b16 %v5379
    %v6183 = vunpack.c.l.b16 %v5380
    %v6184 = vunpack.c.h.b16 %v5380
    %v6185 = vunpack.c.l.b16 %v5381
    %v6186 = vunpack.c.h.b16 %v5381
    %v6187 = vunpack.c.l.b16 %v5382
    %v6188 = vunpack.c.h.b16 %v5382
    %v6189 = vunpack.c.l.b16 %v5383
    %v6190 = vunpack.c.h.b16 %v5383
    %v6191 = vunpack.c.l.b16 %v5384
    %v6192 = vunpack.c.h.b16 %v5384
    %v6193 = vunpack.c.l.b16 %v5385
    %v6194 = vunpack.c.h.b16 %v5385
    %v6195 = vunpack.c.l.b16 %v5386
    %v6196 = vunpack.c.h.b16 %v5386
    %v6197 = vunpack.c.l.b16 %v5387
    %v6198 = vunpack.c.h.b16 %v5387
    %v6199 = vunpack.c.l.b16 %v5388
    %v6200 = vunpack.c.h.b16 %v5388
    %v6201 = vunpack.c.l.b16 %v5389
    %v6202 = vunpack.c.h.b16 %v5389
    %v6203 = vunpack.c.l.b16 %v5390
    %v6204 = vunpack.c.h.b16 %v5390
    %v6205 = vunpack.c.l.b16 %v5391
    %v6206 = vunpack.c.h.b16 %v5391
    %v6207 = vunpack.c.l.b16 %v5392
    %v6208 = vunpack.c.h.b16 %v5392
    %v6209 = vunpack.c.l.b16 %v5393
    %v6210 = vunpack.c.h.b16 %v5393
    %v6211 = vunpack.c.l.b16 %v5394
    %v6212 = vunpack.c.h.b16 %v5394
    %v6213 = vunpack.c.l.b16 %v5395
    %v6214 = vunpack.c.h.b16 %v5395
    %v6215 = vunpack.c.l.b16 %v5396
    %v6216 = vunpack.c.h.b16 %v5396
    %v6217 = vunpack.c.l.b16 %v5397
    %v6218 = vunpack.c.h.b16 %v5397
    %v6219 = vunpack.c.l.b16 %v5398
    %v6220 = vunpack.c.h.b16 %v5398
    %v6221 = vunpack.c.l.b16 %v5399
    %v6222 = vunpack.c.h.b16 %v5399
    %v6223 = vunpack.c.l.b16 %v5400
    %v6224 = vunpack.c.h.b16 %v5400
    %v6225 = vunpack.c.l.b16 %v5401
    %v6226 = vunpack.c.h.b16 %v5401
    %v6227 = vunpack.c.l.b16 %v5402
    %v6228 = vunpack.c.h.b16 %v5402
    %v6229 = vunpack.c.l.b16 %v5403
    %v6230 = vunpack.c.h.b16 %v5403
    %v6231 = vunpack.c.l.b16 %v5404
    %v6232 = vunpack.c.h.b16 %v5404
    %v6233 = vunpack.c.l.b16 %v5405
    %v6234 = vunpack.c.h.b16 %v5405
    %v6235 = vunpack.c.l.b16 %v5406
    %v6236 = vunpack.c.h.b16 %v5406
    %v6237 = vunpack.c.l.b16 %v5407
    %v6238 = vunpack.c.h.b16 %v5407
    %v6239 = vunpack.c.l.b16 %v5408
    %v6240 = vunpack.c.h.b16 %v5408
    %v6241 = vunpack.c.l.b16 %v5409
    %v6242 = vunpack.c.h.b16 %v5409
    %v6243 = vunpack.c.l.b16 %v5410
    %v6244 = vunpack.c.h.b16 %v5410
    %v6245 = vunpack.c.l.b16 %v5411
    %v6246 = vunpack.c.h.b16 %v5411
    %v6247 = vunpack.c.l.b16 %v5412
    %v6248 = vunpack.c.h.b16 %v5412
    %v6249 = vunpack.c.l.b16 %v5413
    %v6250 = vunpack.c.h.b16 %v5413
    %v6251 = vunpack.c.l.b16 %v5414
    %v6252 = vunpack.c.h.b16 %v5414
    %v6253 = vunpack.c.l.b16 %v5415
    %v6254 = vunpack.c.h.b16 %v5415
    %v6255 = vunpack.c.l.b16 %v5416
    %v6256 = vunpack.c.h.b16 %v5416
    %v6257 = vunpack.c.l.b16 %v5417
    %v6258 = vunpack.c.h.b16 %v5417
    %v6259 = vunpack.c.l.b16 %v5418
    %v6260 = vunpack.c.h.b16 %v5418
    %v6261 = vunpack.c.l.b16 %v5419
    %v6262 = vunpack.c.h.b16 %v5419
    %v6263 = vunpack.c.l.b16 %v5420
    %v6264 = vunpack.c.h.b16 %v5420
    %v6265 = vunpack.c.l.b16 %v5421
    %v6266 = vunpack.c.h.b16 %v5421
    %v6267 = vunpack.c.l.b16 %v5422
    %v6268 = vunpack.c.h.b16 %v5422
    %v6269 = vunpack.c.l.b16 %v5423
    %v6270 = vunpack.c.h.b16 %v5423
    %v6271 = vunpack.c.l.b16 %v5424
    %v6272 = vunpack.c.h.b16 %v5424
    %v6273 = vunpack.c.l.b16 %v5425
    %v6274 = vunpack.c.h.b16 %v5425
    %v6275 = vunpack.c.l.b16 %v5426
    %v6276 = vunpack.c.h.b16 %v5426
    %v6277 = vunpack.c.l.b16 %v5427
    %v6278 = vunpack.c.h.b16 %v5427
    %v6279 = vunpack.c.l.b16 %v5428
    %v6280 = vunpack.c.h.b16 %v5428
    %v6281 = vunpack.c.l.b16 %v5429
    %v6282 = vunpack.c.h.b16 %v5429
    %v6283 = vunpack.c.l.b16 %v5430
    %v6284 = vunpack.c.h.b16 %v5430
    %v6285 = vunpack.c.l.b16 %v5431
    %v6286 = vunpack.c.h.b16 %v5431
    %v6287 = vunpack.c.l.b16 %v5432
    %v6288 = vunpack.c.h.b16 %v5432
    %v6289 = vunpack.c.l.b16 %v5433
    %v6290 = vunpack.c.h.b16 %v5433
    %v6291 = vunpack.c.l.b16 %v5434
    %v6292 = vunpack.c.h.b16 %v5434
    %v6293 = vunpack.c.l.b16 %v5435
    %v6294 = vunpack.c.h.b16 %v5435
    %v6295 = vunpack.c.l.b16 %v5436
    %v6296 = vunpack.c.h.b16 %v5436
    %v6297 = vunpack.c.l.b16 %v5437
    %v6298 = vunpack.c.h.b16 %v5437
    %v6299 = vunpack.c.l.b16 %v5438
    %v6300 = vunpack.c.h.b16 %v5438
    %v6301 = vunpack.c.l.b16 %v5439
    %v6302 = vunpack.c.h.b16 %v5439
    %v6303 = vunpack.c.l.b16 %v5440
    %v6304 = vunpack.c.h.b16 %v5440
    %v6305 = vunpack.c.l.b16 %v5441
    %v6306 = vunpack.c.h.b16 %v5441
    %v6307 = vunpack.c.l.b16 %v5442
    %v6308 = vunpack.c.h.b16 %v5442
    %v6309 = vunpack.c.l.b16 %v5443
    %v6310 = vunpack.c.h.b16 %v5443
    %v6311 = vunpack.c.l.b16 %v5444
    %v6312 = vunpack.c.h.b16 %v5444
    %v6313 = vunpack.c.l.b16 %v5445
    %v6314 = vunpack.c.h.b16 %v5445
    %v6315 = vunpack.c.l.b16 %v5446
    %v6316 = vunpack.c.h.b16 %v5446
    %v6317 = vunpack.c.l.b16 %v5447
    %v6318 = vunpack.c.h.b16 %v5447
    %v6319 = vunpack.c.l.b16 %v5448
    %v6320 = vunpack.c.h.b16 %v5448
    %v6321 = vunpack.c.l.b16 %v5449
    %v6322 = vunpack.c.h.b16 %v5449
    %v6323 = vunpack.c.l.b16 %v5450
    %v6324 = vunpack.c.h.b16 %v5450
    %v6325 = vunpack.c.l.b16 %v5451
    %v6326 = vunpack.c.h.b16 %v5451
    %v6327 = vunpack.c.l.b16 %v5452
    %v6328 = vunpack.c.h.b16 %v5452
    %v6329 = vunpack.c.l.b16 %v5453
    %v6330 = vunpack.c.h.b16 %v5453
    %v6331 = vunpack.c.l.b16 %v5454
    %v6332 = vunpack.c.h.b16 %v5454
    %v6333 = vpack.c.b16 %v5763, %v5757
    %v6334 = vpack.c.b16 %v5764, %v5758
    %v6335 = vpack.c.b16 %v5765, %v5759
    %v6336 = vpack.c.b16 %v5766, %v5760
    %v6337 = vpack.c.b16 %v5767, %v5761
    %v6338 = vpack.c.b16 %v5768, %v5762
    %v6339 = vpack.c.b16 %v5775, %v5769
    %v6340 = vpack.c.b16 %v5776, %v5770
    %v6341 = vpack.c.b16 %v5777, %v5771
    %v6342 = vpack.c.b16 %v5778, %v5772
    %v6343 = vpack.c.b16 %v5779, %v5773
    %v6344 = vpack.c.b16 %v5780, %v5774
    %v6345 = vpack.c.b16 %v5787, %v5781
    %v6346 = vpack.c.b16 %v5788, %v5782
    %v6347 = vpack.c.b16 %v5789, %v5783
    %v6348 = vpack.c.b16 %v5790, %v5784
    %v6349 = vpack.c.b16 %v5791, %v5785
    %v6350 = vpack.c.b16 %v5792, %v5786
    %v6351 = vpack.c.b16 %v5799, %v5793
    %v6352 = vpack.c.b16 %v5800, %v5794
    %v6353 = vpack.c.b16 %v5801, %v5795
    %v6354 = vpack.c.b16 %v5802, %v5796
    %v6355 = vpack.c.b16 %v5803, %v5797
    %v6356 = vpack.c.b16 %v5804, %v5798
    %v6357 = vpack.c.b16 %v5811, %v5805
    %v6358 = vpack.c.b16 %v5812, %v5806
    %v6359 = vpack.c.b16 %v5813, %v5807
    %v6360 = vpack.c.b16 %v5814, %v5808
    %v6361 = vpack.c.b16 %v5815, %v5809
    %v6362 = vpack.c.b16 %v5816, %v5810
    %v6363 = vpack.c.b16 %v5823, %v5817
    %v6364 = vpack.c.b16 %v5824, %v5818
    %v6365 = vpack.c.b16 %v5825, %v5819
    %v6366 = vpack.c.b16 %v5826, %v5820
    %v6367 = vpack.c.b16 %v5827, %v5821
    %v6368 = vpack.c.b16 %v5828, %v5822
    %v6369 = vpack.c.b16 %v5835, %v5829
    %v6370 = vpack.c.b16 %v5836, %v5830
    %v6371 = vpack.c.b16 %v5837, %v5831
    %v6372 = vpack.c.b16 %v5838, %v5832
    %v6373 = vpack.c.b16 %v5839, %v5833
    %v6374 = vpack.c.b16 %v5840, %v5834
    %v6375 = vpack.c.b16 %v5847, %v5841
    %v6376 = vpack.c.b16 %v5848, %v5842
    %v6377 = vpack.c.b16 %v5849, %v5843
    %v6378 = vpack.c.b16 %v5850, %v5844
    %v6379 = vpack.c.b16 %v5851, %v5845
    %v6380 = vpack.c.b16 %v5852, %v5846
    %v6381 = vpack.c.b16 %v5859, %v5853
    %v6382 = vpack.c.b16 %v5860, %v5854
    %v6383 = vpack.c.b16 %v5861, %v5855
    %v6384 = vpack.c.b16 %v5862, %v5856
    %v6385 = vpack.c.b16 %v5863, %v5857
    %v6386 = vpack.c.b16 %v5864, %v5858
    %v6387 = vpack.c.b16 %v5871, %v5865
    %v6388 = vpack.c.b16 %v5872, %v5866
    %v6389 = vpack.c.b16 %v5873, %v5867
    %v6390 = vpack.c.b16 %v5874, %v5868
    %v6391 = vpack.c.b16 %v5875, %v5869
    %v6392 = vpack.c.b16 %v5876, %v5870
    %v6393 = vpack.c.b16 %v5883, %v5877
    %v6394 = vpack.c.b16 %v5884, %v5878
    %v6395 = vpack.c.b16 %v5885, %v5879
    %v6396 = vpack.c.b16 %v5886, %v5880
    %v6397 = vpack.c.b16 %v5887, %v5881
    %v6398 = vpack.c.b16 %v5888, %v5882
    %v6399 = vpack.c.b16 %v5895, %v5889
    %v6400 = vpack.c.b16 %v5896, %v5890
    %v6401 = vpack.c.b16 %v5897, %v5891
    %v6402 = vpack.c.b16 %v5898, %v5892
    %v6403 = vpack.c.b16 %v5899, %v5893
    %v6404 = vpack.c.b16 %v5900, %v5894
    %v6405 = vpack.c.b16 %v5907, %v5901
    %v6406 = vpack.c.b16 %v5908, %v5902
    %v6407 = vpack.c.b16 %v5909, %v5903
    %v6408 = vpack.c.b16 %v5910, %v5904
    %v6409 = vpack.c.b16 %v5911, %v5905
    %v6410 = vpack.c.b16 %v5912, %v5906
    %v6411 = vpack.c.b16 %v5919, %v5913
    %v6412 = vpack.c.b16 %v5920, %v5914
    %v6413 = vpack.c.b16 %v5921, %v5915
    %v6414 = vpack.c.b16 %v5922, %v5916
    %v6415 = vpack.c.b16 %v5923, %v5917
    %v6416 = vpack.c.b16 %v5924, %v5918
    %v6417 = vpack.c.b16 %v5931, %v5925
    %v6418 = vpack.c.b16 %v5932, %v5926
    %v6419 = vpack.c.b16 %v5933, %v5927
    %v6420 = vpack.c.b16 %v5934, %v5928
    %v6421 = vpack.c.b16 %v5935, %v5929
    %v6422 = vpack.c.b16 %v5936, %v5930
    %v6423 = vpack.c.b16 %v5943, %v5937
    %v6424 = vpack.c.b16 %v5944, %v5938
    %v6425 = vpack.c.b16 %v5945, %v5939
    %v6426 = vpack.c.b16 %v5946, %v5940
    %v6427 = vpack.c.b16 %v5947, %v5941
    %v6428 = vpack.c.b16 %v5948, %v5942
    %v6429 = vpack.c.b16 %v5955, %v5949
    %v6430 = vpack.c.b16 %v5956, %v5950
    %v6431 = vpack.c.b16 %v5957, %v5951
    %v6432 = vpack.c.b16 %v5958, %v5952
    %v6433 = vpack.c.b16 %v5959, %v5953
    %v6434 = vpack.c.b16 %v5960, %v5954
    %v6435 = vpack.c.b16 %v5967, %v5961
    %v6436 = vpack.c.b16 %v5968, %v5962
    %v6437 = vpack.c.b16 %v5969, %v5963
    %v6438 = vpack.c.b16 %v5970, %v5964
    %v6439 = vpack.c.b16 %v5971, %v5965
    %v6440 = vpack.c.b16 %v5972, %v5966
    %v6441 = vpack.c.b16 %v5979, %v5973
    %v6442 = vpack.c.b16 %v5980, %v5974
    %v6443 = vpack.c.b16 %v5981, %v5975
    %v6444 = vpack.c.b16 %v5982, %v5976
    %v6445 = vpack.c.b16 %v5983, %v5977
    %v6446 = vpack.c.b16 %v5984, %v5978
    %v6447 = vpack.c.b16 %v5991, %v5985
    %v6448 = vpack.c.b16 %v5992, %v5986
    %v6449 = vpack.c.b16 %v5993, %v5987
    %v6450 = vpack.c.b16 %v5994, %v5988
    %v6451 = vpack.c.b16 %v5995, %v5989
    %v6452 = vpack.c.b16 %v5996, %v5990
    %v6453 = vpack.c.b16 %v6003, %v5997
    %v6454 = vpack.c.b16 %v6004, %v5998
    %v6455 = vpack.c.b16 %v6005, %v5999
    %v6456 = vpack.c.b16 %v6006, %v6000
    %v6457 = vpack.c.b16 %v6007, %v6001
    %v6458 = vpack.c.b16 %v6008, %v6002
    %v6459 = vpack.c.b16 %v6015, %v6009
    %v6460 = vpack.c.b16 %v6016, %v6010
    %v6461 = vpack.c.b16 %v6017, %v6011
    %v6462 = vpack.c.b16 %v6018, %v6012
    %v6463 = vpack.c.b16 %v6019, %v6013
    %v6464 = vpack.c.b16 %v6020, %v6014
    %v6465 = vpack.c.b16 %v6027, %v6021
    %v6466 = vpack.c.b16 %v6028, %v6022
    %v6467 = vpack.c.b16 %v6029, %v6023
    %v6468 = vpack.c.b16 %v6030, %v6024
    %v6469 = vpack.c.b16 %v6031, %v6025
    %v6470 = vpack.c.b16 %v6032, %v6026
    %v6471 = vpack.c.b16 %v6039, %v6033
    %v6472 = vpack.c.b16 %v6040, %v6034
    %v6473 = vpack.c.b16 %v6041, %v6035
    %v6474 = vpack.c.b16 %v6042, %v6036
    %v6475 = vpack.c.b16 %v6043, %v6037
    %v6476 = vpack.c.b16 %v6044, %v6038
    %v6477 = vpack.c.b16 %v6051, %v6045
    %v6478 = vpack.c.b16 %v6052, %v6046
    %v6479 = vpack.c.b16 %v6053, %v6047
    %v6480 = vpack.c.b16 %v6054, %v6048
    %v6481 = vpack.c.b16 %v6055, %v6049
    %v6482 = vpack.c.b16 %v6056, %v6050
    %v6483 = vpack.c.b16 %v6063, %v6057
    %v6484 = vpack.c.b16 %v6064, %v6058
    %v6485 = vpack.c.b16 %v6065, %v6059
    %v6486 = vpack.c.b16 %v6066, %v6060
    %v6487 = vpack.c.b16 %v6067, %v6061
    %v6488 = vpack.c.b16 %v6068, %v6062
    %v6489 = vpack.c.b16 %v6075, %v6069
    %v6490 = vpack.c.b16 %v6076, %v6070
    %v6491 = vpack.c.b16 %v6077, %v6071
    %v6492 = vpack.c.b16 %v6078, %v6072
    %v6493 = vpack.c.b16 %v6079, %v6073
    %v6494 = vpack.c.b16 %v6080, %v6074
    %v6495 = vpack.c.b16 %v6087, %v6081
    %v6496 = vpack.c.b16 %v6088, %v6082
    %v6497 = vpack.c.b16 %v6089, %v6083
    %v6498 = vpack.c.b16 %v6090, %v6084
    %v6499 = vpack.c.b16 %v6091, %v6085
    %v6500 = vpack.c.b16 %v6092, %v6086
    %v6501 = vpack.c.b16 %v6099, %v6093
    %v6502 = vpack.c.b16 %v6100, %v6094
    %v6503 = vpack.c.b16 %v6101, %v6095
    %v6504 = vpack.c.b16 %v6102, %v6096
    %v6505 = vpack.c.b16 %v6103, %v6097
    %v6506 = vpack.c.b16 %v6104, %v6098
    %v6507 = vpack.c.b16 %v6111, %v6105
    %v6508 = vpack.c.b16 %v6112, %v6106
    %v6509 = vpack.c.b16 %v6113, %v6107
    %v6510 = vpack.c.b16 %v6114, %v6108
    %v6511 = vpack.c.b16 %v6115, %v6109
    %v6512 = vpack.c.b16 %v6116, %v6110
    %v6513 = vpack.c.b16 %v6123, %v6117
    %v6514 = vpack.c.b16 %v6124, %v6118
    %v6515 = vpack.c.b16 %v6125, %v6119
    %v6516 = vpack.c.b16 %v6126, %v6120
    %v6517 = vpack.c.b16 %v6127, %v6121
    %v6518 = vpack.c.b16 %v6128, %v6122
    %v6519 = vpack.c.b16 %v6135, %v6129
    %v6520 = vpack.c.b16 %v6136, %v6130
    %v6521 = vpack.c.b16 %v6137, %v6131
    %v6522 = vpack.c.b16 %v6138, %v6132
    %v6523 = vpack.c.b16 %v6139, %v6133
    %v6524 = vpack.c.b16 %v6140, %v6134
    %v6525 = vpack.c.b16 %v6147, %v6141
    %v6526 = vpack.c.b16 %v6148, %v6142
    %v6527 = vpack.c.b16 %v6149, %v6143
    %v6528 = vpack.c.b16 %v6150, %v6144
    %v6529 = vpack.c.b16 %v6151, %v6145
    %v6530 = vpack.c.b16 %v6152, %v6146
    %v6531 = vpack.c.b16 %v6159, %v6153
    %v6532 = vpack.c.b16 %v6160, %v6154
    %v6533 = vpack.c.b16 %v6161, %v6155
    %v6534 = vpack.c.b16 %v6162, %v6156
    %v6535 = vpack.c.b16 %v6163, %v6157
    %v6536 = vpack.c.b16 %v6164, %v6158
    %v6537 = vpack.c.b16 %v6171, %v6165
    %v6538 = vpack.c.b16 %v6172, %v6166
    %v6539 = vpack.c.b16 %v6173, %v6167
    %v6540 = vpack.c.b16 %v6174, %v6168
    %v6541 = vpack.c.b16 %v6175, %v6169
    %v6542 = vpack.c.b16 %v6176, %v6170
    %v6543 = vpack.c.b16 %v6183, %v6177
    %v6544 = vpack.c.b16 %v6184, %v6178
    %v6545 = vpack.c.b16 %v6185, %v6179
    %v6546 = vpack.c.b16 %v6186, %v6180
    %v6547 = vpack.c.b16 %v6187, %v6181
    %v6548 = vpack.c.b16 %v6188, %v6182
    %v6549 = vpack.c.b16 %v6195, %v6189
    %v6550 = vpack.c.b16 %v6196, %v6190
    %v6551 = vpack.c.b16 %v6197, %v6191
    %v6552 = vpack.c.b16 %v6198, %v6192
    %v6553 = vpack.c.b16 %v6199, %v6193
    %v6554 = vpack.c.b16 %v6200, %v6194
    %v6555 = vpack.c.b16 %v6207, %v6201
    %v6556 = vpack.c.b16 %v6208, %v6202
    %v6557 = vpack.c.b16 %v6209, %v6203
    %v6558 = vpack.c.b16 %v6210, %v6204
    %v6559 = vpack.c.b16 %v6211, %v6205
    %v6560 = vpack.c.b16 %v6212, %v6206
    %v6561 = vpack.c.b16 %v6219, %v6213
    %v6562 = vpack.c.b16 %v6220, %v6214
    %v6563 = vpack.c.b16 %v6221, %v6215
    %v6564 = vpack.c.b16 %v6222, %v6216
    %v6565 = vpack.c.b16 %v6223, %v6217
    %v6566 = vpack.c.b16 %v6224, %v6218
    %v6567 = vpack.c.b16 %v6231, %v6225
    %v6568 = vpack.c.b16 %v6232, %v6226
    %v6569 = vpack.c.b16 %v6233, %v6227
    %v6570 = vpack.c.b16 %v6234, %v6228
    %v6571 = vpack.c.b16 %v6235, %v6229
    %v6572 = vpack.c.b16 %v6236, %v6230
    %v6573 = vpack.c.b16 %v6243, %v6237
    %v6574 = vpack.c.b16 %v6244, %v6238
    %v6575 = vpack.c.b16 %v6245, %v6239
    %v6576 = vpack.c.b16 %v6246, %v6240
    %v6577 = vpack.c.b16 %v6247, %v6241
    %v6578 = vpack.c.b16 %v6248, %v6242
    %v6579 = vpack.c.b16 %v6255, %v6249
    %v6580 = vpack.c.b16 %v6256, %v6250
    %v6581 = vpack.c.b16 %v6257, %v6251
    %v6582 = vpack.c.b16 %v6258, %v6252
    %v6583 = vpack.c.b16 %v6259, %v6253
    %v6584 = vpack.c.b16 %v6260, %v6254
    %v6585 = vpack.c.b16 %v6267, %v6261
    %v6586 = vpack.c.b16 %v6268, %v6262
    %v6587 = vpack.c.b16 %v6269, %v6263
    %v6588 = vpack.c.b16 %v6270, %v6264
    %v6589 = vpack.c.b16 %v6271, %v6265
    %v6590 = vpack.c.b16 %v6272, %v6266
    %v6591 = vpack.c.b16 %v6279, %v6273
    %v6592 = vpack.c.b16 %v6280, %v6274
    %v6593 = vpack.c.b16 %v6281, %v6275
    %v6594 = vpack.c.b16 %v6282, %v6276
    %v6595 = vpack.c.b16 %v6283, %v6277
    %v6596 = vpack.c.b16 %v6284, %v6278
    %v6597 = vpack.c.b16 %v6291, %v6285
    %v6598 = vpack.c.b16 %v6292, %v6286
    %v6599 = vpack.c.b16 %v6293, %v6287
    %v6600 = vpack.c.b16 %v6294, %v6288
    %v6601 = vpack.c.b16 %v6295, %v6289
    %v6602 = vpack.c.b16 %v6296, %v6290
    %v6603 = vpack.c.b16 %v6303, %v6297
    %v6604 = vpack.c.b16 %v6304, %v6298
    %v6605 = vpack.c.b16 %v6305, %v6299
    %v6606 = vpack.c.b16 %v6306, %v6300
    %v6607 = vpack.c.b16 %v6307, %v6301
    %v6608 = vpack.c.b16 %v6308, %v6302
    %v6609 = vpack.c.b16 %v6315, %v6309
    %v6610 = vpack.c.b16 %v6316, %v6310
    %v6611 = vpack.c.b16 %v6317, %v6311
    %v6612 = vpack.c.b16 %v6318, %v6312
    %v6613 = vpack.c.b16 %v6319, %v6313
    %v6614 = vpack.c.b16 %v6320, %v6314
    %v6615 = vpack.c.b16 %v6327, %v6321
    %v6616 = vpack.c.b16 %v6328, %v6322
    %v6617 = vpack.c.b16 %v6329, %v6323
    %v6618 = vpack.c.b16 %v6330, %v6324
    %v6619 = vpack.c.b16 %v6331, %v6325
    %v6620 = vpack.c.b16 %v6332, %v6326
    %6909 = vmatpush.bf16.msra.mxu0 %v6375
    %6910 = vmatpush.bf16.msra.mxu0 %v6369
    %6911 = vmatpush.bf16.msra.mxu0 %v6363
    %6912 = vmatpush.bf16.msra.mxu0 %v6357
    %6913 = vmatpush.bf16.msra.mxu0 %v6351
    %6914 = vmatpush.bf16.msra.mxu0 %v6345
    %6915 = vmatpush.bf16.msra.mxu0 %v6339
    %6916 = vmatpush.bf16.msra.mxu0 %v6333
    %6917 = vmatmul.bf16.gmra.mxu0 %v5161
    %v6918 = vpop.f32.mrf.mxu0
    %v6919 = vadd.f32 %v5457, %v6918
    %v6920 = vpop.f32.mrf.mxu0
    %v6921 = vadd.f32 %v5457, %v6920
    %6922 = vdwg.mxu0
    %6923 = vmatpush.bf16.msra.mxu0 %v6423
    %6924 = vmatpush.bf16.msra.mxu0 %v6417
    %6925 = vmatpush.bf16.msra.mxu0 %v6411
    %6926 = vmatpush.bf16.msra.mxu0 %v6405
    %6927 = vmatpush.bf16.msra.mxu0 %v6399
    %6928 = vmatpush.bf16.msra.mxu0 %v6393
    %6929 = vmatpush.bf16.msra.mxu0 %v6387
    %6930 = vmatpush.bf16.msra.mxu0 %v6381
    %6931 = vmatmul.bf16.gmra.mxu0 %v5162
    %v6932 = vpop.f32.mrf.mxu0
    %v6933 = vadd.f32 %v6919, %v6932
    %v6934 = vpop.f32.mrf.mxu0
    %v6935 = vadd.f32 %v6921, %v6934
    %6936 = vdwg.mxu0
    %6937 = vmatpush.bf16.msra.mxu0 %v6471
    %6938 = vmatpush.bf16.msra.mxu0 %v6465
    %6939 = vmatpush.bf16.msra.mxu0 %v6459
    %6940 = vmatpush.bf16.msra.mxu0 %v6453
    %6941 = vmatpush.bf16.msra.mxu0 %v6447
    %6942 = vmatpush.bf16.msra.mxu0 %v6441
    %6943 = vmatpush.bf16.msra.mxu0 %v6435
    %6944 = vmatpush.bf16.msra.mxu0 %v6429
    %6945 = vmatmul.bf16.gmra.mxu0 %v5163
    %v6946 = vpop.f32.mrf.mxu0
    %v6947 = vadd.f32 %v6933, %v6946
    %v6948 = vpop.f32.mrf.mxu0
    %v6949 = vadd.f32 %v6935, %v6948
    %6950 = vdwg.mxu0
    %6951 = vmatpush.bf16.msra.mxu0 %v6519
    %6952 = vmatpush.bf16.msra.mxu0 %v6513
    %6953 = vmatpush.bf16.msra.mxu0 %v6507
    %6954 = vmatpush.bf16.msra.mxu0 %v6501
    %6955 = vmatpush.bf16.msra.mxu0 %v6495
    %6956 = vmatpush.bf16.msra.mxu0 %v6489
    %6957 = vmatpush.bf16.msra.mxu0 %v6483
    %6958 = vmatpush.bf16.msra.mxu0 %v6477
    %6959 = vmatmul.bf16.gmra.mxu0 %v5164
    %v6960 = vpop.f32.mrf.mxu0
    %v6961 = vadd.f32 %v6947, %v6960
    %v6962 = vpop.f32.mrf.mxu0
    %v6963 = vadd.f32 %v6949, %v6962
    %6964 = vdwg.mxu0
    %6965 = vmatpush.bf16.msra.mxu0 %v6567
    %6966 = vmatpush.bf16.msra.mxu0 %v6561
    %6967 = vmatpush.bf16.msra.mxu0 %v6555
    %6968 = vmatpush.bf16.msra.mxu0 %v6549
    %6969 = vmatpush.bf16.msra.mxu0 %v6543
    %6970 = vmatpush.bf16.msra.mxu0 %v6537
    %6971 = vmatpush.bf16.msra.mxu0 %v6531
    %6972 = vmatpush.bf16.msra.mxu0 %v6525
    %6973 = vmatmul.bf16.gmra.mxu0 %v5165
    %v6974 = vpop.f32.mrf.mxu0
    %v6975 = vadd.f32 %v6961, %v6974
    %v6976 = vpop.f32.mrf.mxu0
    %v6977 = vadd.f32 %v6963, %v6976
    %6978 = vdwg.mxu0
    %6979 = vmatpush.bf16.msra.mxu0 %v6615
    %6980 = vmatpush.bf16.msra.mxu0 %v6609
    %6981 = vmatpush.bf16.msra.mxu0 %v6603
    %6982 = vmatpush.bf16.msra.mxu0 %v6597
    %6983 = vmatpush.bf16.msra.mxu0 %v6591
    %6984 = vmatpush.bf16.msra.mxu0 %v6585
    %6985 = vmatpush.bf16.msra.mxu0 %v6579
    %6986 = vmatpush.bf16.msra.mxu0 %v6573
    %6987 = vmatmul.bf16.gmra.mxu0 %v5166
    %v6988 = vpop.f32.mrf.mxu0
    %v6989 = vadd.f32 %v6975, %v6988
    %v6990 = vpop.f32.mrf.mxu0
    %v6991 = vadd.f32 %v6977, %v6990
    %6992 = vdwg.mxu0
    %6993 = vmatpush.bf16.msra.mxu0 %v6376
    %6994 = vmatpush.bf16.msra.mxu0 %v6370
    %6995 = vmatpush.bf16.msra.mxu0 %v6364
    %6996 = vmatpush.bf16.msra.mxu0 %v6358
    %6997 = vmatpush.bf16.msra.mxu0 %v6352
    %6998 = vmatpush.bf16.msra.mxu0 %v6346
    %6999 = vmatpush.bf16.msra.mxu0 %v6340
    %7000 = vmatpush.bf16.msra.mxu0 %v6334
    %7001 = vmatmul.bf16.gmra.mxu0 %v5161
    %v7002 = vpop.f32.mrf.mxu0
    %v7003 = vadd.f32 %v5458, %v7002
    %v7004 = vpop.f32.mrf.mxu0
    %v7005 = vadd.f32 %v5458, %v7004
    %7006 = vdwg.mxu0
    %7007 = vmatpush.bf16.msra.mxu0 %v6424
    %7008 = vmatpush.bf16.msra.mxu0 %v6418
    %7009 = vmatpush.bf16.msra.mxu0 %v6412
    %7010 = vmatpush.bf16.msra.mxu0 %v6406
    %7011 = vmatpush.bf16.msra.mxu0 %v6400
    %7012 = vmatpush.bf16.msra.mxu0 %v6394
    %7013 = vmatpush.bf16.msra.mxu0 %v6388
    %7014 = vmatpush.bf16.msra.mxu0 %v6382
    %7015 = vmatmul.bf16.gmra.mxu0 %v5162
    %v7016 = vpop.f32.mrf.mxu0
    %v7017 = vadd.f32 %v7003, %v7016
    %v7018 = vpop.f32.mrf.mxu0
    %v7019 = vadd.f32 %v7005, %v7018
    %7020 = vdwg.mxu0
    %7021 = vmatpush.bf16.msra.mxu0 %v6472
    %7022 = vmatpush.bf16.msra.mxu0 %v6466
    %7023 = vmatpush.bf16.msra.mxu0 %v6460
    %7024 = vmatpush.bf16.msra.mxu0 %v6454
    %7025 = vmatpush.bf16.msra.mxu0 %v6448
    %7026 = vmatpush.bf16.msra.mxu0 %v6442
    %7027 = vmatpush.bf16.msra.mxu0 %v6436
    %7028 = vmatpush.bf16.msra.mxu0 %v6430
    %7029 = vmatmul.bf16.gmra.mxu0 %v5163
    %v7030 = vpop.f32.mrf.mxu0
    %v7031 = vadd.f32 %v7017, %v7030
    %v7032 = vpop.f32.mrf.mxu0
    %v7033 = vadd.f32 %v7019, %v7032
    %7034 = vdwg.mxu0
    %7035 = vmatpush.bf16.msra.mxu0 %v6520
    %7036 = vmatpush.bf16.msra.mxu0 %v6514
    %7037 = vmatpush.bf16.msra.mxu0 %v6508
    %7038 = vmatpush.bf16.msra.mxu0 %v6502
    %7039 = vmatpush.bf16.msra.mxu0 %v6496
    %7040 = vmatpush.bf16.msra.mxu0 %v6490
    %7041 = vmatpush.bf16.msra.mxu0 %v6484
    %7042 = vmatpush.bf16.msra.mxu0 %v6478
    %7043 = vmatmul.bf16.gmra.mxu0 %v5164
    %v7044 = vpop.f32.mrf.mxu0
    %v7045 = vadd.f32 %v7031, %v7044
    %v7046 = vpop.f32.mrf.mxu0
    %v7047 = vadd.f32 %v7033, %v7046
    %7048 = vdwg.mxu0
    %7049 = vmatpush.bf16.msra.mxu0 %v6568
    %7050 = vmatpush.bf16.msra.mxu0 %v6562
    %7051 = vmatpush.bf16.msra.mxu0 %v6556
    %7052 = vmatpush.bf16.msra.mxu0 %v6550
    %7053 = vmatpush.bf16.msra.mxu0 %v6544
    %7054 = vmatpush.bf16.msra.mxu0 %v6538
    %7055 = vmatpush.bf16.msra.mxu0 %v6532
    %7056 = vmatpush.bf16.msra.mxu0 %v6526
    %7057 = vmatmul.bf16.gmra.mxu0 %v5165
    %v7058 = vpop.f32.mrf.mxu0
    %v7059 = vadd.f32 %v7045, %v7058
    %v7060 = vpop.f32.mrf.mxu0
    %v7061 = vadd.f32 %v7047, %v7060
    %7062 = vdwg.mxu0
    %7063 = vmatpush.bf16.msra.mxu0 %v6616
    %7064 = vmatpush.bf16.msra.mxu0 %v6610
    %7065 = vmatpush.bf16.msra.mxu0 %v6604
    %7066 = vmatpush.bf16.msra.mxu0 %v6598
    %7067 = vmatpush.bf16.msra.mxu0 %v6592
    %7068 = vmatpush.bf16.msra.mxu0 %v6586
    %7069 = vmatpush.bf16.msra.mxu0 %v6580
    %7070 = vmatpush.bf16.msra.mxu0 %v6574
    %7071 = vmatmul.bf16.gmra.mxu0 %v5166
    %v7072 = vpop.f32.mrf.mxu0
    %v7073 = vadd.f32 %v7059, %v7072
    %v7074 = vpop.f32.mrf.mxu0
    %v7075 = vadd.f32 %v7061, %v7074
    %7076 = vdwg.mxu0
    %7077 = vmatpush.bf16.msra.mxu0 %v6377
    %7078 = vmatpush.bf16.msra.mxu0 %v6371
    %7079 = vmatpush.bf16.msra.mxu0 %v6365
    %7080 = vmatpush.bf16.msra.mxu0 %v6359
    %7081 = vmatpush.bf16.msra.mxu0 %v6353
    %7082 = vmatpush.bf16.msra.mxu0 %v6347
    %7083 = vmatpush.bf16.msra.mxu0 %v6341
    %7084 = vmatpush.bf16.msra.mxu0 %v6335
    %7085 = vmatmul.bf16.gmra.mxu0 %v5161
    %v7086 = vpop.f32.mrf.mxu0
    %v7087 = vadd.f32 %v5459, %v7086
    %v7088 = vpop.f32.mrf.mxu0
    %v7089 = vadd.f32 %v5459, %v7088
    %7090 = vdwg.mxu0
    %7091 = vmatpush.bf16.msra.mxu0 %v6425
    %7092 = vmatpush.bf16.msra.mxu0 %v6419
    %7093 = vmatpush.bf16.msra.mxu0 %v6413
    %7094 = vmatpush.bf16.msra.mxu0 %v6407
    %7095 = vmatpush.bf16.msra.mxu0 %v6401
    %7096 = vmatpush.bf16.msra.mxu0 %v6395
    %7097 = vmatpush.bf16.msra.mxu0 %v6389
    %7098 = vmatpush.bf16.msra.mxu0 %v6383
    %7099 = vmatmul.bf16.gmra.mxu0 %v5162
    %v7100 = vpop.f32.mrf.mxu0
    %v7101 = vadd.f32 %v7087, %v7100
    %v7102 = vpop.f32.mrf.mxu0
    %v7103 = vadd.f32 %v7089, %v7102
    %7104 = vdwg.mxu0
    %7105 = vmatpush.bf16.msra.mxu0 %v6473
    %7106 = vmatpush.bf16.msra.mxu0 %v6467
    %7107 = vmatpush.bf16.msra.mxu0 %v6461
    %7108 = vmatpush.bf16.msra.mxu0 %v6455
    %7109 = vmatpush.bf16.msra.mxu0 %v6449
    %7110 = vmatpush.bf16.msra.mxu0 %v6443
    %7111 = vmatpush.bf16.msra.mxu0 %v6437
    %7112 = vmatpush.bf16.msra.mxu0 %v6431
    %7113 = vmatmul.bf16.gmra.mxu0 %v5163
    %v7114 = vpop.f32.mrf.mxu0
    %v7115 = vadd.f32 %v7101, %v7114
    %v7116 = vpop.f32.mrf.mxu0
    %v7117 = vadd.f32 %v7103, %v7116
    %7118 = vdwg.mxu0
    %7119 = vmatpush.bf16.msra.mxu0 %v6521
    %7120 = vmatpush.bf16.msra.mxu0 %v6515
    %7121 = vmatpush.bf16.msra.mxu0 %v6509
    %7122 = vmatpush.bf16.msra.mxu0 %v6503
    %7123 = vmatpush.bf16.msra.mxu0 %v6497
    %7124 = vmatpush.bf16.msra.mxu0 %v6491
    %7125 = vmatpush.bf16.msra.mxu0 %v6485
    %7126 = vmatpush.bf16.msra.mxu0 %v6479
    %7127 = vmatmul.bf16.gmra.mxu0 %v5164
    %v7128 = vpop.f32.mrf.mxu0
    %v7129 = vadd.f32 %v7115, %v7128
    %v7130 = vpop.f32.mrf.mxu0
    %v7131 = vadd.f32 %v7117, %v7130
    %7132 = vdwg.mxu0
    %7133 = vmatpush.bf16.msra.mxu0 %v6569
    %7134 = vmatpush.bf16.msra.mxu0 %v6563
    %7135 = vmatpush.bf16.msra.mxu0 %v6557
    %7136 = vmatpush.bf16.msra.mxu0 %v6551
    %7137 = vmatpush.bf16.msra.mxu0 %v6545
    %7138 = vmatpush.bf16.msra.mxu0 %v6539
    %7139 = vmatpush.bf16.msra.mxu0 %v6533
    %7140 = vmatpush.bf16.msra.mxu0 %v6527
    %7141 = vmatmul.bf16.gmra.mxu0 %v5165
    %v7142 = vpop.f32.mrf.mxu0
    %v7143 = vadd.f32 %v7129, %v7142
    %v7144 = vpop.f32.mrf.mxu0
    %v7145 = vadd.f32 %v7131, %v7144
    %7146 = vdwg.mxu0
    %7147 = vmatpush.bf16.msra.mxu0 %v6617
    %7148 = vmatpush.bf16.msra.mxu0 %v6611
    %7149 = vmatpush.bf16.msra.mxu0 %v6605
    %7150 = vmatpush.bf16.msra.mxu0 %v6599
    %7151 = vmatpush.bf16.msra.mxu0 %v6593
    %7152 = vmatpush.bf16.msra.mxu0 %v6587
    %7153 = vmatpush.bf16.msra.mxu0 %v6581
    %7154 = vmatpush.bf16.msra.mxu0 %v6575
    %7155 = vmatmul.bf16.gmra.mxu0 %v5166
    %v7156 = vpop.f32.mrf.mxu0
    %v7157 = vadd.f32 %v7143, %v7156
    %v7158 = vpop.f32.mrf.mxu0
    %v7159 = vadd.f32 %v7145, %v7158
    %7160 = vdwg.mxu0
    %7161 = vmatpush.bf16.msra.mxu0 %v6378
    %7162 = vmatpush.bf16.msra.mxu0 %v6372
    %7163 = vmatpush.bf16.msra.mxu0 %v6366
    %7164 = vmatpush.bf16.msra.mxu0 %v6360
    %7165 = vmatpush.bf16.msra.mxu0 %v6354
    %7166 = vmatpush.bf16.msra.mxu0 %v6348
    %7167 = vmatpush.bf16.msra.mxu0 %v6342
    %7168 = vmatpush.bf16.msra.mxu0 %v6336
    %7169 = vmatmul.bf16.gmra.mxu0 %v5161
    %v7170 = vpop.f32.mrf.mxu0
    %v7171 = vadd.f32 %v5460, %v7170
    %v7172 = vpop.f32.mrf.mxu0
    %v7173 = vadd.f32 %v5460, %v7172
    %7174 = vdwg.mxu0
    %7175 = vmatpush.bf16.msra.mxu0 %v6426
    %7176 = vmatpush.bf16.msra.mxu0 %v6420
    %7177 = vmatpush.bf16.msra.mxu0 %v6414
    %7178 = vmatpush.bf16.msra.mxu0 %v6408
    %7179 = vmatpush.bf16.msra.mxu0 %v6402
    %7180 = vmatpush.bf16.msra.mxu0 %v6396
    %7181 = vmatpush.bf16.msra.mxu0 %v6390
    %7182 = vmatpush.bf16.msra.mxu0 %v6384
    %7183 = vmatmul.bf16.gmra.mxu0 %v5162
    %v7184 = vpop.f32.mrf.mxu0
    %v7185 = vadd.f32 %v7171, %v7184
    %v7186 = vpop.f32.mrf.mxu0
    %v7187 = vadd.f32 %v7173, %v7186
    %7188 = vdwg.mxu0
    %7189 = vmatpush.bf16.msra.mxu0 %v6474
    %7190 = vmatpush.bf16.msra.mxu0 %v6468
    %7191 = vmatpush.bf16.msra.mxu0 %v6462
    %7192 = vmatpush.bf16.msra.mxu0 %v6456
    %7193 = vmatpush.bf16.msra.mxu0 %v6450
    %7194 = vmatpush.bf16.msra.mxu0 %v6444
    %7195 = vmatpush.bf16.msra.mxu0 %v6438
    %7196 = vmatpush.bf16.msra.mxu0 %v6432
    %7197 = vmatmul.bf16.gmra.mxu0 %v5163
    %v7198 = vpop.f32.mrf.mxu0
    %v7199 = vadd.f32 %v7185, %v7198
    %v7200 = vpop.f32.mrf.mxu0
    %v7201 = vadd.f32 %v7187, %v7200
    %7202 = vdwg.mxu0
    %7203 = vmatpush.bf16.msra.mxu0 %v6522
    %7204 = vmatpush.bf16.msra.mxu0 %v6516
    %7205 = vmatpush.bf16.msra.mxu0 %v6510
    %7206 = vmatpush.bf16.msra.mxu0 %v6504
    %7207 = vmatpush.bf16.msra.mxu0 %v6498
    %7208 = vmatpush.bf16.msra.mxu0 %v6492
    %7209 = vmatpush.bf16.msra.mxu0 %v6486
    %7210 = vmatpush.bf16.msra.mxu0 %v6480
    %7211 = vmatmul.bf16.gmra.mxu0 %v5164
    %v7212 = vpop.f32.mrf.mxu0
    %v7213 = vadd.f32 %v7199, %v7212
    %v7214 = vpop.f32.mrf.mxu0
    %v7215 = vadd.f32 %v7201, %v7214
    %7216 = vdwg.mxu0
    %7217 = vmatpush.bf16.msra.mxu0 %v6570
    %7218 = vmatpush.bf16.msra.mxu0 %v6564
    %7219 = vmatpush.bf16.msra.mxu0 %v6558
    %7220 = vmatpush.bf16.msra.mxu0 %v6552
    %7221 = vmatpush.bf16.msra.mxu0 %v6546
    %7222 = vmatpush.bf16.msra.mxu0 %v6540
    %7223 = vmatpush.bf16.msra.mxu0 %v6534
    %7224 = vmatpush.bf16.msra.mxu0 %v6528
    %7225 = vmatmul.bf16.gmra.mxu0 %v5165
    %v7226 = vpop.f32.mrf.mxu0
    %v7227 = vadd.f32 %v7213, %v7226
    %v7228 = vpop.f32.mrf.mxu0
    %v7229 = vadd.f32 %v7215, %v7228
    %7230 = vdwg.mxu0
    %7231 = vmatpush.bf16.msra.mxu0 %v6618
    %7232 = vmatpush.bf16.msra.mxu0 %v6612
    %7233 = vmatpush.bf16.msra.mxu0 %v6606
    %7234 = vmatpush.bf16.msra.mxu0 %v6600
    %7235 = vmatpush.bf16.msra.mxu0 %v6594
    %7236 = vmatpush.bf16.msra.mxu0 %v6588
    %7237 = vmatpush.bf16.msra.mxu0 %v6582
    %7238 = vmatpush.bf16.msra.mxu0 %v6576
    %7239 = vmatmul.bf16.gmra.mxu0 %v5166
    %v7240 = vpop.f32.mrf.mxu0
    %v7241 = vadd.f32 %v7227, %v7240
    %v7242 = vpop.f32.mrf.mxu0
    %v7243 = vadd.f32 %v7229, %v7242
    %7244 = vdwg.mxu0
    %7245 = vmatpush.bf16.msra.mxu0 %v6379
    %7246 = vmatpush.bf16.msra.mxu0 %v6373
    %7247 = vmatpush.bf16.msra.mxu0 %v6367
    %7248 = vmatpush.bf16.msra.mxu0 %v6361
    %7249 = vmatpush.bf16.msra.mxu0 %v6355
    %7250 = vmatpush.bf16.msra.mxu0 %v6349
    %7251 = vmatpush.bf16.msra.mxu0 %v6343
    %7252 = vmatpush.bf16.msra.mxu0 %v6337
    %7253 = vmatmul.bf16.gmra.mxu0 %v5161
    %v7254 = vpop.f32.mrf.mxu0
    %v7255 = vadd.f32 %v5461, %v7254
    %v7256 = vpop.f32.mrf.mxu0
    %v7257 = vadd.f32 %v5461, %v7256
    %7258 = vdwg.mxu0
    %7259 = vmatpush.bf16.msra.mxu0 %v6427
    %7260 = vmatpush.bf16.msra.mxu0 %v6421
    %7261 = vmatpush.bf16.msra.mxu0 %v6415
    %7262 = vmatpush.bf16.msra.mxu0 %v6409
    %7263 = vmatpush.bf16.msra.mxu0 %v6403
    %7264 = vmatpush.bf16.msra.mxu0 %v6397
    %7265 = vmatpush.bf16.msra.mxu0 %v6391
    %7266 = vmatpush.bf16.msra.mxu0 %v6385
    %7267 = vmatmul.bf16.gmra.mxu0 %v5162
    %v7268 = vpop.f32.mrf.mxu0
    %v7269 = vadd.f32 %v7255, %v7268
    %v7270 = vpop.f32.mrf.mxu0
    %v7271 = vadd.f32 %v7257, %v7270
    %7272 = vdwg.mxu0
    %7273 = vmatpush.bf16.msra.mxu0 %v6475
    %7274 = vmatpush.bf16.msra.mxu0 %v6469
    %7275 = vmatpush.bf16.msra.mxu0 %v6463
    %7276 = vmatpush.bf16.msra.mxu0 %v6457
    %7277 = vmatpush.bf16.msra.mxu0 %v6451
    %7278 = vmatpush.bf16.msra.mxu0 %v6445
    %7279 = vmatpush.bf16.msra.mxu0 %v6439
    %7280 = vmatpush.bf16.msra.mxu0 %v6433
    %7281 = vmatmul.bf16.gmra.mxu0 %v5163
    %v7282 = vpop.f32.mrf.mxu0
    %v7283 = vadd.f32 %v7269, %v7282
    %v7284 = vpop.f32.mrf.mxu0
    %v7285 = vadd.f32 %v7271, %v7284
    %7286 = vdwg.mxu0
    %7287 = vmatpush.bf16.msra.mxu0 %v6523
    %7288 = vmatpush.bf16.msra.mxu0 %v6517
    %7289 = vmatpush.bf16.msra.mxu0 %v6511
    %7290 = vmatpush.bf16.msra.mxu0 %v6505
    %7291 = vmatpush.bf16.msra.mxu0 %v6499
    %7292 = vmatpush.bf16.msra.mxu0 %v6493
    %7293 = vmatpush.bf16.msra.mxu0 %v6487
    %7294 = vmatpush.bf16.msra.mxu0 %v6481
    %7295 = vmatmul.bf16.gmra.mxu0 %v5164
    %v7296 = vpop.f32.mrf.mxu0
    %v7297 = vadd.f32 %v7283, %v7296
    %v7298 = vpop.f32.mrf.mxu0
    %v7299 = vadd.f32 %v7285, %v7298
    %7300 = vdwg.mxu0
    %7301 = vmatpush.bf16.msra.mxu0 %v6571
    %7302 = vmatpush.bf16.msra.mxu0 %v6565
    %7303 = vmatpush.bf16.msra.mxu0 %v6559
    %7304 = vmatpush.bf16.msra.mxu0 %v6553
    %7305 = vmatpush.bf16.msra.mxu0 %v6547
    %7306 = vmatpush.bf16.msra.mxu0 %v6541
    %7307 = vmatpush.bf16.msra.mxu0 %v6535
    %7308 = vmatpush.bf16.msra.mxu0 %v6529
    %7309 = vmatmul.bf16.gmra.mxu0 %v5165
    %v7310 = vpop.f32.mrf.mxu0
    %v7311 = vadd.f32 %v7297, %v7310
    %v7312 = vpop.f32.mrf.mxu0
    %v7313 = vadd.f32 %v7299, %v7312
    %7314 = vdwg.mxu0
    %7315 = vmatpush.bf16.msra.mxu0 %v6619
    %7316 = vmatpush.bf16.msra.mxu0 %v6613
    %7317 = vmatpush.bf16.msra.mxu0 %v6607
    %7318 = vmatpush.bf16.msra.mxu0 %v6601
    %7319 = vmatpush.bf16.msra.mxu0 %v6595
    %7320 = vmatpush.bf16.msra.mxu0 %v6589
    %7321 = vmatpush.bf16.msra.mxu0 %v6583
    %7322 = vmatpush.bf16.msra.mxu0 %v6577
    %7323 = vmatmul.bf16.gmra.mxu0 %v5166
    %v7324 = vpop.f32.mrf.mxu0
    %v7325 = vadd.f32 %v7311, %v7324
    %v7326 = vpop.f32.mrf.mxu0
    %v7327 = vadd.f32 %v7313, %v7326
    %7328 = vdwg.mxu0
    %7329 = vmatpush.bf16.msra.mxu0 %v6380
    %7330 = vmatpush.bf16.msra.mxu0 %v6374
    %7331 = vmatpush.bf16.msra.mxu0 %v6368
    %7332 = vmatpush.bf16.msra.mxu0 %v6362
    %7333 = vmatpush.bf16.msra.mxu0 %v6356
    %7334 = vmatpush.bf16.msra.mxu0 %v6350
    %7335 = vmatpush.bf16.msra.mxu0 %v6344
    %7336 = vmatpush.bf16.msra.mxu0 %v6338
    %7337 = vmatmul.bf16.gmra.mxu0 %v5161
    %v7338 = vpop.f32.mrf.mxu0
    %v7339 = vadd.f32 %v5462, %v7338
    %v7340 = vpop.f32.mrf.mxu0
    %v7341 = vadd.f32 %v5462, %v7340
    %7342 = vdwg.mxu0
    %7343 = vmatpush.bf16.msra.mxu0 %v6428
    %7344 = vmatpush.bf16.msra.mxu0 %v6422
    %7345 = vmatpush.bf16.msra.mxu0 %v6416
    %7346 = vmatpush.bf16.msra.mxu0 %v6410
    %7347 = vmatpush.bf16.msra.mxu0 %v6404
    %7348 = vmatpush.bf16.msra.mxu0 %v6398
    %7349 = vmatpush.bf16.msra.mxu0 %v6392
    %7350 = vmatpush.bf16.msra.mxu0 %v6386
    %7351 = vmatmul.bf16.gmra.mxu0 %v5162
    %v7352 = vpop.f32.mrf.mxu0
    %v7353 = vadd.f32 %v7339, %v7352
    %v7354 = vpop.f32.mrf.mxu0
    %v7355 = vadd.f32 %v7341, %v7354
    %7356 = vdwg.mxu0
    %7357 = vmatpush.bf16.msra.mxu0 %v6476
    %7358 = vmatpush.bf16.msra.mxu0 %v6470
    %7359 = vmatpush.bf16.msra.mxu0 %v6464
    %7360 = vmatpush.bf16.msra.mxu0 %v6458
    %7361 = vmatpush.bf16.msra.mxu0 %v6452
    %7362 = vmatpush.bf16.msra.mxu0 %v6446
    %7363 = vmatpush.bf16.msra.mxu0 %v6440
    %7364 = vmatpush.bf16.msra.mxu0 %v6434
    %7365 = vmatmul.bf16.gmra.mxu0 %v5163
    %v7366 = vpop.f32.mrf.mxu0
    %v7367 = vadd.f32 %v7353, %v7366
    %v7368 = vpop.f32.mrf.mxu0
    %v7369 = vadd.f32 %v7355, %v7368
    %7370 = vdwg.mxu0
    %7371 = vmatpush.bf16.msra.mxu0 %v6524
    %7372 = vmatpush.bf16.msra.mxu0 %v6518
    %7373 = vmatpush.bf16.msra.mxu0 %v6512
    %7374 = vmatpush.bf16.msra.mxu0 %v6506
    %7375 = vmatpush.bf16.msra.mxu0 %v6500
    %7376 = vmatpush.bf16.msra.mxu0 %v6494
    %7377 = vmatpush.bf16.msra.mxu0 %v6488
    %7378 = vmatpush.bf16.msra.mxu0 %v6482
    %7379 = vmatmul.bf16.gmra.mxu0 %v5164
    %v7380 = vpop.f32.mrf.mxu0
    %v7381 = vadd.f32 %v7367, %v7380
    %v7382 = vpop.f32.mrf.mxu0
    %v7383 = vadd.f32 %v7369, %v7382
    %7384 = vdwg.mxu0
    %7385 = vmatpush.bf16.msra.mxu0 %v6572
    %7386 = vmatpush.bf16.msra.mxu0 %v6566
    %7387 = vmatpush.bf16.msra.mxu0 %v6560
    %7388 = vmatpush.bf16.msra.mxu0 %v6554
    %7389 = vmatpush.bf16.msra.mxu0 %v6548
    %7390 = vmatpush.bf16.msra.mxu0 %v6542
    %7391 = vmatpush.bf16.msra.mxu0 %v6536
    %7392 = vmatpush.bf16.msra.mxu0 %v6530
    %7393 = vmatmul.bf16.gmra.mxu0 %v5165
    %v7394 = vpop.f32.mrf.mxu0
    %v7395 = vadd.f32 %v7381, %v7394
    %v7396 = vpop.f32.mrf.mxu0
    %v7397 = vadd.f32 %v7383, %v7396
    %7398 = vdwg.mxu0
    %7399 = vmatpush.bf16.msra.mxu0 %v6620
    %7400 = vmatpush.bf16.msra.mxu0 %v6614
    %7401 = vmatpush.bf16.msra.mxu0 %v6608
    %7402 = vmatpush.bf16.msra.mxu0 %v6602
    %7403 = vmatpush.bf16.msra.mxu0 %v6596
    %7404 = vmatpush.bf16.msra.mxu0 %v6590
    %7405 = vmatpush.bf16.msra.mxu0 %v6584
    %7406 = vmatpush.bf16.msra.mxu0 %v6578
    %7407 = vmatmul.bf16.gmra.mxu0 %v5166
    %v7408 = vpop.f32.mrf.mxu0
    %v7409 = vadd.f32 %v7395, %v7408
    %v7410 = vpop.f32.mrf.mxu0
    %v7411 = vadd.f32 %v7397, %v7410
    %7412 = vdwg.mxu0
    %7413 = vst [vmem:[#allocation13] sm:$0xff] %v6989
    %7414 = vst [vmem:[#allocation13 + $0x8] sm:$0xff] %v7073
    %7415 = vst [vmem:[#allocation13 + $0x10] sm:$0xff] %v7157
    %7416 = vst [vmem:[#allocation13 + $0x18] sm:$0xff] %v7241
    %7417 = vst [vmem:[#allocation13 + $0x20] sm:$0xff] %v7325
    %7418 = vst [vmem:[#allocation13 + $0x28] sm:$0xff] %v7409
    %7419 = vst [vmem:[#allocation13 + $0x30] sm:$0xff] %v6991
    %7420 = vst [vmem:[#allocation13 + $0x38] sm:$0xff] %v7075
    %7421 = vst [vmem:[#allocation13 + $0x40] sm:$0xff] %v7159
    %7422 = vst [vmem:[#allocation13 + $0x48] sm:$0xff] %v7243
    %7423 = vst [vmem:[#allocation13 + $0x50] sm:$0xff] %v7327
    %7424 = vst [vmem:[#allocation13 + $0x58] sm:$0xff] %v7411
    // Predicated region
    $region54: #{tpu_custom_call.1} parent=1 // pred_check
      _
    $region55: #{tpu_custom_call.1} parent=1 // pred_check_branch
      %7426 = sbr.rel (0) target = $region57
    $region56: #{tpu_custom_call.1} parent=1 // pred_region
      %7428 = vsyncadd [#allocation6], 0
      %s7429 = sshll.u32 [#allocation13], 4
      %s7430 = int_to_ptr.vmem [resolvable:$true] %s7429
      %s7431 = sshll.u32 %s6, 4
      %s7432 = int_to_ptr.hbm [resolvable:$true] %s7431
      %7437 = dma.vmem_to_hbm [thread:$0]  %s7430, 1536, %s7432, [#allocation6], 768, 768, 48
    $region57: #{tpu_custom_call.1} parent=1 // pred_fallthru
      _
    // Predicated region
    $region58: #{tpu_custom_call.1} parent=1 // pred_check
      _
    $region59: #{tpu_custom_call.1} parent=1 // pred_check_branch
      %7439 = sbr.rel (0) target = $region61
    $region60: #{tpu_custom_call.1} parent=1 // pred_region
      %7441 = dma.done [#allocation6], 1536
    $region61: #{tpu_custom_call.1} parent=1 // pred_fallthru
      _
    %7442 = vsyncpa [#allocation5], 1
    %7443 = vsyncpa [#allocation8], 1
    %7444 = vsyncpa [#allocation11], 1
    %7445 = vsyncpa [#allocation6], 1
  %7446 = vsyncmov [#allocation3]
  %s7447 = vpop.sfrf %7446
  %p7448 = scmp.eq.s32.totalorder %s7447, 0
  %p7449 = pneg %p7448
  %7451 = shalt.err (%p7449)

</llo_original>
